<compile_context>
chip_gen: v5e
topology: v5e:2x2
jax: 0.10.0
libtpu: 0.0.40
codegen_flags: <defaults>
</compile_context>

<pallas_src>
import functools

import jax
import jax.numpy as jnp
from jax import lax
from jax.experimental import pallas as pl
from jax.experimental.pallas import tpu as pltpu

LN_EPS = 1e-5      # nn.LayerNorm default eps
BN_EPS = 1e-5      # BatchNorm eps used by LocalPatchInteraction
NORM_EPS = 1e-12   # F.normalize default eps

# Explicit scoped-VMEM budget: fits default limits on v5e/v6e/v7x and stays
# well under v7x's 64 MiB physical VMEM at these shapes.
_VMEM_LIMIT = 32 * 1024 * 1024


def _gelu(x):
    # TODO(synk): nn.GELU default is the exact erf form; tanh approximation is
    # used since erf has no guaranteed Mosaic lowering.
    c = 0.7978845608028654  # sqrt(2/pi)
    return 0.5 * x * (1.0 + jnp.tanh(c * (x + 0.044715 * x * x * x)))


def _layernorm_stats(x):
    """Parameter-free per-token LN stats; cheap XLA reduction outside Pallas
    (removes the lane-1 stat outputs from the fused kernel)."""
    mu = jnp.mean(x, axis=-1, keepdims=True)
    var = jnp.mean(jnp.square(x - mu), axis=-1, keepdims=True)
    return mu, lax.rsqrt(var + LN_EPS)


def make_head_bias(dim, heads):
    """Additive block-diagonal mask (0 within a head, -1e30 across heads)."""
    head_dim = dim // heads
    hid = jnp.arange(dim) // head_dim
    same = hid[:, None] == hid[None, :]
    return jnp.where(same, 0.0, -1e30).astype(jnp.float32)


def _pick_batch_tile(B, N, rows_target=1024):
    """Largest divisor of B whose tile keeps TB*N <= rows_target rows."""
    tb = 1
    for cand in range(1, B + 1):
        if B % cand == 0 and cand * N <= max(rows_target, N):
            tb = cand
    return tb


# ----------------------------------------------------------------------------
# Fused branch 1 + 3:
#   xca_out = x + alpha_xca * XCA(LayerNorm(x))
#   ff_out  = x + alpha_ff  * MLP(LayerNorm(x))
# One batch tile (TB, N, D) per grid step; big matmuls run flattened (TB*N, D).
# ----------------------------------------------------------------------------
def xca_ff_kernel(x_ref, mu_ref, rstd_ref, head_bias_ref,
                  xca_ln_g, xca_ln_b, wqkv, temp, wout, bout, xca_alpha,
                  ff_ln_g, ff_ln_b, w1, b1, w2, b2, ff_alpha,
                  xca_o_ref, ff_o_ref):
    TB, N, D = x_ref.shape
    x = x_ref[...]                                            # (TB, N, D) f32
    xc = (x - mu_ref[...]) * rstd_ref[...]                    # shared LN core
    x2 = x.reshape(TB * N, D)
    xc2 = xc.reshape(TB * N, D)

    # ---------------- XCA branch ----------------
    y = (xc2 * xca_ln_g[...] + xca_ln_b[...]).astype(jnp.bfloat16)
    qkv = jnp.dot(y, wqkv[...], preferred_element_type=jnp.float32)   # (TB*N, 3D)
    q = qkv[:, :D].reshape(TB, N, D)
    k = qkv[:, D:2 * D].reshape(TB, N, D)
    v = qkv[:, 2 * D:].reshape(TB, N, D)

    # F.normalize along the token axis, independently per (batch, head, chan).
    qn = q / jnp.maximum(jnp.sqrt(jnp.sum(q * q, axis=1, keepdims=True)), NORM_EPS)
    kn = k / jnp.maximum(jnp.sqrt(jnp.sum(k * k, axis=1, keepdims=True)), NORM_EPS)
    kn = kn * temp[...]                                       # per-head temperature

    # All heads in one lane-dense batched (D, D) matmul; off-head blocks are
    # suppressed with the precomputed additive bias (resident in VMEM).
    # s[b, p, q] = sum_n kn[b, n, p] * qn[b, n, q]; softmax over q (f32).
    s = jnp.einsum("bnp,bnq->bpq", kn.astype(jnp.bfloat16), qn.astype(jnp.bfloat16),
                   preferred_element_type=jnp.float32)        # (TB, D, D)
    s = s + head_bias_ref[...]
    s = s - jnp.max(s, axis=-1, keepdims=True)
    p = jnp.exp(s)
    p = p * pl.reciprocal(jnp.sum(p, axis=-1, keepdims=True), approx=True)
    attn = jnp.einsum("bnp,bpq->bnq", v.astype(jnp.bfloat16), p.astype(jnp.bfloat16),
                      preferred_element_type=jnp.float32)     # (TB, N, D)
    xca = jnp.dot(attn.reshape(TB * N, D).astype(jnp.bfloat16), wout[...],
                  preferred_element_type=jnp.float32) + bout[...]
    xca_o_ref[...] = (x2 + xca_alpha[...] * xca).reshape(TB, N, D)

    # ---------------- FF branch ----------------
    yf = (xc2 * ff_ln_g[...] + ff_ln_b[...]).astype(jnp.bfloat16)
    h = jnp.dot(yf, w1[...], preferred_element_type=jnp.float32) + b1[...]
    # TODO(synk): run the GELU polynomial in bf16 on v6e/v7x (kept f32 for v5e).
    h = _gelu(h).astype(jnp.bfloat16)
    ff = jnp.dot(h, w2[...], preferred_element_type=jnp.float32) + b2[...]
    ff_o_ref[...] = (x2 + ff_alpha[...] * ff).reshape(TB, N, D)


def xca_ff_layerscale(x, ln_mu, ln_rstd, p):
    B, N, D = x.shape
    H = p["ff_w1_t"].shape[1]
    TB = _pick_batch_tile(B, N)
    rep = lambda shape: pl.BlockSpec(shape, lambda b, _s=shape: (0,) * len(_s))
    return pl.pallas_call(
        xca_ff_kernel,
        out_shape=(
            jax.ShapeDtypeStruct((B, N, D), jnp.float32),   # xca branch
            jax.ShapeDtypeStruct((B, N, D), jnp.float32),   # ff branch
        ),
        grid=(B // TB,),
        in_specs=[
            pl.BlockSpec((TB, N, D), lambda b: (b, 0, 0)),
            pl.BlockSpec((TB, N, 1), lambda b: (b, 0, 0)),   # LN mu
            pl.BlockSpec((TB, N, 1), lambda b: (b, 0, 0)),   # LN rstd
            rep((D, D)),                                     # head-mask bias
            rep((1, D)), rep((1, D)),
            rep((D, 3 * D)),
            rep((1, D)),
            rep((D, D)), rep((1, D)), rep((1, D)),
            rep((1, D)), rep((1, D)),
            rep((D, H)), rep((1, H)),
            rep((H, D)), rep((1, D)), rep((1, D)),
        ],
        out_specs=(
            pl.BlockSpec((TB, N, D), lambda b: (b, 0, 0)),
            pl.BlockSpec((TB, N, D), lambda b: (b, 0, 0)),
        ),
        compiler_params=pltpu.CompilerParams(
            dimension_semantics=("parallel",),     # batch tiles are independent
            vmem_limit_bytes=_VMEM_LIMIT,
        ),
    )(x, ln_mu, ln_rstd, p["xca_head_bias"],
      p["xca_ln_g"], p["xca_ln_b"], p["xca_wqkv_t"], p["xca_temp_vec"],
      p["xca_wout_t"], p["xca_bout"], p["xca_alpha"],
      p["ff_ln_g"], p["ff_ln_b"], p["ff_w1_t"], p["ff_b1"],
      p["ff_w2_t"], p["ff_b2"], p["ff_alpha"])


# ----------------------------------------------------------------------------
# Branch 2: LayerScale(LocalPatchInteraction)
#   out = x + alpha * LPI(LayerNorm(x))
#   LPI = dwconv3x3 -> GELU -> BatchNorm2d (training-mode batch stats) -> dwconv3x3
# Gridded over channel tiles (BN stats are per channel).  All element-wise /
# BN work runs on a flattened (B, N, TD) view; the 3x3 conv reads 9 static
# offset slices of a zero-padded VMEM scratch (row shifts = +-pW offsets on the
# flat axis, column borders handled by hoisted masks).
# ----------------------------------------------------------------------------
def lpi_kernel(x_ref, mu_ref, rstd_ref, ln_g, ln_b, w0, b0, bn_g, bn_b, w1, b1,
               alpha, o_ref, ypad_ref, *, pW, pad_l):
    B, N, TD = x_ref.shape
    pad_n = ypad_ref.shape[1]

    x = x_ref[...]                                             # (B, N, TD) f32
    # LayerNorm with precomputed per-token stats (this kernel only sees a
    # channel tile and cannot reduce over the full embedding dim).
    y = (x - mu_ref[...]) * rstd_ref[...] * ln_g[...] + ln_b[...]

    # Column-boundary masks on the flattened row-major spatial axis; hoisted
    # out of the tap loops (computed once per kernel invocation).
    col = lax.broadcasted_iota(jnp.int32, (N, TD), 0) % pW
    not_first_col = col != 0
    not_last_col = col != pW - 1

    # Zero the halo rows once; the body region [pad_l, pad_l+N) is rewritten
    # before each conv and the halo stays zero for both convs.
    ypad_ref[:, :pad_l, :] = jnp.zeros((B, pad_l, TD), jnp.float32)
    ypad_ref[:, pad_l + N:, :] = jnp.zeros((B, pad_n - pad_l - N, TD), jnp.float32)

    def dwconv(w_taps, bias):
        # Tap (ki, kj) for output token n = i*pW + j lives at padded-flat index
        # pad_l + n + (ki-1)*pW + (kj-1); halo rows are zero, column borders
        # are masked.  9 static slices of the scratch -- no concatenates.
        acc = jnp.zeros((B, N, TD), jnp.float32)
        for ki in range(3):
            for kj in range(3):
                start = pad_l + (ki - 1) * pW + (kj - 1)
                tap = ypad_ref[:, start:start + N, :]
                if kj == 0:
                    tap = jnp.where(not_first_col, tap, 0.0)
                elif kj == 2:
                    tap = jnp.where(not_last_col, tap, 0.0)
                acc = acc + tap * w_taps[ki * 3 + kj]
        return acc + bias

    w0v, b0v = w0[...], b0[...]
    w1v, b1v = w1[...], b1[...]

    ypad_ref[:, pad_l:pad_l + N, :] = y
    g = _gelu(dwconv(w0v, b0v))

    # BatchNorm2d, training mode: biased batch statistics over (B, pH, pW).
    g2 = g.reshape(B * N, TD)
    cnt = float(B * N)
    mean = jnp.sum(g2, axis=0, keepdims=True) / cnt            # (1, TD)
    d = g2 - mean
    var = jnp.sum(d * d, axis=0, keepdims=True) / cnt
    nrm = d * lax.rsqrt(var + BN_EPS) * bn_g[...] + bn_b[...]
    # TODO(synk): BatchNorm2d running-stat updates are a training side effect
    # with no influence on the forward output; not modeled.

    ypad_ref[:, pad_l:pad_l + N, :] = nrm.reshape(B, N, TD)
    out = dwconv(w1v, b1v)
    o_ref[...] = x + alpha[...] * out


def lpi_layerscale(x, ln_mu, ln_rstd, p, pH, pW):
    B, N, D = x.shape
    assert N == pH * pW
    TD = 128 if D % 128 == 0 else D                # lane-dense channel tile
    pad_l = ((max(pW + 1, 8) + 7) // 8) * 8        # sublane-aligned body start
    pad_n = pad_l + N + pW + 1

    stat = lambda: pl.BlockSpec((B, N, 1), lambda c: (0, 0, 0))
    vec = lambda: pl.BlockSpec((1, TD), lambda c: (0, c))
    tap = lambda: pl.BlockSpec((9, TD), lambda c: (0, c))

    kern = functools.partial(lpi_kernel, pW=pW, pad_l=pad_l)
    return pl.pallas_call(
        kern,
        out_shape=jax.ShapeDtypeStruct((B, N, D), jnp.float32),
        grid=(D // TD,),
        in_specs=[
            pl.BlockSpec((B, N, TD), lambda c: (0, 0, c)),
            stat(), stat(),
            vec(), vec(),
            tap(), vec(),
            vec(), vec(),
            tap(), vec(),
            vec(),
        ],
        out_specs=pl.BlockSpec((B, N, TD), lambda c: (0, 0, c)),
        scratch_shapes=[pltpu.VMEM((B, pad_n, TD), jnp.float32)],
        compiler_params=pltpu.CompilerParams(
            dimension_semantics=("parallel",),     # channel tiles are independent
            vmem_limit_bytes=_VMEM_LIMIT,
        ),
    )(x, ln_mu, ln_rstd, p["lpi_ln_g"], p["lpi_ln_b"], p["lpi_w0"], p["lpi_b0"],
      p["lpi_bn_g"], p["lpi_bn_b"], p["lpi_w1"], p["lpi_b1"], p["lpi_alpha"])


# ----------------------------------------------------------------------------
# Parameters (deterministic, synthetic), reference, and glue.
# ----------------------------------------------------------------------------
def init_params(key, dim, heads, head_dim, ff_expand=4, alpha=1e-5):
    ks = jax.random.split(key, 12)

    def nrm(k, shape, s=0.02, dtype=jnp.float32):
        return (s * jax.random.normal(k, shape, jnp.float32)).astype(dtype)

    ones = lambda shape: jnp.ones(shape, jnp.float32)
    zeros = lambda shape: jnp.zeros(shape, jnp.float32)
    p = {}

    # --- XCA branch ---  (MXU weights stored bf16; f32 accumulation in-kernel)
    p["xca_ln_g"] = ones((1, dim))
    p["xca_ln_b"] = zeros((1, dim))
    p["xca_wqkv_t"] = nrm(ks[0], (dim, 3 * dim), dtype=jnp.bfloat16)   # QKV, bias=False
    temperature = ones((heads,))                                       # Parameter(ones(1,h,1,1))
    p["xca_temp_vec"] = jnp.repeat(temperature, head_dim).reshape(1, dim)
    p["xca_wout_t"] = nrm(ks[1], (dim, dim), dtype=jnp.bfloat16)
    p["xca_bout"] = nrm(ks[2], (1, dim))
    p["xca_alpha"] = jnp.full((1, dim), alpha, jnp.float32)
    p["xca_head_bias"] = make_head_bias(dim, heads)                    # precomputed mask

    # --- LPI branch --- (depthwise taps stored as (9, dim): [ki*3+kj, c])
    p["lpi_ln_g"] = ones((1, dim))
    p["lpi_ln_b"] = zeros((1, dim))
    w0 = nrm(ks[3], (dim, 3, 3))
    w1 = nrm(ks[4], (dim, 3, 3))
    p["lpi_w0"] = jnp.transpose(w0.reshape(dim, 9), (1, 0))
    p["lpi_w1"] = jnp.transpose(w1.reshape(dim, 9), (1, 0))
    p["lpi_b0"] = nrm(ks[5], (1, dim))
    p["lpi_b1"] = nrm(ks[6], (1, dim))
    p["lpi_bn_g"] = ones((1, dim))
    p["lpi_bn_b"] = zeros((1, dim))
    p["lpi_alpha"] = jnp.full((1, dim), alpha, jnp.float32)

    # --- FF branch ---
    hid = dim * ff_expand
    p["ff_ln_g"] = ones((1, dim))
    p["ff_ln_b"] = zeros((1, dim))
    p["ff_w1_t"] = nrm(ks[7], (dim, hid), dtype=jnp.bfloat16)
    p["ff_b1"] = nrm(ks[8], (1, hid))
    p["ff_w2_t"] = nrm(ks[9], (hid, dim), dtype=jnp.bfloat16)
    p["ff_b2"] = nrm(ks[10], (1, dim))
    p["ff_alpha"] = jnp.full((1, dim), alpha, jnp.float32)
    return p


def xcit_layer_forward(x, params, pH, pW):
    """Faithful to XCiTLayer.forward: branches are computed, result is x."""
    ln_mu, ln_rstd = _layernorm_stats(x)
    xca_out, ff_out = xca_ff_layerscale(x, ln_mu, ln_rstd, params)
    lpi_out = lpi_layerscale(x, ln_mu, ln_rstd, params, pH, pW)
    return x, (xca_out, lpi_out, ff_out)


def reference_branches(x, p, heads, head_dim, pH, pW):
    """Pure-JAX reference (per-head XCA formulation) for validation."""
    B, N, D = x.shape
    bf16, f32 = jnp.bfloat16, jnp.float32
    mu = jnp.mean(x, -1, keepdims=True)
    var = jnp.mean((x - mu) ** 2, -1, keepdims=True)
    xc = (x - mu) * lax.rsqrt(var + LN_EPS)

    # XCA
    y = (xc * p["xca_ln_g"] + p["xca_ln_b"]).astype(bf16)
    qkv = jnp.einsum("bnd,de->bne", y, p["xca_wqkv_t"], preferred_element_type=f32)
    q, k, v = qkv[..., :D], qkv[..., D:2 * D], qkv[..., 2 * D:]
    qn = q / jnp.maximum(jnp.sqrt(jnp.sum(q * q, axis=1, keepdims=True)), NORM_EPS)
    kn = k / jnp.maximum(jnp.sqrt(jnp.sum(k * k, axis=1, keepdims=True)), NORM_EPS)
    kn = kn * p["xca_temp_vec"]
    outs = []
    for h in range(heads):
        sl = slice(h * head_dim, (h + 1) * head_dim)
        s = jnp.einsum("bnp,bnq->bpq", kn[..., sl].astype(bf16),
                       qn[..., sl].astype(bf16), preferred_element_type=f32)
        s = s - jnp.max(s, -1, keepdims=True)
        pr = jnp.exp(s)
        pr = pr / jnp.sum(pr, -1, keepdims=True)
        outs.append(jnp.einsum("bnp,bpq->bnq", v[..., sl].astype(bf16),
                               pr.astype(bf16), preferred_element_type=f32))
    attn_out = jnp.concatenate(outs, axis=-1)
    xca = jnp.einsum("bnd,de->bne", attn_out.astype(bf16), p["xca_wout_t"],
                     preferred_element_type=f32) + p["xca_bout"]
    xca_out = x + p["xca_alpha"] * xca

    # LPI
    yl = (xc * p["lpi_ln_g"] + p["lpi_ln_b"]).reshape(B, pH, pW, D)

    def dwconv(z, w, b):
        zp = jnp.pad(z, ((0, 0), (1, 1), (1, 1), (0, 0)))
        acc = jnp.zeros_like(z)
        for ki in range(3):
            for kj in range(3):
                acc = acc + zp[:, ki:ki + pH, kj:kj + pW, :] * w[ki * 3 + kj]
        return acc + b

    g = _gelu(dwconv(yl, p["lpi_w0"], p["lpi_b0"]))
    mean = jnp.mean(g, axis=(0, 1, 2), keepdims=True)
    varb = jnp.mean((g - mean) ** 2, axis=(0, 1, 2), keepdims=True)
    nrm = (g - mean) * lax.rsqrt(varb + BN_EPS) * p["lpi_bn_g"] + p["lpi_bn_b"]
    lpi = dwconv(nrm, p["lpi_w1"], p["lpi_b1"]).reshape(B, N, D)
    lpi_out = x + p["lpi_alpha"] * lpi

    # FF
    yf = (xc * p["ff_ln_g"] + p["ff_ln_b"]).astype(bf16)
    h = jnp.einsum("bnd,dh->bnh", yf, p["ff_w1_t"], preferred_element_type=f32) + p["ff_b1"]
    h = _gelu(h).astype(bf16)
    ff = jnp.einsum("bnh,hd->bnd", h, p["ff_w2_t"], preferred_element_type=f32) + p["ff_b2"]
    ff_out = x + p["ff_alpha"] * ff
    return xca_out, lpi_out, ff_out


if __name__ == "__main__":
    B, pH, pW = 2, 4, 4
    dim, heads = 128, 4               # lane-dense embedding dim (multiple of 128)
    head_dim = dim // heads
    N = pH * pW

    key = jax.random.PRNGKey(0)
    kx, kp = jax.random.split(key)
    x = jax.random.normal(kx, (B, N, dim), jnp.float32)
    params = init_params(kp, dim, heads, head_dim)

    fwd = jax.jit(functools.partial(xcit_layer_forward, pH=pH, pW=pW))

    # Actual forward with the module-default LayerScale alpha = 1e-5.
    out, branches = fwd(x, params)
    jax.block_until_ready((out, branches))

    assert out.shape == (B, N, dim)
    for br in branches:
        assert br.shape == (B, N, dim)
        assert bool(jnp.all(jnp.isfinite(br)))
    # XCiTLayer.forward returns the input unchanged (branch results discarded).
    assert bool(jnp.all(out == x))

    # Numerical check of the branch kernels vs a pure-JAX reference.
    # Use alpha=1.0 here so the branch contribution is not lost below f32
    # epsilon of x (same compiled kernels; only parameter values change).
    vparams = dict(params)
    for kname in ("xca_alpha", "lpi_alpha", "ff_alpha"):
        vparams[kname] = jnp.ones_like(params[kname])
    _, kbr = fwd(x, vparams)
    rbr = reference_branches(x, vparams, heads, head_dim, pH, pW)
    jax.block_until_ready((kbr, rbr))
    for name, a, b in zip(("xca", "lpi", "ff"), kbr, rbr):
        da, db = a - x, b - x
        err = float(jnp.max(jnp.abs(da - db)) / (jnp.max(jnp.abs(db)) + 1e-6))
        assert err < 0.1, f"{name} branch mismatch: normalized err {err}"

    print("KERNEL_OK")
</pallas_src>

<mosaic_0001>
module attributes {stable_mosaic.version = 11 : i64} {
  func.func @xca_ff_kernel(%arg0: i32, %arg1: memref<2x16x128xf32, #tpu.memory_space<vmem>>, %arg2: memref<2x16x1xf32, #tpu.memory_space<vmem>>, %arg3: memref<2x16x1xf32, #tpu.memory_space<vmem>>, %arg4: memref<128x128xf32, #tpu.memory_space<vmem>>, %arg5: memref<1x128xf32, #tpu.memory_space<vmem>>, %arg6: memref<1x128xf32, #tpu.memory_space<vmem>>, %arg7: memref<128x384xbf16, #tpu.memory_space<vmem>>, %arg8: memref<1x128xf32, #tpu.memory_space<vmem>>, %arg9: memref<128x128xbf16, #tpu.memory_space<vmem>>, %arg10: memref<1x128xf32, #tpu.memory_space<vmem>>, %arg11: memref<1x128xf32, #tpu.memory_space<vmem>>, %arg12: memref<1x128xf32, #tpu.memory_space<vmem>>, %arg13: memref<1x128xf32, #tpu.memory_space<vmem>>, %arg14: memref<128x512xbf16, #tpu.memory_space<vmem>>, %arg15: memref<1x512xf32, #tpu.memory_space<vmem>>, %arg16: memref<512x128xbf16, #tpu.memory_space<vmem>>, %arg17: memref<1x128xf32, #tpu.memory_space<vmem>>, %arg18: memref<1x128xf32, #tpu.memory_space<vmem>>, %arg19: memref<2x16x128xf32, #tpu.memory_space<vmem>>, %arg20: memref<2x16x128xf32, #tpu.memory_space<vmem>>) attributes {dimension_semantics = [#tpu.dimension_semantics<parallel>], iteration_bounds = array<i64: 1>, scalar_prefetch = 0 : i64, scratch_operands = 0 : i64, tpu.core_type = #tpu.core_type<tc>, window_params = [{transform_indices = @transform_0, window_bounds = array<i64: 2, 16, 128>}, {transform_indices = @transform_1, window_bounds = array<i64: 2, 16, 1>}, {transform_indices = @transform_2, window_bounds = array<i64: 2, 16, 1>}, {pipeline_mode = #tpu.pipeline_mode<synchronous>, transform_indices = @transform_3, window_bounds = array<i64: 128, 128>}, {pipeline_mode = #tpu.pipeline_mode<synchronous>, transform_indices = @transform_4, window_bounds = array<i64: 1, 128>}, {pipeline_mode = #tpu.pipeline_mode<synchronous>, transform_indices = @transform_5, window_bounds = array<i64: 1, 128>}, {pipeline_mode = #tpu.pipeline_mode<synchronous>, transform_indices = @transform_6, window_bounds = array<i64: 128, 384>}, {pipeline_mode = #tpu.pipeline_mode<synchronous>, transform_indices = @transform_7, window_bounds = array<i64: 1, 128>}, {pipeline_mode = #tpu.pipeline_mode<synchronous>, transform_indices = @transform_8, window_bounds = array<i64: 128, 128>}, {pipeline_mode = #tpu.pipeline_mode<synchronous>, transform_indices = @transform_9, window_bounds = array<i64: 1, 128>}, {pipeline_mode = #tpu.pipeline_mode<synchronous>, transform_indices = @transform_10, window_bounds = array<i64: 1, 128>}, {pipeline_mode = #tpu.pipeline_mode<synchronous>, transform_indices = @transform_11, window_bounds = array<i64: 1, 128>}, {pipeline_mode = #tpu.pipeline_mode<synchronous>, transform_indices = @transform_12, window_bounds = array<i64: 1, 128>}, {pipeline_mode = #tpu.pipeline_mode<synchronous>, transform_indices = @transform_13, window_bounds = array<i64: 128, 512>}, {pipeline_mode = #tpu.pipeline_mode<synchronous>, transform_indices = @transform_14, window_bounds = array<i64: 1, 512>}, {pipeline_mode = #tpu.pipeline_mode<synchronous>, transform_indices = @transform_15, window_bounds = array<i64: 512, 128>}, {pipeline_mode = #tpu.pipeline_mode<synchronous>, transform_indices = @transform_16, window_bounds = array<i64: 1, 128>}, {pipeline_mode = #tpu.pipeline_mode<synchronous>, transform_indices = @transform_17, window_bounds = array<i64: 1, 128>}, {transform_indices = @transform_18, window_bounds = array<i64: 2, 16, 128>}, {transform_indices = @transform_19, window_bounds = array<i64: 2, 16, 128>}]} {
    %c0 = arith.constant 0 : index
    %c0_0 = arith.constant 0 : index
    %c0_1 = arith.constant 0 : index
    %0 = vector.load %arg1[%c0, %c0_0, %c0_1] : memref<2x16x128xf32, #tpu.memory_space<vmem>>, vector<2x16x128xf32>
    %c0_2 = arith.constant 0 : index
    %c0_3 = arith.constant 0 : index
    %c0_4 = arith.constant 0 : index
    %1 = vector.load %arg2[%c0_2, %c0_3, %c0_4] : memref<2x16x1xf32, #tpu.memory_space<vmem>>, vector<2x16x1xf32>
    %2 = vector.broadcast %1 : vector<2x16x1xf32> to vector<2x16x128xf32>
    %3 = arith.subf %0, %2 : vector<2x16x128xf32>
    %c0_5 = arith.constant 0 : index
    %c0_6 = arith.constant 0 : index
    %c0_7 = arith.constant 0 : index
    %4 = vector.load %arg3[%c0_5, %c0_6, %c0_7] : memref<2x16x1xf32, #tpu.memory_space<vmem>>, vector<2x16x1xf32>
    %5 = vector.broadcast %4 : vector<2x16x1xf32> to vector<2x16x128xf32>
    %6 = arith.mulf %3, %5 : vector<2x16x128xf32>
    %7 = vector.shape_cast %0 : vector<2x16x128xf32> to vector<32x128xf32>
    %8 = vector.shape_cast %6 : vector<2x16x128xf32> to vector<32x128xf32>
    %c0_8 = arith.constant 0 : index
    %c0_9 = arith.constant 0 : index
    %9 = vector.load %arg5[%c0_8, %c0_9] : memref<1x128xf32, #tpu.memory_space<vmem>>, vector<1x128xf32>
    %10 = vector.broadcast %9 : vector<1x128xf32> to vector<32x128xf32>
    %11 = arith.mulf %8, %10 : vector<32x128xf32>
    %c0_10 = arith.constant 0 : index
    %c0_11 = arith.constant 0 : index
    %12 = vector.load %arg6[%c0_10, %c0_11] : memref<1x128xf32, #tpu.memory_space<vmem>>, vector<1x128xf32>
    %13 = vector.broadcast %12 : vector<1x128xf32> to vector<32x128xf32>
    %14 = arith.addf %11, %13 : vector<32x128xf32>
    %15 = arith.truncf %14 : vector<32x128xf32> to vector<32x128xbf16>
    %c0_12 = arith.constant 0 : index
    %c0_13 = arith.constant 0 : index
    %16 = vector.load %arg7[%c0_12, %c0_13] : memref<128x384xbf16, #tpu.memory_space<vmem>>, vector<128x384xbf16>
    %cst = arith.constant dense<0.000000e+00> : vector<32x384xf32>
    %17 = tpu.matmul %15, %16, %cst {dimension_numbers = #tpu.dot_dimension_numbers<[1], [0], [0], [1], [0, 0, 1, 1], [], []>} : vector<32x128xbf16>, vector<128x384xbf16>, vector<32x384xf32> -> vector<32x384xf32>
    %18 = vector.extract_strided_slice %17 {offsets = [0, 0], sizes = [32, 128], strides = [1, 1]} : vector<32x384xf32> to vector<32x128xf32>
    %19 = vector.shape_cast %18 : vector<32x128xf32> to vector<2x16x128xf32>
    %20 = vector.extract_strided_slice %17 {offsets = [0, 128], sizes = [32, 128], strides = [1, 1]} : vector<32x384xf32> to vector<32x128xf32>
    %21 = vector.shape_cast %20 : vector<32x128xf32> to vector<2x16x128xf32>
    %22 = vector.extract_strided_slice %17 {offsets = [0, 256], sizes = [32, 128], strides = [1, 1]} : vector<32x384xf32> to vector<32x128xf32>
    %23 = vector.shape_cast %22 : vector<32x128xf32> to vector<2x16x128xf32>
    %24 = arith.mulf %19, %19 : vector<2x16x128xf32>
    %cst_14 = arith.constant dense<0.000000e+00> : vector<2x128xf32>
    %25 = vector.multi_reduction <add>, %24, %cst_14 [1] : vector<2x16x128xf32> to vector<2x128xf32>
    %26 = vector.shape_cast %25 : vector<2x128xf32> to vector<2x1x128xf32>
    %27 = math.sqrt %26 : vector<2x1x128xf32>
    %cst_15 = arith.constant 9.99999996E-13 : f32
    %28 = vector.broadcast %cst_15 : f32 to vector<2x1x128xf32>
    %29 = arith.maximumf %27, %28 : vector<2x1x128xf32>
    %30 = vector.broadcast %29 : vector<2x1x128xf32> to vector<2x16x128xf32>
    %31 = arith.divf %19, %30 : vector<2x16x128xf32>
    %32 = arith.mulf %21, %21 : vector<2x16x128xf32>
    %cst_16 = arith.constant dense<0.000000e+00> : vector<2x128xf32>
    %33 = vector.multi_reduction <add>, %32, %cst_16 [1] : vector<2x16x128xf32> to vector<2x128xf32>
    %34 = vector.shape_cast %33 : vector<2x128xf32> to vector<2x1x128xf32>
    %35 = math.sqrt %34 : vector<2x1x128xf32>
    %cst_17 = arith.constant 9.99999996E-13 : f32
    %36 = vector.broadcast %cst_17 : f32 to vector<2x1x128xf32>
    %37 = arith.maximumf %35, %36 : vector<2x1x128xf32>
    %38 = vector.broadcast %37 : vector<2x1x128xf32> to vector<2x16x128xf32>
    %39 = arith.divf %21, %38 : vector<2x16x128xf32>
    %c0_18 = arith.constant 0 : index
    %c0_19 = arith.constant 0 : index
    %40 = vector.load %arg8[%c0_18, %c0_19] : memref<1x128xf32, #tpu.memory_space<vmem>>, vector<1x128xf32>
    %41 = vector.shape_cast %40 : vector<1x128xf32> to vector<1x1x128xf32>
    %42 = vector.broadcast %41 : vector<1x1x128xf32> to vector<2x16x128xf32>
    %43 = arith.mulf %39, %42 : vector<2x16x128xf32>
    %44 = arith.truncf %43 : vector<2x16x128xf32> to vector<2x16x128xbf16>
    %45 = arith.truncf %31 : vector<2x16x128xf32> to vector<2x16x128xbf16>
    "tpu.trace_start"() <{level = 10 : i32, message = "bnp,bnq->bpq"}> : () -> ()
    %cst_20 = arith.constant dense<0.000000e+00> : vector<2x128x128xf32>
    %46 = tpu.matmul %44, %45, %cst_20 {dimension_numbers = #tpu.dot_dimension_numbers<[1], [1], [2], [2], [0, 0, 0, 2, 1, 2], [0], [0]>} : vector<2x16x128xbf16>, vector<2x16x128xbf16>, vector<2x128x128xf32> -> vector<2x128x128xf32>
    "tpu.trace_stop"() : () -> ()
    %c0_21 = arith.constant 0 : index
    %c0_22 = arith.constant 0 : index
    %47 = vector.load %arg4[%c0_21, %c0_22] : memref<128x128xf32, #tpu.memory_space<vmem>>, vector<128x128xf32>
    %48 = vector.shape_cast %47 : vector<128x128xf32> to vector<1x128x128xf32>
    %49 = vector.broadcast %48 : vector<1x128x128xf32> to vector<2x128x128xf32>
    %50 = arith.addf %46, %49 : vector<2x128x128xf32>
    %cst_23 = arith.constant dense<0xFF800000> : vector<2x128xf32>
    %51 = vector.multi_reduction <maximumf>, %50, %cst_23 [2] : vector<2x128x128xf32> to vector<2x128xf32>
    %52 = vector.shape_cast %51 : vector<2x128xf32> to vector<2x128x1xf32>
    %53 = vector.broadcast %52 : vector<2x128x1xf32> to vector<2x128x128xf32>
    %54 = arith.subf %50, %53 : vector<2x128x128xf32>
    %55 = math.exp %54 : vector<2x128x128xf32>
    %cst_24 = arith.constant dense<0.000000e+00> : vector<2x128xf32>
    %56 = vector.multi_reduction <add>, %55, %cst_24 [2] : vector<2x128x128xf32> to vector<2x128xf32>
    %57 = vector.shape_cast %56 : vector<2x128xf32> to vector<2x128x1xf32>
    %58 = tpu.reciprocal %57 {approx = true} : vector<2x128x1xf32> -> vector<2x128x1xf32>
    %59 = vector.broadcast %58 : vector<2x128x1xf32> to vector<2x128x128xf32>
    %60 = arith.mulf %55, %59 : vector<2x128x128xf32>
    %61 = arith.truncf %23 : vector<2x16x128xf32> to vector<2x16x128xbf16>
    %62 = arith.truncf %60 : vector<2x128x128xf32> to vector<2x128x128xbf16>
    "tpu.trace_start"() <{level = 10 : i32, message = "bnp,bpq->bnq"}> : () -> ()
    %cst_25 = arith.constant dense<0.000000e+00> : vector<2x16x128xf32>
    %63 = tpu.matmul %61, %62, %cst_25 {dimension_numbers = #tpu.dot_dimension_numbers<[2], [1], [1], [2], [0, 0, 0, 1, 1, 2], [0], [0]>} : vector<2x16x128xbf16>, vector<2x128x128xbf16>, vector<2x16x128xf32> -> vector<2x16x128xf32>
    "tpu.trace_stop"() : () -> ()
    %64 = vector.shape_cast %63 : vector<2x16x128xf32> to vector<32x128xf32>
    %65 = arith.truncf %64 : vector<32x128xf32> to vector<32x128xbf16>
    %c0_26 = arith.constant 0 : index
    %c0_27 = arith.constant 0 : index
    %66 = vector.load %arg9[%c0_26, %c0_27] : memref<128x128xbf16, #tpu.memory_space<vmem>>, vector<128x128xbf16>
    %cst_28 = arith.constant dense<0.000000e+00> : vector<32x128xf32>
    %67 = tpu.matmul %65, %66, %cst_28 {dimension_numbers = #tpu.dot_dimension_numbers<[1], [0], [0], [1], [0, 0, 1, 1], [], []>} : vector<32x128xbf16>, vector<128x128xbf16>, vector<32x128xf32> -> vector<32x128xf32>
    %c0_29 = arith.constant 0 : index
    %c0_30 = arith.constant 0 : index
    %68 = vector.load %arg10[%c0_29, %c0_30] : memref<1x128xf32, #tpu.memory_space<vmem>>, vector<1x128xf32>
    %69 = vector.broadcast %68 : vector<1x128xf32> to vector<32x128xf32>
    %70 = arith.addf %67, %69 : vector<32x128xf32>
    %c0_31 = arith.constant 0 : index
    %c0_32 = arith.constant 0 : index
    %71 = vector.load %arg11[%c0_31, %c0_32] : memref<1x128xf32, #tpu.memory_space<vmem>>, vector<1x128xf32>
    %72 = vector.broadcast %71 : vector<1x128xf32> to vector<32x128xf32>
    %73 = arith.mulf %72, %70 : vector<32x128xf32>
    %74 = arith.addf %7, %73 : vector<32x128xf32>
    %75 = vector.shape_cast %74 : vector<32x128xf32> to vector<2x16x128xf32>
    %c0_33 = arith.constant 0 : index
    %c0_34 = arith.constant 0 : index
    %c0_35 = arith.constant 0 : index
    %76 = vector.load %arg19[%c0_33, %c0_34, %c0_35] : memref<2x16x128xf32, #tpu.memory_space<vmem>>, vector<2x16x128xf32>
    tpu.vector_store %arg19[%c0_33, %c0_34, %c0_35], %75 {strides = array<i32>} : memref<2x16x128xf32, #tpu.memory_space<vmem>>, vector<2x16x128xf32>,
    %c0_36 = arith.constant 0 : index
    %c0_37 = arith.constant 0 : index
    %77 = vector.load %arg12[%c0_36, %c0_37] : memref<1x128xf32, #tpu.memory_space<vmem>>, vector<1x128xf32>
    %78 = vector.broadcast %77 : vector<1x128xf32> to vector<32x128xf32>
    %79 = arith.mulf %8, %78 : vector<32x128xf32>
    %c0_38 = arith.constant 0 : index
    %c0_39 = arith.constant 0 : index
    %80 = vector.load %arg13[%c0_38, %c0_39] : memref<1x128xf32, #tpu.memory_space<vmem>>, vector<1x128xf32>
    %81 = vector.broadcast %80 : vector<1x128xf32> to vector<32x128xf32>
    %82 = arith.addf %79, %81 : vector<32x128xf32>
    %83 = arith.truncf %82 : vector<32x128xf32> to vector<32x128xbf16>
    %c0_40 = arith.constant 0 : index
    %c0_41 = arith.constant 0 : index
    %84 = vector.load %arg14[%c0_40, %c0_41] : memref<128x512xbf16, #tpu.memory_space<vmem>>, vector<128x512xbf16>
    %cst_42 = arith.constant dense<0.000000e+00> : vector<32x512xf32>
    %85 = tpu.matmul %83, %84, %cst_42 {dimension_numbers = #tpu.dot_dimension_numbers<[1], [0], [0], [1], [0, 0, 1, 1], [], []>} : vector<32x128xbf16>, vector<128x512xbf16>, vector<32x512xf32> -> vector<32x512xf32>
    %c0_43 = arith.constant 0 : index
    %c0_44 = arith.constant 0 : index
    %86 = vector.load %arg15[%c0_43, %c0_44] : memref<1x512xf32, #tpu.memory_space<vmem>>, vector<1x512xf32>
    %87 = vector.broadcast %86 : vector<1x512xf32> to vector<32x512xf32>
    %88 = arith.addf %85, %87 : vector<32x512xf32>
    %cst_45 = arith.constant 5.000000e-01 : f32
    %89 = vector.broadcast %cst_45 : f32 to vector<32x512xf32>
    %90 = arith.mulf %89, %88 : vector<32x512xf32>
    %cst_46 = arith.constant 4.471500e-02 : f32
    %91 = vector.broadcast %cst_46 : f32 to vector<32x512xf32>
    %92 = arith.mulf %91, %88 : vector<32x512xf32>
    %93 = arith.mulf %92, %88 : vector<32x512xf32>
    %94 = arith.mulf %93, %88 : vector<32x512xf32>
    %95 = arith.addf %88, %94 : vector<32x512xf32>
    %cst_47 = arith.constant 0.797884583 : f32
    %96 = vector.broadcast %cst_47 : f32 to vector<32x512xf32>
    %97 = arith.mulf %96, %95 : vector<32x512xf32>
    %98 = math.tanh %97 : vector<32x512xf32>
    %cst_48 = arith.constant 1.000000e+00 : f32
    %99 = vector.broadcast %cst_48 : f32 to vector<32x512xf32>
    %100 = arith.addf %99, %98 : vector<32x512xf32>
    %101 = arith.mulf %90, %100 : vector<32x512xf32>
    %102 = arith.truncf %101 : vector<32x512xf32> to vector<32x512xbf16>
    %c0_49 = arith.constant 0 : index
    %c0_50 = arith.constant 0 : index
    %103 = vector.load %arg16[%c0_49, %c0_50] : memref<512x128xbf16, #tpu.memory_space<vmem>>, vector<512x128xbf16>
    %cst_51 = arith.constant dense<0.000000e+00> : vector<32x128xf32>
    %104 = tpu.matmul %102, %103, %cst_51 {dimension_numbers = #tpu.dot_dimension_numbers<[1], [0], [0], [1], [0, 0, 1, 1], [], []>} : vector<32x512xbf16>, vector<512x128xbf16>, vector<32x128xf32> -> vector<32x128xf32>
    %c0_52 = arith.constant 0 : index
    %c0_53 = arith.constant 0 : index
    %105 = vector.load %arg17[%c0_52, %c0_53] : memref<1x128xf32, #tpu.memory_space<vmem>>, vector<1x128xf32>
    %106 = vector.broadcast %105 : vector<1x128xf32> to vector<32x128xf32>
    %107 = arith.addf %104, %106 : vector<32x128xf32>
    %c0_54 = arith.constant 0 : index
    %c0_55 = arith.constant 0 : index
    %108 = vector.load %arg18[%c0_54, %c0_55] : memref<1x128xf32, #tpu.memory_space<vmem>>, vector<1x128xf32>
    %109 = vector.broadcast %108 : vector<1x128xf32> to vector<32x128xf32>
    %110 = arith.mulf %109, %107 : vector<32x128xf32>
    %111 = arith.addf %7, %110 : vector<32x128xf32>
    %112 = vector.shape_cast %111 : vector<32x128xf32> to vector<2x16x128xf32>
    %c0_56 = arith.constant 0 : index
    %c0_57 = arith.constant 0 : index
    %c0_58 = arith.constant 0 : index
    %113 = vector.load %arg20[%c0_56, %c0_57, %c0_58] : memref<2x16x128xf32, #tpu.memory_space<vmem>>, vector<2x16x128xf32>
    tpu.vector_store %arg20[%c0_56, %c0_57, %c0_58], %112 {strides = array<i32>} : memref<2x16x128xf32, #tpu.memory_space<vmem>>, vector<2x16x128xf32>,
    return
  }
  func.func @transform_0(%arg0: i32) -> (i32, i32, i32) {
    %c0_i32 = arith.constant 0 : i32
    %c0_i32_0 = arith.constant 0 : i32
    %c0_i32_1 = arith.constant 0 : i32
    return %arg0, %c0_i32, %c0_i32_0 : i32, i32, i32
  }
  func.func @transform_1(%arg0: i32) -> (i32, i32, i32) {
    %c0_i32 = arith.constant 0 : i32
    %c0_i32_0 = arith.constant 0 : i32
    %c0_i32_1 = arith.constant 0 : i32
    return %arg0, %c0_i32, %c0_i32_0 : i32, i32, i32
  }
  func.func @transform_2(%arg0: i32) -> (i32, i32, i32) {
    %c0_i32 = arith.constant 0 : i32
    %c0_i32_0 = arith.constant 0 : i32
    %c0_i32_1 = arith.constant 0 : i32
    return %arg0, %c0_i32, %c0_i32_0 : i32, i32, i32
  }
  func.func @transform_3(%arg0: i32) -> (i32, i32) {
    %c0_i32 = arith.constant 0 : i32
    %c0_i32_0 = arith.constant 0 : i32
    %c0_i32_1 = arith.constant 0 : i32
    return %c0_i32, %c0_i32_0 : i32, i32
  }
  func.func @transform_4(%arg0: i32) -> (i32, i32) {
    %c0_i32 = arith.constant 0 : i32
    %c0_i32_0 = arith.constant 0 : i32
    %c0_i32_1 = arith.constant 0 : i32
    return %c0_i32, %c0_i32_0 : i32, i32
  }
  func.func @transform_5(%arg0: i32) -> (i32, i32) {
    %c0_i32 = arith.constant 0 : i32
    %c0_i32_0 = arith.constant 0 : i32
    %c0_i32_1 = arith.constant 0 : i32
    return %c0_i32, %c0_i32_0 : i32, i32
  }
  func.func @transform_6(%arg0: i32) -> (i32, i32) {
    %c0_i32 = arith.constant 0 : i32
    %c0_i32_0 = arith.constant 0 : i32
    %c0_i32_1 = arith.constant 0 : i32
    return %c0_i32, %c0_i32_0 : i32, i32
  }
  func.func @transform_7(%arg0: i32) -> (i32, i32) {
    %c0_i32 = arith.constant 0 : i32
    %c0_i32_0 = arith.constant 0 : i32
    %c0_i32_1 = arith.constant 0 : i32
    return %c0_i32, %c0_i32_0 : i32, i32
  }
  func.func @transform_8(%arg0: i32) -> (i32, i32) {
    %c0_i32 = arith.constant 0 : i32
    %c0_i32_0 = arith.constant 0 : i32
    %c0_i32_1 = arith.constant 0 : i32
    return %c0_i32, %c0_i32_0 : i32, i32
  }
  func.func @transform_9(%arg0: i32) -> (i32, i32) {
    %c0_i32 = arith.constant 0 : i32
    %c0_i32_0 = arith.constant 0 : i32
    %c0_i32_1 = arith.constant 0 : i32
    return %c0_i32, %c0_i32_0 : i32, i32
  }
  func.func @transform_10(%arg0: i32) -> (i32, i32) {
    %c0_i32 = arith.constant 0 : i32
    %c0_i32_0 = arith.constant 0 : i32
    %c0_i32_1 = arith.constant 0 : i32
    return %c0_i32, %c0_i32_0 : i32, i32
  }
  func.func @transform_11(%arg0: i32) -> (i32, i32) {
    %c0_i32 = arith.constant 0 : i32
    %c0_i32_0 = arith.constant 0 : i32
    %c0_i32_1 = arith.constant 0 : i32
    return %c0_i32, %c0_i32_0 : i32, i32
  }
  func.func @transform_12(%arg0: i32) -> (i32, i32) {
    %c0_i32 = arith.constant 0 : i32
    %c0_i32_0 = arith.constant 0 : i32
    %c0_i32_1 = arith.constant 0 : i32
    return %c0_i32, %c0_i32_0 : i32, i32
  }
  func.func @transform_13(%arg0: i32) -> (i32, i32) {
    %c0_i32 = arith.constant 0 : i32
    %c0_i32_0 = arith.constant 0 : i32
    %c0_i32_1 = arith.constant 0 : i32
    return %c0_i32, %c0_i32_0 : i32, i32
  }
  func.func @transform_14(%arg0: i32) -> (i32, i32) {
    %c0_i32 = arith.constant 0 : i32
    %c0_i32_0 = arith.constant 0 : i32
    %c0_i32_1 = arith.constant 0 : i32
    return %c0_i32, %c0_i32_0 : i32, i32
  }
  func.func @transform_15(%arg0: i32) -> (i32, i32) {
    %c0_i32 = arith.constant 0 : i32
    %c0_i32_0 = arith.constant 0 : i32
    %c0_i32_1 = arith.constant 0 : i32
    return %c0_i32, %c0_i32_0 : i32, i32
  }
  func.func @transform_16(%arg0: i32) -> (i32, i32) {
    %c0_i32 = arith.constant 0 : i32
    %c0_i32_0 = arith.constant 0 : i32
    %c0_i32_1 = arith.constant 0 : i32
    return %c0_i32, %c0_i32_0 : i32, i32
  }
  func.func @transform_17(%arg0: i32) -> (i32, i32) {
    %c0_i32 = arith.constant 0 : i32
    %c0_i32_0 = arith.constant 0 : i32
    %c0_i32_1 = arith.constant 0 : i32
    return %c0_i32, %c0_i32_0 : i32, i32
  }
  func.func @transform_18(%arg0: i32) -> (i32, i32, i32) {
    %c0_i32 = arith.constant 0 : i32
    %c0_i32_0 = arith.constant 0 : i32
    %c0_i32_1 = arith.constant 0 : i32
    return %arg0, %c0_i32, %c0_i32_0 : i32, i32, i32
  }
  func.func @transform_19(%arg0: i32) -> (i32, i32, i32) {
    %c0_i32 = arith.constant 0 : i32
    %c0_i32_0 = arith.constant 0 : i32
    %c0_i32_1 = arith.constant 0 : i32
    return %arg0, %c0_i32, %c0_i32_0 : i32, i32, i32
  }
}

module attributes {stable_mosaic.version = 11 : i64} {
  func.func @lpi_kernel(%arg0: i32, %arg1: memref<2x16x128xf32, #tpu.memory_space<vmem>>, %arg2: memref<2x16x1xf32, #tpu.memory_space<vmem>>, %arg3: memref<2x16x1xf32, #tpu.memory_space<vmem>>, %arg4: memref<1x128xf32, #tpu.memory_space<vmem>>, %arg5: memref<1x128xf32, #tpu.memory_space<vmem>>, %arg6: memref<9x128xf32, #tpu.memory_space<vmem>>, %arg7: memref<1x128xf32, #tpu.memory_space<vmem>>, %arg8: memref<1x128xf32, #tpu.memory_space<vmem>>, %arg9: memref<1x128xf32, #tpu.memory_space<vmem>>, %arg10: memref<9x128xf32, #tpu.memory_space<vmem>>, %arg11: memref<1x128xf32, #tpu.memory_space<vmem>>, %arg12: memref<1x128xf32, #tpu.memory_space<vmem>>, %arg13: memref<2x16x128xf32, #tpu.memory_space<vmem>>, %arg14: memref<2x29x128xf32, #tpu.memory_space<vmem>>) attributes {dimension_semantics = [#tpu.dimension_semantics<parallel>], iteration_bounds = array<i64: 1>, scalar_prefetch = 0 : i64, scratch_operands = 1 : i64, tpu.core_type = #tpu.core_type<tc>, window_params = [{transform_indices = @transform_0, window_bounds = array<i64: 2, 16, 128>}, {pipeline_mode = #tpu.pipeline_mode<synchronous>, transform_indices = @transform_1, window_bounds = array<i64: 2, 16, 1>}, {pipeline_mode = #tpu.pipeline_mode<synchronous>, transform_indices = @transform_2, window_bounds = array<i64: 2, 16, 1>}, {transform_indices = @transform_3, window_bounds = array<i64: 1, 128>}, {transform_indices = @transform_4, window_bounds = array<i64: 1, 128>}, {transform_indices = @transform_5, window_bounds = array<i64: 9, 128>}, {transform_indices = @transform_6, window_bounds = array<i64: 1, 128>}, {transform_indices = @transform_7, window_bounds = array<i64: 1, 128>}, {transform_indices = @transform_8, window_bounds = array<i64: 1, 128>}, {transform_indices = @transform_9, window_bounds = array<i64: 9, 128>}, {transform_indices = @transform_10, window_bounds = array<i64: 1, 128>}, {transform_indices = @transform_11, window_bounds = array<i64: 1, 128>}, {transform_indices = @transform_12, window_bounds = array<i64: 2, 16, 128>}]} {
    %c0 = arith.constant 0 : index
    %c0_0 = arith.constant 0 : index
    %c0_1 = arith.constant 0 : index
    %0 = vector.load %arg1[%c0, %c0_0, %c0_1] : memref<2x16x128xf32, #tpu.memory_space<vmem>>, vector<2x16x128xf32>
    %c0_2 = arith.constant 0 : index
    %c0_3 = arith.constant 0 : index
    %c0_4 = arith.constant 0 : index
    %1 = vector.load %arg2[%c0_2, %c0_3, %c0_4] : memref<2x16x1xf32, #tpu.memory_space<vmem>>, vector<2x16x1xf32>
    %2 = vector.broadcast %1 : vector<2x16x1xf32> to vector<2x16x128xf32>
    %3 = arith.subf %0, %2 : vector<2x16x128xf32>
    %c0_5 = arith.constant 0 : index
    %c0_6 = arith.constant 0 : index
    %c0_7 = arith.constant 0 : index
    %4 = vector.load %arg3[%c0_5, %c0_6, %c0_7] : memref<2x16x1xf32, #tpu.memory_space<vmem>>, vector<2x16x1xf32>
    %5 = vector.broadcast %4 : vector<2x16x1xf32> to vector<2x16x128xf32>
    %6 = arith.mulf %3, %5 : vector<2x16x128xf32>
    %c0_8 = arith.constant 0 : index
    %c0_9 = arith.constant 0 : index
    %7 = vector.load %arg4[%c0_8, %c0_9] : memref<1x128xf32, #tpu.memory_space<vmem>>, vector<1x128xf32>
    %8 = vector.shape_cast %7 : vector<1x128xf32> to vector<1x1x128xf32>
    %9 = vector.broadcast %8 : vector<1x1x128xf32> to vector<2x16x128xf32>
    %10 = arith.mulf %6, %9 : vector<2x16x128xf32>
    %c0_10 = arith.constant 0 : index
    %c0_11 = arith.constant 0 : index
    %11 = vector.load %arg5[%c0_10, %c0_11] : memref<1x128xf32, #tpu.memory_space<vmem>>, vector<1x128xf32>
    %12 = vector.shape_cast %11 : vector<1x128xf32> to vector<1x1x128xf32>
    %13 = vector.broadcast %12 : vector<1x1x128xf32> to vector<2x16x128xf32>
    %14 = arith.addf %10, %13 : vector<2x16x128xf32>
    %15 = tpu.iota {dimensions = array<i32: 0>} : vector<16x128xi32>
    %c4_i32 = arith.constant 4 : i32
    %c0_i32 = arith.constant 0 : i32
    %16 = arith.cmpi eq, %c4_i32, %c0_i32 : i32
    %c1_i32 = arith.constant 1 : i32
    %17 = arith.select %16, %c1_i32, %c4_i32 : i32
    %18 = vector.broadcast %17 : i32 to vector<16x128xi32>
    %19 = arith.remsi %15, %18 : vector<16x128xi32>
    %c0_i32_12 = arith.constant 0 : i32
    %20 = vector.broadcast %c0_i32_12 : i32 to vector<16x128xi32>
    %21 = arith.cmpi ne, %19, %20 : vector<16x128xi32>
    %c0_i32_13 = arith.constant 0 : i32
    %22 = vector.broadcast %c0_i32_13 : i32 to vector<16x128xi32>
    %23 = arith.cmpi slt, %19, %22 : vector<16x128xi32>
    %c0_i32_14 = arith.constant 0 : i32
    %24 = arith.cmpi slt, %17, %c0_i32_14 : i32
    %25 = vector.broadcast %24 : i1 to vector<16x128xi1>
    %26 = vector.broadcast %25 : vector<16x128xi1> to vector<16x128xi1>
    %27 = arith.xori %23, %26 : vector<16x128xi1>
    %28 = arith.andi %27, %21 : vector<16x128xi1>
    %29 = vector.broadcast %17 : i32 to vector<16x128xi32>
    %30 = arith.addi %19, %29 : vector<16x128xi32>
    %31 = arith.select %28, %30, %19 : vector<16x128xi1>, vector<16x128xi32>
    %c0_i32_15 = arith.constant 0 : i32
    %32 = vector.broadcast %c0_i32_15 : i32 to vector<16x128xi32>
    %33 = arith.cmpi ne, %31, %32 : vector<16x128xi32>
    %c3_i32 = arith.constant 3 : i32
    %34 = vector.broadcast %c3_i32 : i32 to vector<16x128xi32>
    %35 = arith.cmpi ne, %31, %34 : vector<16x128xi32>
    %cst = arith.constant 0.000000e+00 : f32
    %36 = vector.broadcast %cst : f32 to vector<2x8x128xf32>
    %c0_16 = arith.constant 0 : index
    %c0_17 = arith.constant 0 : index
    %c0_18 = arith.constant 0 : index
    %37 = vector.load %arg14[%c0_16, %c0_17, %c0_18] : memref<2x29x128xf32, #tpu.memory_space<vmem>>, vector<2x8x128xf32>
    tpu.vector_store %arg14[%c0_16, %c0_17, %c0_18], %36 {strides = array<i32>} : memref<2x29x128xf32, #tpu.memory_space<vmem>>, vector<2x8x128xf32>,
    %cst_19 = arith.constant 0.000000e+00 : f32
    %38 = vector.broadcast %cst_19 : f32 to vector<2x5x128xf32>
    %c0_20 = arith.constant 0 : index
    %c24 = arith.constant 24 : index
    %c0_21 = arith.constant 0 : index
    %39 = vector.load %arg14[%c0_20, %c24, %c0_21] : memref<2x29x128xf32, #tpu.memory_space<vmem>>, vector<2x5x128xf32>
    tpu.vector_store %arg14[%c0_20, %c24, %c0_21], %38 {strides = array<i32>} : memref<2x29x128xf32, #tpu.memory_space<vmem>>, vector<2x5x128xf32>,
    %c0_22 = arith.constant 0 : index
    %c0_23 = arith.constant 0 : index
    %40 = vector.load %arg6[%c0_22, %c0_23] : memref<9x128xf32, #tpu.memory_space<vmem>>, vector<9x128xf32>
    %c0_24 = arith.constant 0 : index
    %c0_25 = arith.constant 0 : index
    %41 = vector.load %arg7[%c0_24, %c0_25] : memref<1x128xf32, #tpu.memory_space<vmem>>, vector<1x128xf32>
    %c0_26 = arith.constant 0 : index
    %c0_27 = arith.constant 0 : index
    %42 = vector.load %arg10[%c0_26, %c0_27] : memref<9x128xf32, #tpu.memory_space<vmem>>, vector<9x128xf32>
    %c0_28 = arith.constant 0 : index
    %c0_29 = arith.constant 0 : index
    %43 = vector.load %arg11[%c0_28, %c0_29] : memref<1x128xf32, #tpu.memory_space<vmem>>, vector<1x128xf32>
    %c0_30 = arith.constant 0 : index
    %c8 = arith.constant 8 : index
    %c0_31 = arith.constant 0 : index
    %44 = vector.load %arg14[%c0_30, %c8, %c0_31] : memref<2x29x128xf32, #tpu.memory_space<vmem>>, vector<2x16x128xf32>
    tpu.vector_store %arg14[%c0_30, %c8, %c0_31], %14 {strides = array<i32>} : memref<2x29x128xf32, #tpu.memory_space<vmem>>, vector<2x16x128xf32>,
    %cst_32 = arith.constant 0.000000e+00 : f32
    %45 = vector.broadcast %cst_32 : f32 to vector<2x16x128xf32>
    %c0_33 = arith.constant 0 : index
    %c3 = arith.constant 3 : index
    %c0_34 = arith.constant 0 : index
    %46 = vector.load %arg14[%c0_33, %c3, %c0_34] : memref<2x29x128xf32, #tpu.memory_space<vmem>>, vector<2x16x128xf32>
    %cst_35 = arith.constant 0.000000e+00 : f32
    %47 = vector.shape_cast %33 : vector<16x128xi1> to vector<1x16x128xi1>
    %48 = vector.broadcast %47 : vector<1x16x128xi1> to vector<2x16x128xi1>
    %49 = vector.broadcast %cst_35 : f32 to vector<2x16x128xf32>
    %50 = arith.select %48, %46, %49 : vector<2x16x128xi1>, vector<2x16x128xf32>
    %51 = vector.extract_strided_slice %40 {offsets = [0, 0], sizes = [1, 128], strides = [1, 1]} : vector<9x128xf32> to vector<1x128xf32>
    %52 = vector.shape_cast %51 : vector<1x128xf32> to vector<128xf32>
    %53 = vector.shape_cast %52 : vector<128xf32> to vector<1x1x128xf32>
    %54 = vector.broadcast %53 : vector<1x1x128xf32> to vector<2x16x128xf32>
    %55 = arith.mulf %50, %54 : vector<2x16x128xf32>
    %56 = arith.addf %45, %55 : vector<2x16x128xf32>
    %c0_36 = arith.constant 0 : index
    %c4 = arith.constant 4 : index
    %c0_37 = arith.constant 0 : index
    %57 = vector.load %arg14[%c0_36, %c4, %c0_37] : memref<2x29x128xf32, #tpu.memory_space<vmem>>, vector<2x16x128xf32>
    %58 = vector.extract_strided_slice %40 {offsets = [1, 0], sizes = [1, 128], strides = [1, 1]} : vector<9x128xf32> to vector<1x128xf32>
    %59 = vector.shape_cast %58 : vector<1x128xf32> to vector<128xf32>
    %60 = vector.shape_cast %59 : vector<128xf32> to vector<1x1x128xf32>
    %61 = vector.broadcast %60 : vector<1x1x128xf32> to vector<2x16x128xf32>
    %62 = arith.mulf %57, %61 : vector<2x16x128xf32>
    %63 = arith.addf %56, %62 : vector<2x16x128xf32>
    %c0_38 = arith.constant 0 : index
    %c5 = arith.constant 5 : index
    %c0_39 = arith.constant 0 : index
    %64 = vector.load %arg14[%c0_38, %c5, %c0_39] : memref<2x29x128xf32, #tpu.memory_space<vmem>>, vector<2x16x128xf32>
    %cst_40 = arith.constant 0.000000e+00 : f32
    %65 = vector.shape_cast %35 : vector<16x128xi1> to vector<1x16x128xi1>
    %66 = vector.broadcast %65 : vector<1x16x128xi1> to vector<2x16x128xi1>
    %67 = vector.broadcast %cst_40 : f32 to vector<2x16x128xf32>
    %68 = arith.select %66, %64, %67 : vector<2x16x128xi1>, vector<2x16x128xf32>
    %69 = vector.extract_strided_slice %40 {offsets = [2, 0], sizes = [1, 128], strides = [1, 1]} : vector<9x128xf32> to vector<1x128xf32>
    %70 = vector.shape_cast %69 : vector<1x128xf32> to vector<128xf32>
    %71 = vector.shape_cast %70 : vector<128xf32> to vector<1x1x128xf32>
    %72 = vector.broadcast %71 : vector<1x1x128xf32> to vector<2x16x128xf32>
    %73 = arith.mulf %68, %72 : vector<2x16x128xf32>
    %74 = arith.addf %63, %73 : vector<2x16x128xf32>
    %c0_41 = arith.constant 0 : index
    %c7 = arith.constant 7 : index
    %c0_42 = arith.constant 0 : index
    %75 = vector.load %arg14[%c0_41, %c7, %c0_42] : memref<2x29x128xf32, #tpu.memory_space<vmem>>, vector<2x16x128xf32>
    %cst_43 = arith.constant 0.000000e+00 : f32
    %76 = vector.shape_cast %33 : vector<16x128xi1> to vector<1x16x128xi1>
    %77 = vector.broadcast %76 : vector<1x16x128xi1> to vector<2x16x128xi1>
    %78 = vector.broadcast %cst_43 : f32 to vector<2x16x128xf32>
    %79 = arith.select %77, %75, %78 : vector<2x16x128xi1>, vector<2x16x128xf32>
    %80 = vector.extract_strided_slice %40 {offsets = [3, 0], sizes = [1, 128], strides = [1, 1]} : vector<9x128xf32> to vector<1x128xf32>
    %81 = vector.shape_cast %80 : vector<1x128xf32> to vector<128xf32>
    %82 = vector.shape_cast %81 : vector<128xf32> to vector<1x1x128xf32>
    %83 = vector.broadcast %82 : vector<1x1x128xf32> to vector<2x16x128xf32>
    %84 = arith.mulf %79, %83 : vector<2x16x128xf32>
    %85 = arith.addf %74, %84 : vector<2x16x128xf32>
    %c0_44 = arith.constant 0 : index
    %c8_45 = arith.constant 8 : index
    %c0_46 = arith.constant 0 : index
    %86 = vector.load %arg14[%c0_44, %c8_45, %c0_46] : memref<2x29x128xf32, #tpu.memory_space<vmem>>, vector<2x16x128xf32>
    %87 = vector.extract_strided_slice %40 {offsets = [4, 0], sizes = [1, 128], strides = [1, 1]} : vector<9x128xf32> to vector<1x128xf32>
    %88 = vector.shape_cast %87 : vector<1x128xf32> to vector<128xf32>
    %89 = vector.shape_cast %88 : vector<128xf32> to vector<1x1x128xf32>
    %90 = vector.broadcast %89 : vector<1x1x128xf32> to vector<2x16x128xf32>
    %91 = arith.mulf %86, %90 : vector<2x16x128xf32>
    %92 = arith.addf %85, %91 : vector<2x16x128xf32>
    %c0_47 = arith.constant 0 : index
    %c9 = arith.constant 9 : index
    %c0_48 = arith.constant 0 : index
    %93 = vector.load %arg14[%c0_47, %c9, %c0_48] : memref<2x29x128xf32, #tpu.memory_space<vmem>>, vector<2x16x128xf32>
    %cst_49 = arith.constant 0.000000e+00 : f32
    %94 = vector.shape_cast %35 : vector<16x128xi1> to vector<1x16x128xi1>
    %95 = vector.broadcast %94 : vector<1x16x128xi1> to vector<2x16x128xi1>
    %96 = vector.broadcast %cst_49 : f32 to vector<2x16x128xf32>
    %97 = arith.select %95, %93, %96 : vector<2x16x128xi1>, vector<2x16x128xf32>
    %98 = vector.extract_strided_slice %40 {offsets = [5, 0], sizes = [1, 128], strides = [1, 1]} : vector<9x128xf32> to vector<1x128xf32>
    %99 = vector.shape_cast %98 : vector<1x128xf32> to vector<128xf32>
    %100 = vector.shape_cast %99 : vector<128xf32> to vector<1x1x128xf32>
    %101 = vector.broadcast %100 : vector<1x1x128xf32> to vector<2x16x128xf32>
    %102 = arith.mulf %97, %101 : vector<2x16x128xf32>
    %103 = arith.addf %92, %102 : vector<2x16x128xf32>
    %c0_50 = arith.constant 0 : index
    %c11 = arith.constant 11 : index
    %c0_51 = arith.constant 0 : index
    %104 = vector.load %arg14[%c0_50, %c11, %c0_51] : memref<2x29x128xf32, #tpu.memory_space<vmem>>, vector<2x16x128xf32>
    %cst_52 = arith.constant 0.000000e+00 : f32
    %105 = vector.shape_cast %33 : vector<16x128xi1> to vector<1x16x128xi1>
    %106 = vector.broadcast %105 : vector<1x16x128xi1> to vector<2x16x128xi1>
    %107 = vector.broadcast %cst_52 : f32 to vector<2x16x128xf32>
    %108 = arith.select %106, %104, %107 : vector<2x16x128xi1>, vector<2x16x128xf32>
    %109 = vector.extract_strided_slice %40 {offsets = [6, 0], sizes = [1, 128], strides = [1, 1]} : vector<9x128xf32> to vector<1x128xf32>
    %110 = vector.shape_cast %109 : vector<1x128xf32> to vector<128xf32>
    %111 = vector.shape_cast %110 : vector<128xf32> to vector<1x1x128xf32>
    %112 = vector.broadcast %111 : vector<1x1x128xf32> to vector<2x16x128xf32>
    %113 = arith.mulf %108, %112 : vector<2x16x128xf32>
    %114 = arith.addf %103, %113 : vector<2x16x128xf32>
    %c0_53 = arith.constant 0 : index
    %c12 = arith.constant 12 : index
    %c0_54 = arith.constant 0 : index
    %115 = vector.load %arg14[%c0_53, %c12, %c0_54] : memref<2x29x128xf32, #tpu.memory_space<vmem>>, vector<2x16x128xf32>
    %116 = vector.extract_strided_slice %40 {offsets = [7, 0], sizes = [1, 128], strides = [1, 1]} : vector<9x128xf32> to vector<1x128xf32>
    %117 = vector.shape_cast %116 : vector<1x128xf32> to vector<128xf32>
    %118 = vector.shape_cast %117 : vector<128xf32> to vector<1x1x128xf32>
    %119 = vector.broadcast %118 : vector<1x1x128xf32> to vector<2x16x128xf32>
    %120 = arith.mulf %115, %119 : vector<2x16x128xf32>
    %121 = arith.addf %114, %120 : vector<2x16x128xf32>
    %c0_55 = arith.constant 0 : index
    %c13 = arith.constant 13 : index
    %c0_56 = arith.constant 0 : index
    %122 = vector.load %arg14[%c0_55, %c13, %c0_56] : memref<2x29x128xf32, #tpu.memory_space<vmem>>, vector<2x16x128xf32>
    %cst_57 = arith.constant 0.000000e+00 : f32
    %123 = vector.shape_cast %35 : vector<16x128xi1> to vector<1x16x128xi1>
    %124 = vector.broadcast %123 : vector<1x16x128xi1> to vector<2x16x128xi1>
    %125 = vector.broadcast %cst_57 : f32 to vector<2x16x128xf32>
    %126 = arith.select %124, %122, %125 : vector<2x16x128xi1>, vector<2x16x128xf32>
    %127 = vector.extract_strided_slice %40 {offsets = [8, 0], sizes = [1, 128], strides = [1, 1]} : vector<9x128xf32> to vector<1x128xf32>
    %128 = vector.shape_cast %127 : vector<1x128xf32> to vector<128xf32>
    %129 = vector.shape_cast %128 : vector<128xf32> to vector<1x1x128xf32>
    %130 = vector.broadcast %129 : vector<1x1x128xf32> to vector<2x16x128xf32>
    %131 = arith.mulf %126, %130 : vector<2x16x128xf32>
    %132 = arith.addf %121, %131 : vector<2x16x128xf32>
    %133 = vector.shape_cast %41 : vector<1x128xf32> to vector<1x1x128xf32>
    %134 = vector.broadcast %133 : vector<1x1x128xf32> to vector<2x16x128xf32>
    %135 = arith.addf %132, %134 : vector<2x16x128xf32>
    %cst_58 = arith.constant 5.000000e-01 : f32
    %136 = vector.broadcast %cst_58 : f32 to vector<2x16x128xf32>
    %137 = arith.mulf %136, %135 : vector<2x16x128xf32>
    %cst_59 = arith.constant 4.471500e-02 : f32
    %138 = vector.broadcast %cst_59 : f32 to vector<2x16x128xf32>
    %139 = arith.mulf %138, %135 : vector<2x16x128xf32>
    %140 = arith.mulf %139, %135 : vector<2x16x128xf32>
    %141 = arith.mulf %140, %135 : vector<2x16x128xf32>
    %142 = arith.addf %135, %141 : vector<2x16x128xf32>
    %cst_60 = arith.constant 0.797884583 : f32
    %143 = vector.broadcast %cst_60 : f32 to vector<2x16x128xf32>
    %144 = arith.mulf %143, %142 : vector<2x16x128xf32>
    %145 = math.tanh %144 : vector<2x16x128xf32>
    %cst_61 = arith.constant 1.000000e+00 : f32
    %146 = vector.broadcast %cst_61 : f32 to vector<2x16x128xf32>
    %147 = arith.addf %146, %145 : vector<2x16x128xf32>
    %148 = arith.mulf %137, %147 : vector<2x16x128xf32>
    %149 = vector.shape_cast %148 : vector<2x16x128xf32> to vector<32x128xf32>
    %cst_62 = arith.constant dense<0.000000e+00> : vector<128xf32>
    %150 = vector.multi_reduction <add>, %149, %cst_62 [0] : vector<32x128xf32> to vector<128xf32>
    %151 = vector.shape_cast %150 : vector<128xf32> to vector<1x128xf32>
    %cst_63 = arith.constant 3.200000e+01 : f32
    %152 = vector.broadcast %cst_63 : f32 to vector<1x128xf32>
    %153 = arith.divf %151, %152 : vector<1x128xf32>
    %154 = vector.broadcast %153 : vector<1x128xf32> to vector<32x128xf32>
    %155 = arith.subf %149, %154 : vector<32x128xf32>
    %156 = arith.mulf %155, %155 : vector<32x128xf32>
    %cst_64 = arith.constant dense<0.000000e+00> : vector<128xf32>
    %157 = vector.multi_reduction <add>, %156, %cst_64 [0] : vector<32x128xf32> to vector<128xf32>
    %158 = vector.shape_cast %157 : vector<128xf32> to vector<1x128xf32>
    %cst_65 = arith.constant 3.200000e+01 : f32
    %159 = vector.broadcast %cst_65 : f32 to vector<1x128xf32>
    %160 = arith.divf %158, %159 : vector<1x128xf32>
    %cst_66 = arith.constant 9.99999974E-6 : f32
    %161 = vector.broadcast %cst_66 : f32 to vector<1x128xf32>
    %162 = arith.addf %160, %161 : vector<1x128xf32>
    %163 = math.rsqrt %162 : vector<1x128xf32>
    %164 = vector.broadcast %163 : vector<1x128xf32> to vector<32x128xf32>
    %165 = arith.mulf %155, %164 : vector<32x128xf32>
    %c0_67 = arith.constant 0 : index
    %c0_68 = arith.constant 0 : index
    %166 = vector.load %arg8[%c0_67, %c0_68] : memref<1x128xf32, #tpu.memory_space<vmem>>, vector<1x128xf32>
    %167 = vector.broadcast %166 : vector<1x128xf32> to vector<32x128xf32>
    %168 = arith.mulf %165, %167 : vector<32x128xf32>
    %c0_69 = arith.constant 0 : index
    %c0_70 = arith.constant 0 : index
    %169 = vector.load %arg9[%c0_69, %c0_70] : memref<1x128xf32, #tpu.memory_space<vmem>>, vector<1x128xf32>
    %170 = vector.broadcast %169 : vector<1x128xf32> to vector<32x128xf32>
    %171 = arith.addf %168, %170 : vector<32x128xf32>
    %172 = vector.shape_cast %171 : vector<32x128xf32> to vector<2x16x128xf32>
    %c0_71 = arith.constant 0 : index
    %c8_72 = arith.constant 8 : index
    %c0_73 = arith.constant 0 : index
    %173 = vector.load %arg14[%c0_71, %c8_72, %c0_73] : memref<2x29x128xf32, #tpu.memory_space<vmem>>, vector<2x16x128xf32>
    tpu.vector_store %arg14[%c0_71, %c8_72, %c0_73], %172 {strides = array<i32>} : memref<2x29x128xf32, #tpu.memory_space<vmem>>, vector<2x16x128xf32>,
    %cst_74 = arith.constant 0.000000e+00 : f32
    %174 = vector.broadcast %cst_74 : f32 to vector<2x16x128xf32>
    %c0_75 = arith.constant 0 : index
    %c3_76 = arith.constant 3 : index
    %c0_77 = arith.constant 0 : index
    %175 = vector.load %arg14[%c0_75, %c3_76, %c0_77] : memref<2x29x128xf32, #tpu.memory_space<vmem>>, vector<2x16x128xf32>
    %cst_78 = arith.constant 0.000000e+00 : f32
    %176 = vector.shape_cast %33 : vector<16x128xi1> to vector<1x16x128xi1>
    %177 = vector.broadcast %176 : vector<1x16x128xi1> to vector<2x16x128xi1>
    %178 = vector.broadcast %cst_78 : f32 to vector<2x16x128xf32>
    %179 = arith.select %177, %175, %178 : vector<2x16x128xi1>, vector<2x16x128xf32>
    %180 = vector.extract_strided_slice %42 {offsets = [0, 0], sizes = [1, 128], strides = [1, 1]} : vector<9x128xf32> to vector<1x128xf32>
    %181 = vector.shape_cast %180 : vector<1x128xf32> to vector<128xf32>
    %182 = vector.shape_cast %181 : vector<128xf32> to vector<1x1x128xf32>
    %183 = vector.broadcast %182 : vector<1x1x128xf32> to vector<2x16x128xf32>
    %184 = arith.mulf %179, %183 : vector<2x16x128xf32>
    %185 = arith.addf %174, %184 : vector<2x16x128xf32>
    %c0_79 = arith.constant 0 : index
    %c4_80 = arith.constant 4 : index
    %c0_81 = arith.constant 0 : index
    %186 = vector.load %arg14[%c0_79, %c4_80, %c0_81] : memref<2x29x128xf32, #tpu.memory_space<vmem>>, vector<2x16x128xf32>
    %187 = vector.extract_strided_slice %42 {offsets = [1, 0], sizes = [1, 128], strides = [1, 1]} : vector<9x128xf32> to vector<1x128xf32>
    %188 = vector.shape_cast %187 : vector<1x128xf32> to vector<128xf32>
    %189 = vector.shape_cast %188 : vector<128xf32> to vector<1x1x128xf32>
    %190 = vector.broadcast %189 : vector<1x1x128xf32> to vector<2x16x128xf32>
    %191 = arith.mulf %186, %190 : vector<2x16x128xf32>
    %192 = arith.addf %185, %191 : vector<2x16x128xf32>
    %c0_82 = arith.constant 0 : index
    %c5_83 = arith.constant 5 : index
    %c0_84 = arith.constant 0 : index
    %193 = vector.load %arg14[%c0_82, %c5_83, %c0_84] : memref<2x29x128xf32, #tpu.memory_space<vmem>>, vector<2x16x128xf32>
    %cst_85 = arith.constant 0.000000e+00 : f32
    %194 = vector.shape_cast %35 : vector<16x128xi1> to vector<1x16x128xi1>
    %195 = vector.broadcast %194 : vector<1x16x128xi1> to vector<2x16x128xi1>
    %196 = vector.broadcast %cst_85 : f32 to vector<2x16x128xf32>
    %197 = arith.select %195, %193, %196 : vector<2x16x128xi1>, vector<2x16x128xf32>
    %198 = vector.extract_strided_slice %42 {offsets = [2, 0], sizes = [1, 128], strides = [1, 1]} : vector<9x128xf32> to vector<1x128xf32>
    %199 = vector.shape_cast %198 : vector<1x128xf32> to vector<128xf32>
    %200 = vector.shape_cast %199 : vector<128xf32> to vector<1x1x128xf32>
    %201 = vector.broadcast %200 : vector<1x1x128xf32> to vector<2x16x128xf32>
    %202 = arith.mulf %197, %201 : vector<2x16x128xf32>
    %203 = arith.addf %192, %202 : vector<2x16x128xf32>
    %c0_86 = arith.constant 0 : index
    %c7_87 = arith.constant 7 : index
    %c0_88 = arith.constant 0 : index
    %204 = vector.load %arg14[%c0_86, %c7_87, %c0_88] : memref<2x29x128xf32, #tpu.memory_space<vmem>>, vector<2x16x128xf32>
    %cst_89 = arith.constant 0.000000e+00 : f32
    %205 = vector.shape_cast %33 : vector<16x128xi1> to vector<1x16x128xi1>
    %206 = vector.broadcast %205 : vector<1x16x128xi1> to vector<2x16x128xi1>
    %207 = vector.broadcast %cst_89 : f32 to vector<2x16x128xf32>
    %208 = arith.select %206, %204, %207 : vector<2x16x128xi1>, vector<2x16x128xf32>
    %209 = vector.extract_strided_slice %42 {offsets = [3, 0], sizes = [1, 128], strides = [1, 1]} : vector<9x128xf32> to vector<1x128xf32>
    %210 = vector.shape_cast %209 : vector<1x128xf32> to vector<128xf32>
    %211 = vector.shape_cast %210 : vector<128xf32> to vector<1x1x128xf32>
    %212 = vector.broadcast %211 : vector<1x1x128xf32> to vector<2x16x128xf32>
    %213 = arith.mulf %208, %212 : vector<2x16x128xf32>
    %214 = arith.addf %203, %213 : vector<2x16x128xf32>
    %c0_90 = arith.constant 0 : index
    %c8_91 = arith.constant 8 : index
    %c0_92 = arith.constant 0 : index
    %215 = vector.load %arg14[%c0_90, %c8_91, %c0_92] : memref<2x29x128xf32, #tpu.memory_space<vmem>>, vector<2x16x128xf32>
    %216 = vector.extract_strided_slice %42 {offsets = [4, 0], sizes = [1, 128], strides = [1, 1]} : vector<9x128xf32> to vector<1x128xf32>
    %217 = vector.shape_cast %216 : vector<1x128xf32> to vector<128xf32>
    %218 = vector.shape_cast %217 : vector<128xf32> to vector<1x1x128xf32>
    %219 = vector.broadcast %218 : vector<1x1x128xf32> to vector<2x16x128xf32>
    %220 = arith.mulf %215, %219 : vector<2x16x128xf32>
    %221 = arith.addf %214, %220 : vector<2x16x128xf32>
    %c0_93 = arith.constant 0 : index
    %c9_94 = arith.constant 9 : index
    %c0_95 = arith.constant 0 : index
    %222 = vector.load %arg14[%c0_93, %c9_94, %c0_95] : memref<2x29x128xf32, #tpu.memory_space<vmem>>, vector<2x16x128xf32>
    %cst_96 = arith.constant 0.000000e+00 : f32
    %223 = vector.shape_cast %35 : vector<16x128xi1> to vector<1x16x128xi1>
    %224 = vector.broadcast %223 : vector<1x16x128xi1> to vector<2x16x128xi1>
    %225 = vector.broadcast %cst_96 : f32 to vector<2x16x128xf32>
    %226 = arith.select %224, %222, %225 : vector<2x16x128xi1>, vector<2x16x128xf32>
    %227 = vector.extract_strided_slice %42 {offsets = [5, 0], sizes = [1, 128], strides = [1, 1]} : vector<9x128xf32> to vector<1x128xf32>
    %228 = vector.shape_cast %227 : vector<1x128xf32> to vector<128xf32>
    %229 = vector.shape_cast %228 : vector<128xf32> to vector<1x1x128xf32>
    %230 = vector.broadcast %229 : vector<1x1x128xf32> to vector<2x16x128xf32>
    %231 = arith.mulf %226, %230 : vector<2x16x128xf32>
    %232 = arith.addf %221, %231 : vector<2x16x128xf32>
    %c0_97 = arith.constant 0 : index
    %c11_98 = arith.constant 11 : index
    %c0_99 = arith.constant 0 : index
    %233 = vector.load %arg14[%c0_97, %c11_98, %c0_99] : memref<2x29x128xf32, #tpu.memory_space<vmem>>, vector<2x16x128xf32>
    %cst_100 = arith.constant 0.000000e+00 : f32
    %234 = vector.shape_cast %33 : vector<16x128xi1> to vector<1x16x128xi1>
    %235 = vector.broadcast %234 : vector<1x16x128xi1> to vector<2x16x128xi1>
    %236 = vector.broadcast %cst_100 : f32 to vector<2x16x128xf32>
    %237 = arith.select %235, %233, %236 : vector<2x16x128xi1>, vector<2x16x128xf32>
    %238 = vector.extract_strided_slice %42 {offsets = [6, 0], sizes = [1, 128], strides = [1, 1]} : vector<9x128xf32> to vector<1x128xf32>
    %239 = vector.shape_cast %238 : vector<1x128xf32> to vector<128xf32>
    %240 = vector.shape_cast %239 : vector<128xf32> to vector<1x1x128xf32>
    %241 = vector.broadcast %240 : vector<1x1x128xf32> to vector<2x16x128xf32>
    %242 = arith.mulf %237, %241 : vector<2x16x128xf32>
    %243 = arith.addf %232, %242 : vector<2x16x128xf32>
    %c0_101 = arith.constant 0 : index
    %c12_102 = arith.constant 12 : index
    %c0_103 = arith.constant 0 : index
    %244 = vector.load %arg14[%c0_101, %c12_102, %c0_103] : memref<2x29x128xf32, #tpu.memory_space<vmem>>, vector<2x16x128xf32>
    %245 = vector.extract_strided_slice %42 {offsets = [7, 0], sizes = [1, 128], strides = [1, 1]} : vector<9x128xf32> to vector<1x128xf32>
    %246 = vector.shape_cast %245 : vector<1x128xf32> to vector<128xf32>
    %247 = vector.shape_cast %246 : vector<128xf32> to vector<1x1x128xf32>
    %248 = vector.broadcast %247 : vector<1x1x128xf32> to vector<2x16x128xf32>
    %249 = arith.mulf %244, %248 : vector<2x16x128xf32>
    %250 = arith.addf %243, %249 : vector<2x16x128xf32>
    %c0_104 = arith.constant 0 : index
    %c13_105 = arith.constant 13 : index
    %c0_106 = arith.constant 0 : index
    %251 = vector.load %arg14[%c0_104, %c13_105, %c0_106] : memref<2x29x128xf32, #tpu.memory_space<vmem>>, vector<2x16x128xf32>
    %cst_107 = arith.constant 0.000000e+00 : f32
    %252 = vector.shape_cast %35 : vector<16x128xi1> to vector<1x16x128xi1>
    %253 = vector.broadcast %252 : vector<1x16x128xi1> to vector<2x16x128xi1>
    %254 = vector.broadcast %cst_107 : f32 to vector<2x16x128xf32>
    %255 = arith.select %253, %251, %254 : vector<2x16x128xi1>, vector<2x16x128xf32>
    %256 = vector.extract_strided_slice %42 {offsets = [8, 0], sizes = [1, 128], strides = [1, 1]} : vector<9x128xf32> to vector<1x128xf32>
    %257 = vector.shape_cast %256 : vector<1x128xf32> to vector<128xf32>
    %258 = vector.shape_cast %257 : vector<128xf32> to vector<1x1x128xf32>
    %259 = vector.broadcast %258 : vector<1x1x128xf32> to vector<2x16x128xf32>
    %260 = arith.mulf %255, %259 : vector<2x16x128xf32>
    %261 = arith.addf %250, %260 : vector<2x16x128xf32>
    %262 = vector.shape_cast %43 : vector<1x128xf32> to vector<1x1x128xf32>
    %263 = vector.broadcast %262 : vector<1x1x128xf32> to vector<2x16x128xf32>
    %264 = arith.addf %261, %263 : vector<2x16x128xf32>
    %c0_108 = arith.constant 0 : index
    %c0_109 = arith.constant 0 : index
    %265 = vector.load %arg12[%c0_108, %c0_109] : memref<1x128xf32, #tpu.memory_space<vmem>>, vector<1x128xf32>
    %266 = vector.shape_cast %265 : vector<1x128xf32> to vector<1x1x128xf32>
    %267 = vector.broadcast %266 : vector<1x1x128xf32> to vector<2x16x128xf32>
    %268 = arith.mulf %267, %264 : vector<2x16x128xf32>
    %269 = arith.addf %0, %268 : vector<2x16x128xf32>
    %c0_110 = arith.constant 0 : index
    %c0_111 = arith.constant 0 : index
    %c0_112 = arith.constant 0 : index
    %270 = vector.load %arg13[%c0_110, %c0_111, %c0_112] : memref<2x16x128xf32, #tpu.memory_space<vmem>>, vector<2x16x128xf32>
    tpu.vector_store %arg13[%c0_110, %c0_111, %c0_112], %269 {strides = array<i32>} : memref<2x16x128xf32, #tpu.memory_space<vmem>>, vector<2x16x128xf32>,
    return
  }
  func.func @transform_0(%arg0: i32) -> (i32, i32, i32) {
    %c0_i32 = arith.constant 0 : i32
    %c0_i32_0 = arith.constant 0 : i32
    %c0_i32_1 = arith.constant 0 : i32
    return %c0_i32, %c0_i32_0, %arg0 : i32, i32, i32
  }
  func.func @transform_1(%arg0: i32) -> (i32, i32, i32) {
    %c0_i32 = arith.constant 0 : i32
    %c0_i32_0 = arith.constant 0 : i32
    %c0_i32_1 = arith.constant 0 : i32
    %c0_i32_2 = arith.constant 0 : i32
    return %c0_i32, %c0_i32_0, %c0_i32_1 : i32, i32, i32
  }
  func.func @transform_2(%arg0: i32) -> (i32, i32, i32) {
    %c0_i32 = arith.constant 0 : i32
    %c0_i32_0 = arith.constant 0 : i32
    %c0_i32_1 = arith.constant 0 : i32
    %c0_i32_2 = arith.constant 0 : i32
    return %c0_i32, %c0_i32_0, %c0_i32_1 : i32, i32, i32
  }
  func.func @transform_3(%arg0: i32) -> (i32, i32) {
    %c0_i32 = arith.constant 0 : i32
    %c0_i32_0 = arith.constant 0 : i32
    return %c0_i32, %arg0 : i32, i32
  }
  func.func @transform_4(%arg0: i32) -> (i32, i32) {
    %c0_i32 = arith.constant 0 : i32
    %c0_i32_0 = arith.constant 0 : i32
    return %c0_i32, %arg0 : i32, i32
  }
  func.func @transform_5(%arg0: i32) -> (i32, i32) {
    %c0_i32 = arith.constant 0 : i32
    %c0_i32_0 = arith.constant 0 : i32
    return %c0_i32, %arg0 : i32, i32
  }
  func.func @transform_6(%arg0: i32) -> (i32, i32) {
    %c0_i32 = arith.constant 0 : i32
    %c0_i32_0 = arith.constant 0 : i32
    return %c0_i32, %arg0 : i32, i32
  }
  func.func @transform_7(%arg0: i32) -> (i32, i32) {
    %c0_i32 = arith.constant 0 : i32
    %c0_i32_0 = arith.constant 0 : i32
    return %c0_i32, %arg0 : i32, i32
  }
  func.func @transform_8(%arg0: i32) -> (i32, i32) {
    %c0_i32 = arith.constant 0 : i32
    %c0_i32_0 = arith.constant 0 : i32
    return %c0_i32, %arg0 : i32, i32
  }
  func.func @transform_9(%arg0: i32) -> (i32, i32) {
    %c0_i32 = arith.constant 0 : i32
    %c0_i32_0 = arith.constant 0 : i32
    return %c0_i32, %arg0 : i32, i32
  }
  func.func @transform_10(%arg0: i32) -> (i32, i32) {
    %c0_i32 = arith.constant 0 : i32
    %c0_i32_0 = arith.constant 0 : i32
    return %c0_i32, %arg0 : i32, i32
  }
  func.func @transform_11(%arg0: i32) -> (i32, i32) {
    %c0_i32 = arith.constant 0 : i32
    %c0_i32_0 = arith.constant 0 : i32
    return %c0_i32, %arg0 : i32, i32
  }
  func.func @transform_12(%arg0: i32) -> (i32, i32, i32) {
    %c0_i32 = arith.constant 0 : i32
    %c0_i32_0 = arith.constant 0 : i32
    %c0_i32_1 = arith.constant 0 : i32
    return %c0_i32, %c0_i32_0, %arg0 : i32, i32, i32
  }
}

</mosaic_0001>

<llo_original>
// kernel: xcit_layer_forward.3
$region0: #{xcit_layer_forward.3}
  #allocation0 [shape = 'u32[]', space=smem, size = 0x4, offset = 0x4, fixed_abs, tag = 'smem constant byte address 0x4 - core index']
  #allocation1 [shape = 'u32[72,128]{1,0:T(1,128)}', space=vmem, size = 0x9000, scoped, tag = 'internal scratch']
  #allocation2 [shape = 'f32[2,29,128]{2,1,0:T(8,128)}', space=vmem, size = 0x8000, scoped, tag = 'scratch operand']
  %s0 = inlined_call_operand.vmem [shape: f32[2,16,128], index: 0, kind: input, shape index: {}]
  %s1 = inlined_call_operand.vmem [shape: f32[2,16,1], index: 1, kind: input, shape index: {}]
  %s2 = inlined_call_operand.vmem [shape: f32[2,16,1], index: 2, kind: input, shape index: {}]
  %s3 = inlined_call_operand.vmem [shape: f32[1,128], index: 3, kind: input, shape index: {}]
  %s4 = inlined_call_operand.vmem [shape: f32[1,128], index: 4, kind: input, shape index: {}]
  %s5 = inlined_call_operand.hbm [shape: f32[9,128], index: 5, kind: input, shape index: {}]
  %s6 = inlined_call_operand.hbm [shape: f32[1,128], index: 6, kind: input, shape index: {}]
  %s7 = inlined_call_operand.hbm [shape: f32[1,128], index: 7, kind: input, shape index: {}]
  %s8 = inlined_call_operand.hbm [shape: f32[1,128], index: 8, kind: input, shape index: {}]
  %s9 = inlined_call_operand.hbm [shape: f32[9,128], index: 9, kind: input, shape index: {}]
  %s10 = inlined_call_operand.hbm [shape: f32[1,128], index: 10, kind: input, shape index: {}]
  %s11 = inlined_call_operand.hbm [shape: f32[1,128], index: 11, kind: input, shape index: {}]
  %s12 = inlined_call_operand.hbm [shape: f32[2,16,128], index: 12, kind: output, shape index: {}]
  %s13 = sld [smem:[#allocation0]]
  $region86: #{xcit_layer_forward.3} parent=0
    _
  %s15 = ssub.s32 1, %s13
  %s16 = scalar_select 0, %s15, %s13
  $region1: #{xcit_layer_forward.3} parent=0
    #allocation3 [shape = 'u8[8192]{0}', space=vmem, size = 0x2000, scoped, tag = 'input window, operand 5, single buffered']
    #allocation4 [shape = 's32[1]{0}', space=sflag, size = 0x4, scoped, tag = 'scoped memory for xcit_layer_forward.3']
    #allocation5 [shape = 's32[1]{0}', space=sflag, size = 0x4, scoped, tag = 'scoped memory for xcit_layer_forward.3']
    #allocation6 [shape = 'u8[512]{0}', space=vmem, size = 0x400, scoped, tag = 'input window, operand 6, single buffered']
    #allocation7 [shape = 's32[1]{0}', space=sflag, size = 0x4, scoped, tag = 'scoped memory for xcit_layer_forward.3']
    #allocation8 [shape = 'u8[512]{0}', space=vmem, size = 0x400, scoped, tag = 'input window, operand 7, single buffered']
    #allocation9 [shape = 'u8[512]{0}', space=vmem, size = 0x400, scoped, tag = 'input window, operand 8, single buffered']
    #allocation10 [shape = 's32[1]{0}', space=sflag, size = 0x4, scoped, tag = 'scoped memory for xcit_layer_forward.3']
    #allocation11 [shape = 'u8[8192]{0}', space=vmem, size = 0x2000, scoped, tag = 'input window, operand 9, single buffered']
    #allocation12 [shape = 'u8[512]{0}', space=vmem, size = 0x400, scoped, tag = 'input window, operand 10, single buffered']
    #allocation13 [shape = 's32[1]{0}', space=sflag, size = 0x4, scoped, tag = 'scoped memory for xcit_layer_forward.3']
    #allocation14 [shape = 'u8[512]{0}', space=vmem, size = 0x400, scoped, tag = 'input window, operand 11, single buffered']
    #allocation15 [shape = 'u8[16384]{0}', space=vmem, size = 0x4000, scoped, tag = 'output window, operand 0, single buffered']
    %17 = vsyncpa [#allocation4], 0
    %18 = vsyncpa [#allocation7], 0
    %19 = vsyncpa [#allocation10], 0
    %20 = vsyncpa [#allocation13], 0
    %21 = vsyncpa [#allocation5], 0
    // Predicated region
    $region2: #{xcit_layer_forward.3} parent=1 // pred_check
      _
    $region3: #{xcit_layer_forward.3} parent=1 // pred_check_branch
      %23 = sbr.rel (0) target = $region5
    $region4: #{xcit_layer_forward.3} parent=1 // pred_region
      _
    $region5: #{xcit_layer_forward.3} parent=1 // pred_fallthru
      _
    // Predicated region
    $region6: #{xcit_layer_forward.3} parent=1 // pred_check
      _
    $region7: #{xcit_layer_forward.3} parent=1 // pred_check_branch
      %25 = sbr.rel (0) target = $region9
    $region8: #{xcit_layer_forward.3} parent=1 // pred_region
      _
    $region9: #{xcit_layer_forward.3} parent=1 // pred_fallthru
      _
    // Predicated region
    $region10: #{xcit_layer_forward.3} parent=1 // pred_check
      _
    $region11: #{xcit_layer_forward.3} parent=1 // pred_check_branch
      %27 = sbr.rel (0) target = $region13
    $region12: #{xcit_layer_forward.3} parent=1 // pred_region
      _
    $region13: #{xcit_layer_forward.3} parent=1 // pred_fallthru
      _
    // Predicated region
    $region14: #{xcit_layer_forward.3} parent=1 // pred_check
      _
    $region15: #{xcit_layer_forward.3} parent=1 // pred_check_branch
      %29 = sbr.rel (0) target = $region17
    $region16: #{xcit_layer_forward.3} parent=1 // pred_region
      _
    $region17: #{xcit_layer_forward.3} parent=1 // pred_fallthru
      _
    // Predicated region
    $region18: #{xcit_layer_forward.3} parent=1 // pred_check
      _
    $region19: #{xcit_layer_forward.3} parent=1 // pred_check_branch
      %31 = sbr.rel (0) target = $region21
    $region20: #{xcit_layer_forward.3} parent=1 // pred_region
      _
    $region21: #{xcit_layer_forward.3} parent=1 // pred_fallthru
      _
    // Predicated region
    $region22: #{xcit_layer_forward.3} parent=1 // pred_check
      _
    $region23: #{xcit_layer_forward.3} parent=1 // pred_check_branch
      %33 = sbr.rel (0) target = $region25
    $region24: #{xcit_layer_forward.3} parent=1 // pred_region
      %35 = vsyncadd [#allocation4], 0
      %s36 = sshll.u32 %s5, 4
      %s37 = int_to_ptr.hbm [resolvable:$true] %s36
      %s38 = sshll.u32 [#allocation3], 4
      %s39 = int_to_ptr.vmem [resolvable:$true] %s38
      %44 = dma.hbm_to_vmem [thread:$0]  %s37, 256, %s39, [#allocation4], 128, 128, 8
    $region25: #{xcit_layer_forward.3} parent=1 // pred_fallthru
      _
    // Predicated region
    $region26: #{xcit_layer_forward.3} parent=1 // pred_check
      _
    $region27: #{xcit_layer_forward.3} parent=1 // pred_check_branch
      %46 = sbr.rel (0) target = $region29
    $region28: #{xcit_layer_forward.3} parent=1 // pred_region
      %48 = vsyncadd [#allocation7], 0
      %s50 = sshll.u32 %s6, 4
      %s51 = int_to_ptr.hbm [resolvable:$true] %s50
      %s52 = sshll.u32 [#allocation6], 4
      %s53 = int_to_ptr.vmem [resolvable:$true] %s52
      %55 = dma.hbm_to_vmem [thread:$0]  %s51, 16, %s53, [#allocation7]
    $region29: #{xcit_layer_forward.3} parent=1 // pred_fallthru
      _
    // Predicated region
    $region30: #{xcit_layer_forward.3} parent=1 // pred_check
      _
    $region31: #{xcit_layer_forward.3} parent=1 // pred_check_branch
      %57 = sbr.rel (0) target = $region33
    $region32: #{xcit_layer_forward.3} parent=1 // pred_region
      %59 = vsyncadd [#allocation7], 0
      %s61 = sshll.u32 %s7, 4
      %s62 = int_to_ptr.hbm [resolvable:$true] %s61
      %s63 = sshll.u32 [#allocation8], 4
      %s64 = int_to_ptr.vmem [resolvable:$true] %s63
      %66 = dma.hbm_to_vmem [thread:$0]  %s62, 16, %s64, [#allocation7]
    $region33: #{xcit_layer_forward.3} parent=1 // pred_fallthru
      _
    // Predicated region
    $region34: #{xcit_layer_forward.3} parent=1 // pred_check
      _
    $region35: #{xcit_layer_forward.3} parent=1 // pred_check_branch
      %68 = sbr.rel (0) target = $region37
    $region36: #{xcit_layer_forward.3} parent=1 // pred_region
      %70 = vsyncadd [#allocation10], 0
      %s72 = sshll.u32 %s8, 4
      %s73 = int_to_ptr.hbm [resolvable:$true] %s72
      %s74 = sshll.u32 [#allocation9], 4
      %s75 = int_to_ptr.vmem [resolvable:$true] %s74
      %77 = dma.hbm_to_vmem [thread:$0]  %s73, 16, %s75, [#allocation10]
    $region37: #{xcit_layer_forward.3} parent=1 // pred_fallthru
      _
    // Predicated region
    $region38: #{xcit_layer_forward.3} parent=1 // pred_check
      _
    $region39: #{xcit_layer_forward.3} parent=1 // pred_check_branch
      %79 = sbr.rel (0) target = $region41
    $region40: #{xcit_layer_forward.3} parent=1 // pred_region
      %81 = vsyncadd [#allocation10], 0
      %s82 = sshll.u32 %s9, 4
      %s83 = int_to_ptr.hbm [resolvable:$true] %s82
      %s84 = sshll.u32 [#allocation11], 4
      %s85 = int_to_ptr.vmem [resolvable:$true] %s84
      %90 = dma.hbm_to_vmem [thread:$0]  %s83, 256, %s85, [#allocation10], 128, 128, 8
    $region41: #{xcit_layer_forward.3} parent=1 // pred_fallthru
      _
    // Predicated region
    $region42: #{xcit_layer_forward.3} parent=1 // pred_check
      _
    $region43: #{xcit_layer_forward.3} parent=1 // pred_check_branch
      %92 = sbr.rel (0) target = $region45
    $region44: #{xcit_layer_forward.3} parent=1 // pred_region
      %94 = vsyncadd [#allocation13], 0
      %s96 = sshll.u32 %s10, 4
      %s97 = int_to_ptr.hbm [resolvable:$true] %s96
      %s98 = sshll.u32 [#allocation12], 4
      %s99 = int_to_ptr.vmem [resolvable:$true] %s98
      %101 = dma.hbm_to_vmem [thread:$0]  %s97, 16, %s99, [#allocation13]
    $region45: #{xcit_layer_forward.3} parent=1 // pred_fallthru
      _
    // Predicated region
    $region46: #{xcit_layer_forward.3} parent=1 // pred_check
      _
    $region47: #{xcit_layer_forward.3} parent=1 // pred_check_branch
      %103 = sbr.rel (0) target = $region49
    $region48: #{xcit_layer_forward.3} parent=1 // pred_region
      %105 = vsyncadd [#allocation13], 0
      %s107 = sshll.u32 %s11, 4
      %s108 = int_to_ptr.hbm [resolvable:$true] %s107
      %s109 = sshll.u32 [#allocation14], 4
      %s110 = int_to_ptr.vmem [resolvable:$true] %s109
      %112 = dma.hbm_to_vmem [thread:$0]  %s108, 16, %s110, [#allocation13]
    $region49: #{xcit_layer_forward.3} parent=1 // pred_fallthru
      _
    // Predicated region
    $region50: #{xcit_layer_forward.3} parent=1 // pred_check
      _
    $region51: #{xcit_layer_forward.3} parent=1 // pred_check_branch
      %114 = sbr.rel (0) target = $region53
    $region52: #{xcit_layer_forward.3} parent=1 // pred_region
      %116 = dma.done [#allocation4], 256
    $region53: #{xcit_layer_forward.3} parent=1 // pred_fallthru
      _
    // Predicated region
    $region54: #{xcit_layer_forward.3} parent=1 // pred_check
      _
    $region55: #{xcit_layer_forward.3} parent=1 // pred_check_branch
      %118 = sbr.rel (0) target = $region57
    $region56: #{xcit_layer_forward.3} parent=1 // pred_region
      %120 = dma.done [#allocation7], 16
    $region57: #{xcit_layer_forward.3} parent=1 // pred_fallthru
      _
    // Predicated region
    $region58: #{xcit_layer_forward.3} parent=1 // pred_check
      _
    $region59: #{xcit_layer_forward.3} parent=1 // pred_check_branch
      %122 = sbr.rel (0) target = $region61
    $region60: #{xcit_layer_forward.3} parent=1 // pred_region
      %124 = dma.done [#allocation7], 16
    $region61: #{xcit_layer_forward.3} parent=1 // pred_fallthru
      _
    // Predicated region
    $region62: #{xcit_layer_forward.3} parent=1 // pred_check
      _
    $region63: #{xcit_layer_forward.3} parent=1 // pred_check_branch
      %126 = sbr.rel (0) target = $region65
    $region64: #{xcit_layer_forward.3} parent=1 // pred_region
      %128 = dma.done [#allocation10], 16
    $region65: #{xcit_layer_forward.3} parent=1 // pred_fallthru
      _
    // Predicated region
    $region66: #{xcit_layer_forward.3} parent=1 // pred_check
      _
    $region67: #{xcit_layer_forward.3} parent=1 // pred_check_branch
      %130 = sbr.rel (0) target = $region69
    $region68: #{xcit_layer_forward.3} parent=1 // pred_region
      %132 = dma.done [#allocation10], 256
    $region69: #{xcit_layer_forward.3} parent=1 // pred_fallthru
      _
    // Predicated region
    $region70: #{xcit_layer_forward.3} parent=1 // pred_check
      _
    $region71: #{xcit_layer_forward.3} parent=1 // pred_check_branch
      %134 = sbr.rel (0) target = $region73
    $region72: #{xcit_layer_forward.3} parent=1 // pred_region
      %136 = dma.done [#allocation13], 16
    $region73: #{xcit_layer_forward.3} parent=1 // pred_fallthru
      _
    // Predicated region
    $region74: #{xcit_layer_forward.3} parent=1 // pred_check
      _
    $region75: #{xcit_layer_forward.3} parent=1 // pred_check_branch
      %138 = sbr.rel (0) target = $region77
    $region76: #{xcit_layer_forward.3} parent=1 // pred_region
      %140 = dma.done [#allocation13], 16
    $region77: #{xcit_layer_forward.3} parent=1 // pred_fallthru
      _
    %v141 = vld [vmem:[%s0] sm:$0xff]
    %v142 = vld [vmem:[%s0 + $0x8] sm:$0xff]
    %v143 = vld [vmem:[%s0 + $0x10] sm:$0xff]
    %v144 = vld [vmem:[%s0 + $0x18] sm:$0xff]
    %v145 = vld [vmem:[%s1] sm:$0xff]
    %v146 = vld [vmem:[%s1 + $0x8] sm:$0xff]
    %v147 = vld [vmem:[%s1 + $0x10] sm:$0xff]
    %v148 = vld [vmem:[%s1 + $0x18] sm:$0xff]
    %150 = vset.pattern.permute.xlu0 0
    %151 = vperm.xlu0 %150, %v145
    %v152 = vpop.permute.xlu0 %151
    %155 = vset.pattern.permute.xlu0 0
    %156 = vperm.xlu0 %155, %v146
    %v157 = vpop.permute.xlu0 %156
    %160 = vset.pattern.permute.xlu0 0
    %161 = vperm.xlu0 %160, %v147
    %v162 = vpop.permute.xlu0 %161
    %165 = vset.pattern.permute.xlu0 0
    %166 = vperm.xlu0 %165, %v148
    %v167 = vpop.permute.xlu0 %166
    %v169 = vsub.f32 %v141, %v152
    %v170 = vsub.f32 %v142, %v157
    %v171 = vsub.f32 %v143, %v162
    %v172 = vsub.f32 %v144, %v167
    %v173 = vld [vmem:[%s2] sm:$0xff]
    %v174 = vld [vmem:[%s2 + $0x8] sm:$0xff]
    %v175 = vld [vmem:[%s2 + $0x10] sm:$0xff]
    %v176 = vld [vmem:[%s2 + $0x18] sm:$0xff]
    %178 = vset.pattern.permute.xlu0 0
    %179 = vperm.xlu0 %178, %v173
    %v180 = vpop.permute.xlu0 %179
    %183 = vset.pattern.permute.xlu0 0
    %184 = vperm.xlu0 %183, %v174
    %v185 = vpop.permute.xlu0 %184
    %188 = vset.pattern.permute.xlu0 0
    %189 = vperm.xlu0 %188, %v175
    %v190 = vpop.permute.xlu0 %189
    %193 = vset.pattern.permute.xlu0 0
    %194 = vperm.xlu0 %193, %v176
    %v195 = vpop.permute.xlu0 %194
    %v197 = vmul.f32 %v169, %v180
    %v198 = vmul.f32 %v170, %v185
    %v199 = vmul.f32 %v171, %v190
    %v200 = vmul.f32 %v172, %v195
    %v201 = vld [vmem:[%s3] sm:$0x1]
    %v203 = vperm.slane %v201, 0
    %v205 = vmul.f32 %v197, %v203
    %v206 = vmul.f32 %v198, %v203
    %v207 = vmul.f32 %v199, %v203
    %v208 = vmul.f32 %v200, %v203
    %v209 = vld [vmem:[%s4] sm:$0x1]
    %v211 = vperm.slane %v209, 0
    %v213 = vadd.f32 %v205, %v211
    %v214 = vadd.f32 %v206, %v211
    %v215 = vadd.f32 %v207, %v211
    %v216 = vadd.f32 %v208, %v211
    %v217 = vlaneseq
    %v218 = vshrl.u32 %v217, 7
    %v219 = vadd.s32 %v218, 8
    %vm220 = vcmp.lt.s32.totalorder %v218, 0
    %v221 = vsub.s32 0, %v218
    %v222 = vsel %vm220, %v221, %v218
    %v223 = vshrl.u32 %v222, 2
    %v224 = vand.u32 %v222, 3
    %v225 = vsub.s32 0, %v224
    %v226 = vsel %vm220, %v225, %v224
    %vm227 = vcmp.lt.s32.totalorder %v219, 0
    %v228 = vsub.s32 0, %v219
    %v229 = vsel %vm227, %v228, %v219
    %v230 = vshrl.u32 %v229, 2
    %v231 = vand.u32 %v229, 3
    %v232 = vsub.s32 0, %v231
    %v233 = vsel %vm227, %v232, %v231
    %vm234 = vcmp.ne.s32.totalorder %v226, 0
    %vm235 = vcmp.ne.s32.totalorder %v233, 0
    %vm236 = vcmp.lt.s32.totalorder %v226, 0
    %vm237 = vcmp.lt.s32.totalorder %v233, 0
    %vm238 = vmand %vm236, %vm234
    %vm239 = vmand %vm237, %vm235
    %v240 = vadd.s32 %v226, 4
    %v241 = vadd.s32 %v233, 4
    %v242 = vsel %vm238, %v240, %v226
    %v243 = vsel %vm239, %v241, %v233
    %vm244 = vcmp.ne.s32.totalorder %v242, 0
    %vm245 = vcmp.ne.s32.totalorder %v243, 0
    %vm246 = vcmp.ne.s32.totalorder %v242, 3
    %vm247 = vcmp.ne.s32.totalorder %v243, 3
    %248 = vst [vmem:[#allocation2] sm:$0xff] 0.0
    %249 = vst [vmem:[#allocation2 + $0x20] sm:$0xff] 0.0
    %250 = vst [vmem:[#allocation2 + $0x18] sm:$0x1f] 0.0
    %251 = vst [vmem:[#allocation2 + $0x38] sm:$0x1f] 0.0
    %v252 = vld [vmem:[#allocation3] sm:$0xff]
    %v253 = vld [vmem:[#allocation3 + $0x8] sm:$0x1]
    %v254 = vld [vmem:[#allocation6] sm:$0x1]
    %v255 = vld [vmem:[#allocation11] sm:$0xff]
    %v256 = vld [vmem:[#allocation11 + $0x8] sm:$0x1]
    %v257 = vld [vmem:[#allocation12] sm:$0x1]
    %258 = vst [vmem:[#allocation2 + $0x8] sm:$0xff] %v213
    %259 = vst [vmem:[#allocation2 + $0x10] sm:$0xff] %v214
    %260 = vst [vmem:[#allocation2 + $0x28] sm:$0xff] %v215
    %261 = vst [vmem:[#allocation2 + $0x30] sm:$0xff] %v216
    %v262 = vld [vmem:[#allocation2 + $0x3] sm:$0xff]
    %v263 = vld [vmem:[#allocation2 + $0xb] sm:$0xff]
    %v264 = vld [vmem:[#allocation2 + $0x23] sm:$0xff]
    %v265 = vld [vmem:[#allocation2 + $0x2b] sm:$0xff]
    %v266 = vsel %vm244, 1, 0
    %v267 = vsel %vm245, 1, 0
    %vm268 = vcmp.eq.s32.totalorder %v266, 1
    %vm269 = vcmp.eq.s32.totalorder %v267, 1
    %v270 = vsel %vm268, %v262, 0.0
    %v271 = vsel %vm269, %v263, 0.0
    %v272 = vsel %vm268, %v264, 0.0
    %v273 = vsel %vm269, %v265, 0.0
    %v274 = vperm.slane %v252, 0
    %v275 = vmul.f32 %v270, %v274
    %v276 = vmul.f32 %v271, %v274
    %v277 = vmul.f32 %v272, %v274
    %v278 = vmul.f32 %v273, %v274
    %v279 = vadd.f32 %v275, 0.0
    %v280 = vadd.f32 %v276, 0.0
    %v281 = vadd.f32 %v277, 0.0
    %v282 = vadd.f32 %v278, 0.0
    %v283 = vld [vmem:[#allocation2 + $0x4] sm:$0xff]
    %v284 = vld [vmem:[#allocation2 + $0xc] sm:$0xff]
    %v285 = vld [vmem:[#allocation2 + $0x24] sm:$0xff]
    %v286 = vld [vmem:[#allocation2 + $0x2c] sm:$0xff]
    %v287 = vperm.slane %v252, 1
    %v288 = vmul.f32 %v283, %v287
    %v289 = vmul.f32 %v284, %v287
    %v290 = vmul.f32 %v285, %v287
    %v291 = vmul.f32 %v286, %v287
    %v292 = vadd.f32 %v279, %v288
    %v293 = vadd.f32 %v280, %v289
    %v294 = vadd.f32 %v281, %v290
    %v295 = vadd.f32 %v282, %v291
    %v296 = vld [vmem:[#allocation2 + $0x5] sm:$0xff]
    %v297 = vld [vmem:[#allocation2 + $0xd] sm:$0xff]
    %v298 = vld [vmem:[#allocation2 + $0x25] sm:$0xff]
    %v299 = vld [vmem:[#allocation2 + $0x2d] sm:$0xff]
    %v300 = vsel %vm246, 1, 0
    %v301 = vsel %vm247, 1, 0
    %vm302 = vcmp.eq.s32.totalorder %v300, 1
    %vm303 = vcmp.eq.s32.totalorder %v301, 1
    %v304 = vsel %vm302, %v296, 0.0
    %v305 = vsel %vm303, %v297, 0.0
    %v306 = vsel %vm302, %v298, 0.0
    %v307 = vsel %vm303, %v299, 0.0
    %v308 = vperm.slane %v252, 2
    %v309 = vmul.f32 %v304, %v308
    %v310 = vmul.f32 %v305, %v308
    %v311 = vmul.f32 %v306, %v308
    %v312 = vmul.f32 %v307, %v308
    %v313 = vadd.f32 %v292, %v309
    %v314 = vadd.f32 %v293, %v310
    %v315 = vadd.f32 %v294, %v311
    %v316 = vadd.f32 %v295, %v312
    %v317 = vld [vmem:[#allocation2 + $0x7] sm:$0xff]
    %v318 = vld [vmem:[#allocation2 + $0xf] sm:$0xff]
    %v319 = vld [vmem:[#allocation2 + $0x27] sm:$0xff]
    %v320 = vld [vmem:[#allocation2 + $0x2f] sm:$0xff]
    %v321 = vsel %vm268, %v317, 0.0
    %v322 = vsel %vm269, %v318, 0.0
    %v323 = vsel %vm268, %v319, 0.0
    %v324 = vsel %vm269, %v320, 0.0
    %v325 = vperm.slane %v252, 3
    %v326 = vmul.f32 %v321, %v325
    %v327 = vmul.f32 %v322, %v325
    %v328 = vmul.f32 %v323, %v325
    %v329 = vmul.f32 %v324, %v325
    %v330 = vadd.f32 %v313, %v326
    %v331 = vadd.f32 %v314, %v327
    %v332 = vadd.f32 %v315, %v328
    %v333 = vadd.f32 %v316, %v329
    %v334 = vld [vmem:[#allocation2 + $0x8] sm:$0xff]
    %v335 = vld [vmem:[#allocation2 + $0x10] sm:$0xff]
    %v336 = vld [vmem:[#allocation2 + $0x28] sm:$0xff]
    %v337 = vld [vmem:[#allocation2 + $0x30] sm:$0xff]
    %v338 = vperm.slane %v252, 4
    %v339 = vmul.f32 %v334, %v338
    %v340 = vmul.f32 %v335, %v338
    %v341 = vmul.f32 %v336, %v338
    %v342 = vmul.f32 %v337, %v338
    %v343 = vadd.f32 %v330, %v339
    %v344 = vadd.f32 %v331, %v340
    %v345 = vadd.f32 %v332, %v341
    %v346 = vadd.f32 %v333, %v342
    %v347 = vld [vmem:[#allocation2 + $0x9] sm:$0xff]
    %v348 = vld [vmem:[#allocation2 + $0x11] sm:$0xff]
    %v349 = vld [vmem:[#allocation2 + $0x29] sm:$0xff]
    %v350 = vld [vmem:[#allocation2 + $0x31] sm:$0xff]
    %v351 = vsel %vm302, %v347, 0.0
    %v352 = vsel %vm303, %v348, 0.0
    %v353 = vsel %vm302, %v349, 0.0
    %v354 = vsel %vm303, %v350, 0.0
    %v355 = vperm.slane %v252, 5
    %v356 = vmul.f32 %v351, %v355
    %v357 = vmul.f32 %v352, %v355
    %v358 = vmul.f32 %v353, %v355
    %v359 = vmul.f32 %v354, %v355
    %v360 = vadd.f32 %v343, %v356
    %v361 = vadd.f32 %v344, %v357
    %v362 = vadd.f32 %v345, %v358
    %v363 = vadd.f32 %v346, %v359
    %v364 = vld [vmem:[#allocation2 + $0x13] sm:$0xff]
    %v365 = vld [vmem:[#allocation2 + $0x33] sm:$0xff]
    %v366 = vsel %vm268, %v263, 0.0
    %v367 = vsel %vm269, %v364, 0.0
    %v368 = vsel %vm268, %v265, 0.0
    %v369 = vsel %vm269, %v365, 0.0
    %v370 = vperm.slane %v252, 6
    %v371 = vmul.f32 %v366, %v370
    %v372 = vmul.f32 %v367, %v370
    %v373 = vmul.f32 %v368, %v370
    %v374 = vmul.f32 %v369, %v370
    %v375 = vadd.f32 %v360, %v371
    %v376 = vadd.f32 %v361, %v372
    %v377 = vadd.f32 %v362, %v373
    %v378 = vadd.f32 %v363, %v374
    %v379 = vld [vmem:[#allocation2 + $0x14] sm:$0xff]
    %v380 = vld [vmem:[#allocation2 + $0x34] sm:$0xff]
    %v381 = vperm.slane %v252, 7
    %v382 = vmul.f32 %v284, %v381
    %v383 = vmul.f32 %v379, %v381
    %v384 = vmul.f32 %v286, %v381
    %v385 = vmul.f32 %v380, %v381
    %v386 = vadd.f32 %v375, %v382
    %v387 = vadd.f32 %v376, %v383
    %v388 = vadd.f32 %v377, %v384
    %v389 = vadd.f32 %v378, %v385
    %v390 = vld [vmem:[#allocation2 + $0xd] sm:$0xff]
    %v391 = vld [vmem:[#allocation2 + $0x15] sm:$0xff]
    %v392 = vld [vmem:[#allocation2 + $0x2d] sm:$0xff]
    %v393 = vld [vmem:[#allocation2 + $0x35] sm:$0xff]
    %v394 = vsel %vm302, %v390, 0.0
    %v395 = vsel %vm303, %v391, 0.0
    %v396 = vsel %vm302, %v392, 0.0
    %v397 = vsel %vm303, %v393, 0.0
    %v398 = vperm.slane %v253, 0
    %v399 = vmul.f32 %v394, %v398
    %v400 = vmul.f32 %v395, %v398
    %v401 = vmul.f32 %v396, %v398
    %v402 = vmul.f32 %v397, %v398
    %v403 = vadd.f32 %v386, %v399
    %v404 = vadd.f32 %v387, %v400
    %v405 = vadd.f32 %v388, %v401
    %v406 = vadd.f32 %v389, %v402
    %v408 = vperm.slane %v254, 0
    %v410 = vadd.f32 %v403, %v408
    %v411 = vadd.f32 %v404, %v408
    %v412 = vadd.f32 %v405, %v408
    %v413 = vadd.f32 %v406, %v408
    %v414 = vmul.f32 %v410, 0.5
    %v415 = vmul.f32 %v411, 0.5
    %v416 = vmul.f32 %v412, 0.5
    %v417 = vmul.f32 %v413, 0.5
    %v418 = vmul.f32 %v410, 0.044715
    %v419 = vmul.f32 %v411, 0.044715
    %v420 = vmul.f32 %v412, 0.044715
    %v421 = vmul.f32 %v413, 0.044715
    %v422 = vmul.f32 %v418, %v410
    %v423 = vmul.f32 %v419, %v411
    %v424 = vmul.f32 %v420, %v412
    %v425 = vmul.f32 %v421, %v413
    %v426 = vmul.f32 %v422, %v410
    %v427 = vmul.f32 %v423, %v411
    %v428 = vmul.f32 %v424, %v412
    %v429 = vmul.f32 %v425, %v413
    %v430 = vadd.f32 %v410, %v426
    %v431 = vadd.f32 %v411, %v427
    %v432 = vadd.f32 %v412, %v428
    %v433 = vadd.f32 %v413, %v429
    %v434 = vmul.f32 %v430, 0.7978846
    %v435 = vmul.f32 %v431, 0.7978846
    %v436 = vmul.f32 %v432, 0.7978846
    %v437 = vmul.f32 %v433, 0.7978846
    %v438 = vtanh.pop %v434
    %v439 = vtanh.pop %v435
    %v440 = vtanh.pop %v436
    %v441 = vtanh.pop %v437
    %v442 = vadd.f32 %v438, 1.0
    %v443 = vadd.f32 %v439, 1.0
    %v444 = vadd.f32 %v440, 1.0
    %v445 = vadd.f32 %v441, 1.0
    %v446 = vmul.f32 %v414, %v442
    %v447 = vmul.f32 %v415, %v443
    %v448 = vmul.f32 %v416, %v444
    %v449 = vmul.f32 %v417, %v445
    %v450 = vadd.f32 %v446, %v447
    %v451 = vadd.f32 %v450, %v448
    %v452 = vadd.f32 %v451, %v449
    %v453 = vrot.slane %v452, 4
    %v454 = vadd.f32 %v452, %v453
    %v455 = vrot.slane %v454, 2
    %v456 = vadd.f32 %v454, %v455
    %v457 = vrot.slane %v456, 1
    %v458 = vadd.f32 %v456, %v457
    %v459 = vrcp.pop 32.0
    %v460 = vmul.f32 32.0, %v459
    %v461 = vsub.f32 1.0, %v460
    %v462 = vmul.f32 %v459, %v461
    %v463 = vadd.f32 %v459, %v462
    %vm464 = vweird.f32 %v459
    %v465 = vsel %vm464, %v459, %v463
    %v466 = vmul.f32 %v458, %v465
    %v467 = vsub.f32 %v446, %v466
    %v468 = vsub.f32 %v447, %v466
    %v469 = vsub.f32 %v448, %v466
    %v470 = vsub.f32 %v449, %v466
    %v471 = vmul.f32 %v467, %v467
    %v472 = vmul.f32 %v468, %v468
    %v473 = vmul.f32 %v469, %v469
    %v474 = vmul.f32 %v470, %v470
    %v475 = vadd.f32 %v471, %v472
    %v476 = vadd.f32 %v475, %v473
    %v477 = vadd.f32 %v476, %v474
    %v478 = vrot.slane %v477, 4
    %v479 = vadd.f32 %v477, %v478
    %v480 = vrot.slane %v479, 2
    %v481 = vadd.f32 %v479, %v480
    %v482 = vrot.slane %v481, 1
    %v483 = vadd.f32 %v481, %v482
    %v484 = vmul.f32 %v483, %v465
    %v485 = vadd.f32 %v484, 1e-05
    %v486 = vrsqrt.pop %v485
    %v487 = vmul.f32 %v486, %v485
    %v488 = vmul.f32 %v487, %v486
    %v489 = vmul.f32 0.5, %v488
    %v490 = vsub.f32 1.5, %v489
    %v491 = vmul.f32 %v486, %v490
    %vm492 = vweird.f32 %v485
    %vm493 = vweird.f32 %v486
    %vm494 = vmor %vm492, %vm493
    %v495 = vsel %vm494, %v486, %v491
    %v496 = vmul.f32 %v467, %v495
    %v497 = vmul.f32 %v468, %v495
    %v498 = vmul.f32 %v469, %v495
    %v499 = vmul.f32 %v470, %v495
    %v500 = vld [vmem:[#allocation8] sm:$0x1]
    %v502 = vperm.slane %v500, 0
    %v504 = vmul.f32 %v496, %v502
    %v505 = vmul.f32 %v497, %v502
    %v506 = vmul.f32 %v498, %v502
    %v507 = vmul.f32 %v499, %v502
    %v508 = vld [vmem:[#allocation9] sm:$0x1]
    %v510 = vperm.slane %v508, 0
    %v512 = vadd.f32 %v504, %v510
    %v513 = vadd.f32 %v505, %v510
    %v514 = vadd.f32 %v506, %v510
    %v515 = vadd.f32 %v507, %v510
    %516 = vst [vmem:[#allocation2 + $0x8] sm:$0xff] %v512
    %517 = vst [vmem:[#allocation2 + $0x10] sm:$0xff] %v513
    %518 = vst [vmem:[#allocation2 + $0x28] sm:$0xff] %v514
    %519 = vst [vmem:[#allocation2 + $0x30] sm:$0xff] %v515
    %v520 = vld [vmem:[#allocation2 + $0x3] sm:$0xff]
    %v521 = vld [vmem:[#allocation2 + $0xb] sm:$0xff]
    %v522 = vld [vmem:[#allocation2 + $0x23] sm:$0xff]
    %v523 = vld [vmem:[#allocation2 + $0x2b] sm:$0xff]
    %v524 = vsel %vm268, %v520, 0.0
    %v525 = vsel %vm269, %v521, 0.0
    %v526 = vsel %vm268, %v522, 0.0
    %v527 = vsel %vm269, %v523, 0.0
    %v528 = vperm.slane %v255, 0
    %v529 = vmul.f32 %v524, %v528
    %v530 = vmul.f32 %v525, %v528
    %v531 = vmul.f32 %v526, %v528
    %v532 = vmul.f32 %v527, %v528
    %v533 = vadd.f32 %v529, 0.0
    %v534 = vadd.f32 %v530, 0.0
    %v535 = vadd.f32 %v531, 0.0
    %v536 = vadd.f32 %v532, 0.0
    %v537 = vld [vmem:[#allocation2 + $0x4] sm:$0xff]
    %v538 = vld [vmem:[#allocation2 + $0xc] sm:$0xff]
    %v539 = vld [vmem:[#allocation2 + $0x24] sm:$0xff]
    %v540 = vld [vmem:[#allocation2 + $0x2c] sm:$0xff]
    %v541 = vperm.slane %v255, 1
    %v542 = vmul.f32 %v537, %v541
    %v543 = vmul.f32 %v538, %v541
    %v544 = vmul.f32 %v539, %v541
    %v545 = vmul.f32 %v540, %v541
    %v546 = vadd.f32 %v533, %v542
    %v547 = vadd.f32 %v534, %v543
    %v548 = vadd.f32 %v535, %v544
    %v549 = vadd.f32 %v536, %v545
    %v550 = vld [vmem:[#allocation2 + $0x5] sm:$0xff]
    %v551 = vld [vmem:[#allocation2 + $0xd] sm:$0xff]
    %v552 = vld [vmem:[#allocation2 + $0x25] sm:$0xff]
    %v553 = vld [vmem:[#allocation2 + $0x2d] sm:$0xff]
    %v554 = vsel %vm302, %v550, 0.0
    %v555 = vsel %vm303, %v551, 0.0
    %v556 = vsel %vm302, %v552, 0.0
    %v557 = vsel %vm303, %v553, 0.0
    %v558 = vperm.slane %v255, 2
    %v559 = vmul.f32 %v554, %v558
    %v560 = vmul.f32 %v555, %v558
    %v561 = vmul.f32 %v556, %v558
    %v562 = vmul.f32 %v557, %v558
    %v563 = vadd.f32 %v546, %v559
    %v564 = vadd.f32 %v547, %v560
    %v565 = vadd.f32 %v548, %v561
    %v566 = vadd.f32 %v549, %v562
    %v567 = vld [vmem:[#allocation2 + $0x7] sm:$0xff]
    %v568 = vld [vmem:[#allocation2 + $0xf] sm:$0xff]
    %v569 = vld [vmem:[#allocation2 + $0x27] sm:$0xff]
    %v570 = vld [vmem:[#allocation2 + $0x2f] sm:$0xff]
    %v571 = vsel %vm268, %v567, 0.0
    %v572 = vsel %vm269, %v568, 0.0
    %v573 = vsel %vm268, %v569, 0.0
    %v574 = vsel %vm269, %v570, 0.0
    %v575 = vperm.slane %v255, 3
    %v576 = vmul.f32 %v571, %v575
    %v577 = vmul.f32 %v572, %v575
    %v578 = vmul.f32 %v573, %v575
    %v579 = vmul.f32 %v574, %v575
    %v580 = vadd.f32 %v563, %v576
    %v581 = vadd.f32 %v564, %v577
    %v582 = vadd.f32 %v565, %v578
    %v583 = vadd.f32 %v566, %v579
    %v584 = vld [vmem:[#allocation2 + $0x8] sm:$0xff]
    %v585 = vld [vmem:[#allocation2 + $0x10] sm:$0xff]
    %v586 = vld [vmem:[#allocation2 + $0x28] sm:$0xff]
    %v587 = vld [vmem:[#allocation2 + $0x30] sm:$0xff]
    %v588 = vperm.slane %v255, 4
    %v589 = vmul.f32 %v584, %v588
    %v590 = vmul.f32 %v585, %v588
    %v591 = vmul.f32 %v586, %v588
    %v592 = vmul.f32 %v587, %v588
    %v593 = vadd.f32 %v580, %v589
    %v594 = vadd.f32 %v581, %v590
    %v595 = vadd.f32 %v582, %v591
    %v596 = vadd.f32 %v583, %v592
    %v597 = vld [vmem:[#allocation2 + $0x9] sm:$0xff]
    %v598 = vld [vmem:[#allocation2 + $0x11] sm:$0xff]
    %v599 = vld [vmem:[#allocation2 + $0x29] sm:$0xff]
    %v600 = vld [vmem:[#allocation2 + $0x31] sm:$0xff]
    %v601 = vsel %vm302, %v597, 0.0
    %v602 = vsel %vm303, %v598, 0.0
    %v603 = vsel %vm302, %v599, 0.0
    %v604 = vsel %vm303, %v600, 0.0
    %v605 = vperm.slane %v255, 5
    %v606 = vmul.f32 %v601, %v605
    %v607 = vmul.f32 %v602, %v605
    %v608 = vmul.f32 %v603, %v605
    %v609 = vmul.f32 %v604, %v605
    %v610 = vadd.f32 %v593, %v606
    %v611 = vadd.f32 %v594, %v607
    %v612 = vadd.f32 %v595, %v608
    %v613 = vadd.f32 %v596, %v609
    %v614 = vld [vmem:[#allocation2 + $0x13] sm:$0xff]
    %v615 = vld [vmem:[#allocation2 + $0x33] sm:$0xff]
    %v616 = vsel %vm268, %v521, 0.0
    %v617 = vsel %vm269, %v614, 0.0
    %v618 = vsel %vm268, %v523, 0.0
    %v619 = vsel %vm269, %v615, 0.0
    %v620 = vperm.slane %v255, 6
    %v621 = vmul.f32 %v616, %v620
    %v622 = vmul.f32 %v617, %v620
    %v623 = vmul.f32 %v618, %v620
    %v624 = vmul.f32 %v619, %v620
    %v625 = vadd.f32 %v610, %v621
    %v626 = vadd.f32 %v611, %v622
    %v627 = vadd.f32 %v612, %v623
    %v628 = vadd.f32 %v613, %v624
    %v629 = vld [vmem:[#allocation2 + $0x14] sm:$0xff]
    %v630 = vld [vmem:[#allocation2 + $0x34] sm:$0xff]
    %v631 = vperm.slane %v255, 7
    %v632 = vmul.f32 %v538, %v631
    %v633 = vmul.f32 %v629, %v631
    %v634 = vmul.f32 %v540, %v631
    %v635 = vmul.f32 %v630, %v631
    %v636 = vadd.f32 %v625, %v632
    %v637 = vadd.f32 %v626, %v633
    %v638 = vadd.f32 %v627, %v634
    %v639 = vadd.f32 %v628, %v635
    %v640 = vld [vmem:[#allocation2 + $0xd] sm:$0xff]
    %v641 = vld [vmem:[#allocation2 + $0x15] sm:$0xff]
    %v642 = vld [vmem:[#allocation2 + $0x2d] sm:$0xff]
    %v643 = vld [vmem:[#allocation2 + $0x35] sm:$0xff]
    %v644 = vsel %vm302, %v640, 0.0
    %v645 = vsel %vm303, %v641, 0.0
    %v646 = vsel %vm302, %v642, 0.0
    %v647 = vsel %vm303, %v643, 0.0
    %v648 = vperm.slane %v256, 0
    %v649 = vmul.f32 %v644, %v648
    %v650 = vmul.f32 %v645, %v648
    %v651 = vmul.f32 %v646, %v648
    %v652 = vmul.f32 %v647, %v648
    %v653 = vadd.f32 %v636, %v649
    %v654 = vadd.f32 %v637, %v650
    %v655 = vadd.f32 %v638, %v651
    %v656 = vadd.f32 %v639, %v652
    %v658 = vperm.slane %v257, 0
    %v660 = vadd.f32 %v653, %v658
    %v661 = vadd.f32 %v654, %v658
    %v662 = vadd.f32 %v655, %v658
    %v663 = vadd.f32 %v656, %v658
    %v664 = vld [vmem:[#allocation14] sm:$0x1]
    %v666 = vperm.slane %v664, 0
    %v668 = vmul.f32 %v666, %v660
    %v669 = vmul.f32 %v666, %v661
    %v670 = vmul.f32 %v666, %v662
    %v671 = vmul.f32 %v666, %v663
    %v672 = vadd.f32 %v141, %v668
    %v673 = vadd.f32 %v142, %v669
    %v674 = vadd.f32 %v143, %v670
    %v675 = vadd.f32 %v144, %v671
    %676 = vst [vmem:[#allocation15] sm:$0xff] %v672
    %677 = vst [vmem:[#allocation15 + $0x8] sm:$0xff] %v673
    %678 = vst [vmem:[#allocation15 + $0x10] sm:$0xff] %v674
    %679 = vst [vmem:[#allocation15 + $0x18] sm:$0xff] %v675
    // Predicated region
    $region78: #{xcit_layer_forward.3} parent=1 // pred_check
      _
    $region79: #{xcit_layer_forward.3} parent=1 // pred_check_branch
      %681 = sbr.rel (0) target = $region81
    $region80: #{xcit_layer_forward.3} parent=1 // pred_region
      %683 = vsyncadd [#allocation5], 0
      %s684 = sshll.u32 [#allocation15], 4
      %s685 = int_to_ptr.vmem [resolvable:$true] %s684
      %s686 = sshll.u32 %s12, 4
      %s687 = int_to_ptr.hbm [resolvable:$true] %s686
      %692 = dma.vmem_to_hbm [thread:$0]  %s685, 512, %s687, [#allocation5], 128, 128, 8
    $region81: #{xcit_layer_forward.3} parent=1 // pred_fallthru
      _
    // Predicated region
    $region82: #{xcit_layer_forward.3} parent=1 // pred_check
      _
    $region83: #{xcit_layer_forward.3} parent=1 // pred_check_branch
      %694 = sbr.rel (0) target = $region85
    $region84: #{xcit_layer_forward.3} parent=1 // pred_region
      %696 = dma.done [#allocation5], 512
    $region85: #{xcit_layer_forward.3} parent=1 // pred_fallthru
      _
    %697 = vsyncpa [#allocation4], 1
    %698 = vsyncpa [#allocation7], 1
    %699 = vsyncpa [#allocation10], 1
    %700 = vsyncpa [#allocation13], 1
    %701 = vsyncpa [#allocation5], 1

// kernel: xcit_layer_forward.2
$region0: #{xcit_layer_forward.2}
  #allocation0 [shape = 'u32[]', space=smem, size = 0x4, offset = 0x4, fixed_abs, tag = 'smem constant byte address 0x4 - core index']
  #allocation1 [shape = 'u32[72,128]{1,0:T(1,128)}', space=vmem, size = 0x9000, scoped, tag = 'internal scratch']
  %s0 = inlined_call_operand.vmem [shape: f32[2,16,128], index: 0, kind: input, shape index: {}]
  %s1 = inlined_call_operand.vmem [shape: f32[2,16,1], index: 1, kind: input, shape index: {}]
  %s2 = inlined_call_operand.vmem [shape: f32[2,16,1], index: 2, kind: input, shape index: {}]
  %s3 = inlined_call_operand.vmem [shape: f32[128,128], index: 3, kind: input, shape index: {}]
  %s4 = inlined_call_operand.vmem [shape: f32[1,128], index: 4, kind: input, shape index: {}]
  %s5 = inlined_call_operand.vmem [shape: f32[1,128], index: 5, kind: input, shape index: {}]
  %s6 = inlined_call_operand.hbm [shape: bf16[128,384], index: 6, kind: input, shape index: {}]
  %s7 = inlined_call_operand.vmem [shape: f32[1,128], index: 7, kind: input, shape index: {}]
  %s8 = inlined_call_operand.hbm [shape: bf16[128,128], index: 8, kind: input, shape index: {}]
  %s9 = inlined_call_operand.vmem [shape: f32[1,128], index: 9, kind: input, shape index: {}]
  %s10 = inlined_call_operand.vmem [shape: f32[1,128], index: 10, kind: input, shape index: {}]
  %s11 = inlined_call_operand.vmem [shape: f32[1,128], index: 11, kind: input, shape index: {}]
  %s12 = inlined_call_operand.vmem [shape: f32[1,128], index: 12, kind: input, shape index: {}]
  %s13 = inlined_call_operand.hbm [shape: bf16[128,512], index: 13, kind: input, shape index: {}]
  %s14 = inlined_call_operand.vmem [shape: f32[1,512], index: 14, kind: input, shape index: {}]
  %s15 = inlined_call_operand.hbm [shape: bf16[512,128], index: 15, kind: input, shape index: {}]
  %s16 = inlined_call_operand.vmem [shape: f32[1,128], index: 16, kind: input, shape index: {}]
  %s17 = inlined_call_operand.vmem [shape: f32[1,128], index: 17, kind: input, shape index: {}]
  %s18 = inlined_call_operand.hbm [shape: f32[2,16,128], index: 18, kind: output, shape index: {0}]
  %s19 = inlined_call_operand.hbm [shape: f32[2,16,128], index: 19, kind: output, shape index: {1}]
  %20 = xla_tuple %s18, %s19
  %s21 = sld [smem:[#allocation0]]
  $region106: #{xcit_layer_forward.2} parent=0
    _
  %s23 = ssub.s32 1, %s21
  %s24 = scalar_select 0, %s23, %s21
  $region1: #{xcit_layer_forward.2} parent=0
    #allocation2 [shape = 'u8[98304]{0}', space=vmem, size = 0x18000, scoped, tag = 'input window, operand 6, single buffered']
    #allocation3 [shape = 's32[1]{0}', space=sflag, size = 0x4, scoped, tag = 'scoped memory for xcit_layer_forward.2']
    #allocation4 [shape = 's32[1]{0}', space=sflag, size = 0x4, scoped, tag = 'scoped memory for xcit_layer_forward.2']
    #allocation5 [shape = 'u8[32768]{0}', space=vmem, size = 0x8000, scoped, tag = 'input window, operand 8, single buffered']
    #allocation6 [shape = 's32[1]{0}', space=sflag, size = 0x4, scoped, tag = 'scoped memory for xcit_layer_forward.2']
    #allocation7 [shape = 'u8[131072]{0}', space=vmem, size = 0x20000, scoped, tag = 'input window, operand 13, single buffered']
    #allocation8 [shape = 'u8[131072]{0}', space=vmem, size = 0x20000, scoped, tag = 'input window, operand 15, single buffered']
    #allocation9 [shape = 's32[1]{0}', space=sflag, size = 0x4, scoped, tag = 'scoped memory for xcit_layer_forward.2']
    #allocation10 [shape = 'u8[16384]{0}', space=vmem, size = 0x4000, scoped, tag = 'output window, operand 0, single buffered']
    #allocation11 [shape = 'u8[16384]{0}', space=vmem, size = 0x4000, scoped, tag = 'output window, operand 1, single buffered']
    #allocation12 [shape = 's32[1]{0}', space=sflag, size = 0x4, scoped, tag = 'scoped memory for xcit_layer_forward.2']
    %25 = vsyncpa [#allocation3], 0
    %26 = vsyncpa [#allocation6], 0
    %27 = vsyncpa [#allocation9], 0
    %28 = vsyncpa [#allocation4], 0
    %29 = vsyncpa [#allocation12], 0
    // Predicated region
    $region2: #{xcit_layer_forward.2} parent=1 // pred_check
      _
    $region3: #{xcit_layer_forward.2} parent=1 // pred_check_branch
      %31 = sbr.rel (0) target = $region5
    $region4: #{xcit_layer_forward.2} parent=1 // pred_region
      _
    $region5: #{xcit_layer_forward.2} parent=1 // pred_fallthru
      _
    // Predicated region
    $region6: #{xcit_layer_forward.2} parent=1 // pred_check
      _
    $region7: #{xcit_layer_forward.2} parent=1 // pred_check_branch
      %33 = sbr.rel (0) target = $region9
    $region8: #{xcit_layer_forward.2} parent=1 // pred_region
      _
    $region9: #{xcit_layer_forward.2} parent=1 // pred_fallthru
      _
    // Predicated region
    $region10: #{xcit_layer_forward.2} parent=1 // pred_check
      _
    $region11: #{xcit_layer_forward.2} parent=1 // pred_check_branch
      %35 = sbr.rel (0) target = $region13
    $region12: #{xcit_layer_forward.2} parent=1 // pred_region
      _
    $region13: #{xcit_layer_forward.2} parent=1 // pred_fallthru
      _
    // Predicated region
    $region14: #{xcit_layer_forward.2} parent=1 // pred_check
      _
    $region15: #{xcit_layer_forward.2} parent=1 // pred_check_branch
      %37 = sbr.rel (0) target = $region17
    $region16: #{xcit_layer_forward.2} parent=1 // pred_region
      _
    $region17: #{xcit_layer_forward.2} parent=1 // pred_fallthru
      _
    // Predicated region
    $region18: #{xcit_layer_forward.2} parent=1 // pred_check
      _
    $region19: #{xcit_layer_forward.2} parent=1 // pred_check_branch
      %39 = sbr.rel (0) target = $region21
    $region20: #{xcit_layer_forward.2} parent=1 // pred_region
      _
    $region21: #{xcit_layer_forward.2} parent=1 // pred_fallthru
      _
    // Predicated region
    $region22: #{xcit_layer_forward.2} parent=1 // pred_check
      _
    $region23: #{xcit_layer_forward.2} parent=1 // pred_check_branch
      %41 = sbr.rel (0) target = $region25
    $region24: #{xcit_layer_forward.2} parent=1 // pred_region
      _
    $region25: #{xcit_layer_forward.2} parent=1 // pred_fallthru
      _
    // Predicated region
    $region26: #{xcit_layer_forward.2} parent=1 // pred_check
      _
    $region27: #{xcit_layer_forward.2} parent=1 // pred_check_branch
      %43 = sbr.rel (0) target = $region29
    $region28: #{xcit_layer_forward.2} parent=1 // pred_region
      %45 = vsyncadd [#allocation3], 0
      %s46 = sshll.u32 %s6, 4
      %s47 = int_to_ptr.hbm [resolvable:$true] %s46
      %s48 = sshll.u32 [#allocation2], 4
      %s49 = int_to_ptr.vmem [resolvable:$true] %s48
      %54 = dma.hbm_to_vmem [thread:$0]  %s47, 3072, %s49, [#allocation3], 192, 192, 12
    $region29: #{xcit_layer_forward.2} parent=1 // pred_fallthru
      _
    // Predicated region
    $region30: #{xcit_layer_forward.2} parent=1 // pred_check
      _
    $region31: #{xcit_layer_forward.2} parent=1 // pred_check_branch
      %56 = sbr.rel (0) target = $region33
    $region32: #{xcit_layer_forward.2} parent=1 // pred_region
      _
    $region33: #{xcit_layer_forward.2} parent=1 // pred_fallthru
      _
    // Predicated region
    $region34: #{xcit_layer_forward.2} parent=1 // pred_check
      _
    $region35: #{xcit_layer_forward.2} parent=1 // pred_check_branch
      %58 = sbr.rel (0) target = $region37
    $region36: #{xcit_layer_forward.2} parent=1 // pred_region
      %60 = vsyncadd [#allocation6], 0
      %s61 = sshll.u32 %s8, 4
      %s62 = int_to_ptr.hbm [resolvable:$true] %s61
      %s63 = sshll.u32 [#allocation5], 4
      %s64 = int_to_ptr.vmem [resolvable:$true] %s63
      %69 = dma.hbm_to_vmem [thread:$0]  %s62, 1024, %s64, [#allocation6], 64, 64, 4
    $region37: #{xcit_layer_forward.2} parent=1 // pred_fallthru
      _
    // Predicated region
    $region38: #{xcit_layer_forward.2} parent=1 // pred_check
      _
    $region39: #{xcit_layer_forward.2} parent=1 // pred_check_branch
      %71 = sbr.rel (0) target = $region41
    $region40: #{xcit_layer_forward.2} parent=1 // pred_region
      _
    $region41: #{xcit_layer_forward.2} parent=1 // pred_fallthru
      _
    // Predicated region
    $region42: #{xcit_layer_forward.2} parent=1 // pred_check
      _
    $region43: #{xcit_layer_forward.2} parent=1 // pred_check_branch
      %73 = sbr.rel (0) target = $region45
    $region44: #{xcit_layer_forward.2} parent=1 // pred_region
      _
    $region45: #{xcit_layer_forward.2} parent=1 // pred_fallthru
      _
    // Predicated region
    $region46: #{xcit_layer_forward.2} parent=1 // pred_check
      _
    $region47: #{xcit_layer_forward.2} parent=1 // pred_check_branch
      %75 = sbr.rel (0) target = $region49
    $region48: #{xcit_layer_forward.2} parent=1 // pred_region
      _
    $region49: #{xcit_layer_forward.2} parent=1 // pred_fallthru
      _
    // Predicated region
    $region50: #{xcit_layer_forward.2} parent=1 // pred_check
      _
    $region51: #{xcit_layer_forward.2} parent=1 // pred_check_branch
      %77 = sbr.rel (0) target = $region53
    $region52: #{xcit_layer_forward.2} parent=1 // pred_region
      _
    $region53: #{xcit_layer_forward.2} parent=1 // pred_fallthru
      _
    // Predicated region
    $region54: #{xcit_layer_forward.2} parent=1 // pred_check
      _
    $region55: #{xcit_layer_forward.2} parent=1 // pred_check_branch
      %79 = sbr.rel (0) target = $region57
    $region56: #{xcit_layer_forward.2} parent=1 // pred_region
      %81 = vsyncadd [#allocation6], 0
      %s82 = sshll.u32 %s13, 4
      %s83 = int_to_ptr.hbm [resolvable:$true] %s82
      %s84 = sshll.u32 [#allocation7], 4
      %s85 = int_to_ptr.vmem [resolvable:$true] %s84
      %90 = dma.hbm_to_vmem [thread:$0]  %s83, 4096, %s85, [#allocation6], 256, 256, 16
    $region57: #{xcit_layer_forward.2} parent=1 // pred_fallthru
      _
    // Predicated region
    $region58: #{xcit_layer_forward.2} parent=1 // pred_check
      _
    $region59: #{xcit_layer_forward.2} parent=1 // pred_check_branch
      %92 = sbr.rel (0) target = $region61
    $region60: #{xcit_layer_forward.2} parent=1 // pred_region
      _
    $region61: #{xcit_layer_forward.2} parent=1 // pred_fallthru
      _
    // Predicated region
    $region62: #{xcit_layer_forward.2} parent=1 // pred_check
      _
    $region63: #{xcit_layer_forward.2} parent=1 // pred_check_branch
      %94 = sbr.rel (0) target = $region65
    $region64: #{xcit_layer_forward.2} parent=1 // pred_region
      %96 = vsyncadd [#allocation9], 0
      %s97 = sshll.u32 %s15, 4
      %s98 = int_to_ptr.hbm [resolvable:$true] %s97
      %s99 = sshll.u32 [#allocation8], 4
      %s100 = int_to_ptr.vmem [resolvable:$true] %s99
      %105 = dma.hbm_to_vmem [thread:$0]  %s98, 4096, %s100, [#allocation9], 64, 64, 4
    $region65: #{xcit_layer_forward.2} parent=1 // pred_fallthru
      _
    // Predicated region
    $region66: #{xcit_layer_forward.2} parent=1 // pred_check
      _
    $region67: #{xcit_layer_forward.2} parent=1 // pred_check_branch
      %107 = sbr.rel (0) target = $region69
    $region68: #{xcit_layer_forward.2} parent=1 // pred_region
      _
    $region69: #{xcit_layer_forward.2} parent=1 // pred_fallthru
      _
    // Predicated region
    $region70: #{xcit_layer_forward.2} parent=1 // pred_check
      _
    $region71: #{xcit_layer_forward.2} parent=1 // pred_check_branch
      %109 = sbr.rel (0) target = $region73
    $region72: #{xcit_layer_forward.2} parent=1 // pred_region
      _
    $region73: #{xcit_layer_forward.2} parent=1 // pred_fallthru
      _
    // Predicated region
    $region74: #{xcit_layer_forward.2} parent=1 // pred_check
      _
    $region75: #{xcit_layer_forward.2} parent=1 // pred_check_branch
      %111 = sbr.rel (0) target = $region77
    $region76: #{xcit_layer_forward.2} parent=1 // pred_region
      %113 = dma.done [#allocation3], 3072
    $region77: #{xcit_layer_forward.2} parent=1 // pred_fallthru
      _
    // Predicated region
    $region78: #{xcit_layer_forward.2} parent=1 // pred_check
      _
    $region79: #{xcit_layer_forward.2} parent=1 // pred_check_branch
      %115 = sbr.rel (0) target = $region81
    $region80: #{xcit_layer_forward.2} parent=1 // pred_region
      %117 = dma.done [#allocation6], 1024
    $region81: #{xcit_layer_forward.2} parent=1 // pred_fallthru
      _
    // Predicated region
    $region82: #{xcit_layer_forward.2} parent=1 // pred_check
      _
    $region83: #{xcit_layer_forward.2} parent=1 // pred_check_branch
      %119 = sbr.rel (0) target = $region85
    $region84: #{xcit_layer_forward.2} parent=1 // pred_region
      %121 = dma.done [#allocation6], 4096
    $region85: #{xcit_layer_forward.2} parent=1 // pred_fallthru
      _
    // Predicated region
    $region86: #{xcit_layer_forward.2} parent=1 // pred_check
      _
    $region87: #{xcit_layer_forward.2} parent=1 // pred_check_branch
      %123 = sbr.rel (0) target = $region89
    $region88: #{xcit_layer_forward.2} parent=1 // pred_region
      %125 = dma.done [#allocation9], 4096
    $region89: #{xcit_layer_forward.2} parent=1 // pred_fallthru
      _
    %v127 = vld [vmem:[%s0] sm:$0xff]
    %v128 = vld [vmem:[%s0 + $0x8] sm:$0xff]
    %v129 = vld [vmem:[%s0 + $0x10] sm:$0xff]
    %v130 = vld [vmem:[%s0 + $0x18] sm:$0xff]
    %v131 = vld [vmem:[%s1] sm:$0xff]
    %v132 = vld [vmem:[%s1 + $0x8] sm:$0xff]
    %v133 = vld [vmem:[%s1 + $0x10] sm:$0xff]
    %v134 = vld [vmem:[%s1 + $0x18] sm:$0xff]
    %136 = vset.pattern.permute.xlu0 0
    %137 = vperm.xlu0 %136, %v131
    %v138 = vpop.permute.xlu0 %137
    %141 = vset.pattern.permute.xlu0 0
    %142 = vperm.xlu0 %141, %v132
    %v143 = vpop.permute.xlu0 %142
    %146 = vset.pattern.permute.xlu0 0
    %147 = vperm.xlu0 %146, %v133
    %v148 = vpop.permute.xlu0 %147
    %151 = vset.pattern.permute.xlu0 0
    %152 = vperm.xlu0 %151, %v134
    %v153 = vpop.permute.xlu0 %152
    %v155 = vsub.f32 %v127, %v138
    %v156 = vsub.f32 %v128, %v143
    %v157 = vsub.f32 %v129, %v148
    %v158 = vsub.f32 %v130, %v153
    %v159 = vld [vmem:[%s2] sm:$0xff]
    %v160 = vld [vmem:[%s2 + $0x8] sm:$0xff]
    %v161 = vld [vmem:[%s2 + $0x10] sm:$0xff]
    %v162 = vld [vmem:[%s2 + $0x18] sm:$0xff]
    %164 = vset.pattern.permute.xlu0 0
    %165 = vperm.xlu0 %164, %v159
    %v166 = vpop.permute.xlu0 %165
    %169 = vset.pattern.permute.xlu0 0
    %170 = vperm.xlu0 %169, %v160
    %v171 = vpop.permute.xlu0 %170
    %174 = vset.pattern.permute.xlu0 0
    %175 = vperm.xlu0 %174, %v161
    %v176 = vpop.permute.xlu0 %175
    %179 = vset.pattern.permute.xlu0 0
    %180 = vperm.xlu0 %179, %v162
    %v181 = vpop.permute.xlu0 %180
    %v183 = vmul.f32 %v155, %v166
    %v184 = vmul.f32 %v156, %v171
    %v185 = vmul.f32 %v157, %v176
    %v186 = vmul.f32 %v158, %v181
    %v187 = vld [vmem:[%s4] sm:$0x1]
    %v189 = vperm.slane %v187, 0
    %v191 = vmul.f32 %v183, %v189
    %v192 = vmul.f32 %v184, %v189
    %v193 = vmul.f32 %v185, %v189
    %v194 = vmul.f32 %v186, %v189
    %v195 = vld [vmem:[%s5] sm:$0x1]
    %v197 = vperm.slane %v195, 0
    %v199 = vadd.f32 %v191, %v197
    %v200 = vadd.f32 %v192, %v197
    %v201 = vadd.f32 %v193, %v197
    %v202 = vadd.f32 %v194, %v197
    %v203 = vpack.c.bf16 %v200, %v199
    %v204 = vpack.c.bf16 %v202, %v201
    %v205 = vld [vmem:[#allocation2] sm:$0xff]
    %v206 = vld [vmem:[#allocation2 + $0x8] sm:$0xf]
    %v207 = vld [vmem:[#allocation2 + $0xc] sm:$0xff]
    %v208 = vld [vmem:[#allocation2 + $0x14] sm:$0xf]
    %v209 = vld [vmem:[#allocation2 + $0x18] sm:$0xff]
    %v210 = vld [vmem:[#allocation2 + $0x20] sm:$0xf]
    %v211 = vld [vmem:[#allocation2 + $0x24] sm:$0xff]
    %v212 = vld [vmem:[#allocation2 + $0x2c] sm:$0xf]
    %v213 = vld [vmem:[#allocation2 + $0x30] sm:$0xff]
    %v214 = vld [vmem:[#allocation2 + $0x38] sm:$0xf]
    %v215 = vld [vmem:[#allocation2 + $0x3c] sm:$0xff]
    %v216 = vld [vmem:[#allocation2 + $0x44] sm:$0xf]
    %v217 = vld [vmem:[#allocation2 + $0x48] sm:$0xff]
    %v218 = vld [vmem:[#allocation2 + $0x50] sm:$0xf]
    %v219 = vld [vmem:[#allocation2 + $0x54] sm:$0xff]
    %v220 = vld [vmem:[#allocation2 + $0x5c] sm:$0xf]
    %v221 = vld [vmem:[#allocation2 + $0x60] sm:$0xff]
    %v222 = vld [vmem:[#allocation2 + $0x68] sm:$0xf]
    %v223 = vld [vmem:[#allocation2 + $0x6c] sm:$0xff]
    %v224 = vld [vmem:[#allocation2 + $0x74] sm:$0xf]
    %v225 = vld [vmem:[#allocation2 + $0x78] sm:$0xff]
    %v226 = vld [vmem:[#allocation2 + $0x80] sm:$0xf]
    %v227 = vld [vmem:[#allocation2 + $0x84] sm:$0xff]
    %v228 = vld [vmem:[#allocation2 + $0x8c] sm:$0xf]
    %v229 = vld [vmem:[#allocation2 + $0x90] sm:$0xff]
    %v230 = vld [vmem:[#allocation2 + $0x98] sm:$0xf]
    %v231 = vld [vmem:[#allocation2 + $0x9c] sm:$0xff]
    %v232 = vld [vmem:[#allocation2 + $0xa4] sm:$0xf]
    %v233 = vld [vmem:[#allocation2 + $0xa8] sm:$0xff]
    %v234 = vld [vmem:[#allocation2 + $0xb0] sm:$0xf]
    %v235 = vld [vmem:[#allocation2 + $0xb4] sm:$0xff]
    %v236 = vld [vmem:[#allocation2 + $0xbc] sm:$0xf]
    %v269 = vunpack.c.l.b16 %v205
    %v270 = vunpack.c.h.b16 %v205
    %v271 = vunpack.c.l.b16 %v206
    %v272 = vunpack.c.l.b16 %v207
    %v273 = vunpack.c.h.b16 %v207
    %v274 = vunpack.c.l.b16 %v208
    %v275 = vunpack.c.l.b16 %v209
    %v276 = vunpack.c.h.b16 %v209
    %v277 = vunpack.c.l.b16 %v210
    %v278 = vunpack.c.l.b16 %v211
    %v279 = vunpack.c.h.b16 %v211
    %v280 = vunpack.c.l.b16 %v212
    %v281 = vunpack.c.l.b16 %v213
    %v282 = vunpack.c.h.b16 %v213
    %v283 = vunpack.c.l.b16 %v214
    %v284 = vunpack.c.l.b16 %v215
    %v285 = vunpack.c.h.b16 %v215
    %v286 = vunpack.c.l.b16 %v216
    %v287 = vunpack.c.l.b16 %v217
    %v288 = vunpack.c.h.b16 %v217
    %v289 = vunpack.c.l.b16 %v218
    %v290 = vunpack.c.l.b16 %v219
    %v291 = vunpack.c.h.b16 %v219
    %v292 = vunpack.c.l.b16 %v220
    %v293 = vunpack.c.l.b16 %v221
    %v294 = vunpack.c.h.b16 %v221
    %v295 = vunpack.c.l.b16 %v222
    %v296 = vunpack.c.l.b16 %v223
    %v297 = vunpack.c.h.b16 %v223
    %v298 = vunpack.c.l.b16 %v224
    %v299 = vunpack.c.l.b16 %v225
    %v300 = vunpack.c.h.b16 %v225
    %v301 = vunpack.c.l.b16 %v226
    %v302 = vunpack.c.l.b16 %v227
    %v303 = vunpack.c.h.b16 %v227
    %v304 = vunpack.c.l.b16 %v228
    %v305 = vunpack.c.l.b16 %v229
    %v306 = vunpack.c.h.b16 %v229
    %v307 = vunpack.c.l.b16 %v230
    %v308 = vunpack.c.l.b16 %v231
    %v309 = vunpack.c.h.b16 %v231
    %v310 = vunpack.c.l.b16 %v232
    %v311 = vunpack.c.l.b16 %v233
    %v312 = vunpack.c.h.b16 %v233
    %v313 = vunpack.c.l.b16 %v234
    %v314 = vunpack.c.l.b16 %v235
    %v315 = vunpack.c.h.b16 %v235
    %v316 = vunpack.c.l.b16 %v236
    %v317 = vpack.c.b16 %v272, %v269
    %v318 = vpack.c.b16 %v273, %v270
    %v319 = vpack.c.b16 %v274, %v271
    %v320 = vpack.c.b16 %v278, %v275
    %v321 = vpack.c.b16 %v279, %v276
    %v322 = vpack.c.b16 %v280, %v277
    %v323 = vpack.c.b16 %v284, %v281
    %v324 = vpack.c.b16 %v285, %v282
    %v325 = vpack.c.b16 %v286, %v283
    %v326 = vpack.c.b16 %v290, %v287
    %v327 = vpack.c.b16 %v291, %v288
    %v328 = vpack.c.b16 %v292, %v289
    %v329 = vpack.c.b16 %v296, %v293
    %v330 = vpack.c.b16 %v297, %v294
    %v331 = vpack.c.b16 %v298, %v295
    %v332 = vpack.c.b16 %v302, %v299
    %v333 = vpack.c.b16 %v303, %v300
    %v334 = vpack.c.b16 %v304, %v301
    %v335 = vpack.c.b16 %v308, %v305
    %v336 = vpack.c.b16 %v309, %v306
    %v337 = vpack.c.b16 %v310, %v307
    %v338 = vpack.c.b16 %v314, %v311
    %v339 = vpack.c.b16 %v315, %v312
    %v340 = vpack.c.b16 %v316, %v313
    %365 = vmatpush.bf16.msra.mxu0 %v338
    %366 = vmatpush.bf16.msra.mxu0 %v335
    %367 = vmatpush.bf16.msra.mxu0 %v332
    %368 = vmatpush.bf16.msra.mxu0 %v329
    %369 = vmatpush.bf16.msra.mxu0 %v326
    %370 = vmatpush.bf16.msra.mxu0 %v323
    %371 = vmatpush.bf16.msra.mxu0 %v320
    %372 = vmatpush.bf16.msra.mxu0 %v317
    %373 = vmatmul.bf16.gmra.mxu0 %v203
    %v374 = vpop.f32.mrf.mxu0
    %v375 = vadd.f32 0.0, %v374
    %v376 = vpop.f32.mrf.mxu0
    %v377 = vadd.f32 0.0, %v376
    %378 = vmatmul.bf16.gmra.mxu0 %v204
    %v379 = vpop.f32.mrf.mxu0
    %v380 = vadd.f32 0.0, %v379
    %v381 = vpop.f32.mrf.mxu0
    %v382 = vadd.f32 0.0, %v381
    %383 = vdwg.mxu0
    %384 = vmatpush.bf16.msra.mxu0 %v339
    %385 = vmatpush.bf16.msra.mxu0 %v336
    %386 = vmatpush.bf16.msra.mxu0 %v333
    %387 = vmatpush.bf16.msra.mxu0 %v330
    %388 = vmatpush.bf16.msra.mxu0 %v327
    %389 = vmatpush.bf16.msra.mxu0 %v324
    %390 = vmatpush.bf16.msra.mxu0 %v321
    %391 = vmatpush.bf16.msra.mxu0 %v318
    %392 = vmatmul.bf16.gmra.mxu0 %v203
    %v393 = vpop.f32.mrf.mxu0
    %v394 = vadd.f32 0.0, %v393
    %v395 = vpop.f32.mrf.mxu0
    %v396 = vadd.f32 0.0, %v395
    %397 = vmatmul.bf16.gmra.mxu0 %v204
    %v398 = vpop.f32.mrf.mxu0
    %v399 = vadd.f32 0.0, %v398
    %v400 = vpop.f32.mrf.mxu0
    %v401 = vadd.f32 0.0, %v400
    %402 = vdwg.mxu0
    %403 = vmatpush.bf16.msra.mxu0 %v340
    %404 = vmatpush.bf16.msra.mxu0 %v337
    %405 = vmatpush.bf16.msra.mxu0 %v334
    %406 = vmatpush.bf16.msra.mxu0 %v331
    %407 = vmatpush.bf16.msra.mxu0 %v328
    %408 = vmatpush.bf16.msra.mxu0 %v325
    %409 = vmatpush.bf16.msra.mxu0 %v322
    %410 = vmatpush.bf16.msra.mxu0 %v319
    %411 = vmatmul.bf16.gmra.mxu0 %v203
    %v412 = vpop.f32.mrf.mxu0
    %v413 = vadd.f32 0.0, %v412
    %v414 = vpop.f32.mrf.mxu0
    %v415 = vadd.f32 0.0, %v414
    %416 = vmatmul.bf16.gmra.mxu0 %v204
    %v417 = vpop.f32.mrf.mxu0
    %v418 = vadd.f32 0.0, %v417
    %v419 = vpop.f32.mrf.mxu0
    %v420 = vadd.f32 0.0, %v419
    %421 = vdwg.mxu0
    %v422 = vmul.f32 %v375, %v375
    %v423 = vmul.f32 %v377, %v377
    %v424 = vmul.f32 %v380, %v380
    %v425 = vmul.f32 %v382, %v382
    %v426 = vadd.f32 %v422, %v423
    %v427 = vrot.slane %v426, 4
    %v428 = vadd.f32 %v426, %v427
    %v429 = vrot.slane %v428, 2
    %v430 = vadd.f32 %v428, %v429
    %v431 = vrot.slane %v430, 1
    %v432 = vadd.f32 %v430, %v431
    %v433 = vadd.f32 %v424, %v425
    %v434 = vrot.slane %v433, 4
    %v435 = vadd.f32 %v433, %v434
    %v436 = vrot.slane %v435, 2
    %v437 = vadd.f32 %v435, %v436
    %v438 = vrot.slane %v437, 1
    %v439 = vadd.f32 %v437, %v438
    %v440 = vrsqrt.pop %v432
    %v441 = vmul.f32 %v440, %v432
    %v442 = vmul.f32 %v441, %v440
    %v443 = vmul.f32 0.5, %v442
    %v444 = vsub.f32 1.5, %v443
    %v445 = vmul.f32 %v440, %v444
    %v446 = vmul.f32 %v432, %v445
    %vm447 = vcmp.eq.f32.partialorder %v432, inf
    %v448 = vsel %vm447, %v432, %v446
    %vm449 = vcmp.eq.f32.partialorder %v432, 0.0
    %v450 = vand.u32 %v432, 2147483648
    %v451 = vsel %vm449, %v450, %v448
    %v452 = vrsqrt.pop %v439
    %v453 = vmul.f32 %v452, %v439
    %v454 = vmul.f32 %v453, %v452
    %v455 = vmul.f32 0.5, %v454
    %v456 = vsub.f32 1.5, %v455
    %v457 = vmul.f32 %v452, %v456
    %v458 = vmul.f32 %v439, %v457
    %vm459 = vcmp.eq.f32.partialorder %v439, inf
    %v460 = vsel %vm459, %v439, %v458
    %vm461 = vcmp.eq.f32.partialorder %v439, 0.0
    %v462 = vand.u32 %v439, 2147483648
    %v463 = vsel %vm461, %v462, %v460
    %v464 = vmax.f32 %v451, 1e-12
    %v465 = vmax.f32 %v463, 1e-12
    %v466 = vrcp.pop %v464
    %v467 = vmul.f32 %v464, %v466
    %v468 = vsub.f32 1.0, %v467
    %v469 = vmul.f32 %v466, %v468
    %v470 = vadd.f32 %v466, %v469
    %vm471 = vweird.f32 %v464
    %vm472 = vweird.f32 %v466
    %vm473 = vmor %vm471, %vm472
    %v474 = vsel %vm473, %v466, %v470
    %v475 = vand.u32 2147483647, %v464
    %vm476 = vcmp.eq.f32.partialorder %v475, 8.507059e+37
    %v477 = vand.u32 %v464, 2147483648
    %v478 = vor.u32 1.1754944e-38, %v477
    %v479 = vsel %vm476, %v478, %v474
    %v480 = vmul.f32 %v375, %v479
    %v481 = vmul.f32 %v377, %v479
    %v482 = vrcp.pop %v465
    %v483 = vmul.f32 %v465, %v482
    %v484 = vsub.f32 1.0, %v483
    %v485 = vmul.f32 %v482, %v484
    %v486 = vadd.f32 %v482, %v485
    %vm487 = vweird.f32 %v465
    %vm488 = vweird.f32 %v482
    %vm489 = vmor %vm487, %vm488
    %v490 = vsel %vm489, %v482, %v486
    %v491 = vand.u32 2147483647, %v465
    %vm492 = vcmp.eq.f32.partialorder %v491, 8.507059e+37
    %v493 = vand.u32 %v465, 2147483648
    %v494 = vor.u32 1.1754944e-38, %v493
    %v495 = vsel %vm492, %v494, %v490
    %v496 = vmul.f32 %v380, %v495
    %v497 = vmul.f32 %v382, %v495
    %v498 = vmul.f32 %v394, %v394
    %v499 = vmul.f32 %v396, %v396
    %v500 = vmul.f32 %v399, %v399
    %v501 = vmul.f32 %v401, %v401
    %v502 = vadd.f32 %v498, %v499
    %v503 = vrot.slane %v502, 4
    %v504 = vadd.f32 %v502, %v503
    %v505 = vrot.slane %v504, 2
    %v506 = vadd.f32 %v504, %v505
    %v507 = vrot.slane %v506, 1
    %v508 = vadd.f32 %v506, %v507
    %v509 = vadd.f32 %v500, %v501
    %v510 = vrot.slane %v509, 4
    %v511 = vadd.f32 %v509, %v510
    %v512 = vrot.slane %v511, 2
    %v513 = vadd.f32 %v511, %v512
    %v514 = vrot.slane %v513, 1
    %v515 = vadd.f32 %v513, %v514
    %v516 = vrsqrt.pop %v508
    %v517 = vmul.f32 %v516, %v508
    %v518 = vmul.f32 %v517, %v516
    %v519 = vmul.f32 0.5, %v518
    %v520 = vsub.f32 1.5, %v519
    %v521 = vmul.f32 %v516, %v520
    %v522 = vmul.f32 %v508, %v521
    %vm523 = vcmp.eq.f32.partialorder %v508, inf
    %v524 = vsel %vm523, %v508, %v522
    %vm525 = vcmp.eq.f32.partialorder %v508, 0.0
    %v526 = vand.u32 %v508, 2147483648
    %v527 = vsel %vm525, %v526, %v524
    %v528 = vrsqrt.pop %v515
    %v529 = vmul.f32 %v528, %v515
    %v530 = vmul.f32 %v529, %v528
    %v531 = vmul.f32 0.5, %v530
    %v532 = vsub.f32 1.5, %v531
    %v533 = vmul.f32 %v528, %v532
    %v534 = vmul.f32 %v515, %v533
    %vm535 = vcmp.eq.f32.partialorder %v515, inf
    %v536 = vsel %vm535, %v515, %v534
    %vm537 = vcmp.eq.f32.partialorder %v515, 0.0
    %v538 = vand.u32 %v515, 2147483648
    %v539 = vsel %vm537, %v538, %v536
    %v540 = vmax.f32 %v527, 1e-12
    %v541 = vmax.f32 %v539, 1e-12
    %v542 = vrcp.pop %v540
    %v543 = vmul.f32 %v540, %v542
    %v544 = vsub.f32 1.0, %v543
    %v545 = vmul.f32 %v542, %v544
    %v546 = vadd.f32 %v542, %v545
    %vm547 = vweird.f32 %v540
    %vm548 = vweird.f32 %v542
    %vm549 = vmor %vm547, %vm548
    %v550 = vsel %vm549, %v542, %v546
    %v551 = vand.u32 2147483647, %v540
    %vm552 = vcmp.eq.f32.partialorder %v551, 8.507059e+37
    %v553 = vand.u32 %v540, 2147483648
    %v554 = vor.u32 1.1754944e-38, %v553
    %v555 = vsel %vm552, %v554, %v550
    %v556 = vmul.f32 %v394, %v555
    %v557 = vmul.f32 %v396, %v555
    %v558 = vrcp.pop %v541
    %v559 = vmul.f32 %v541, %v558
    %v560 = vsub.f32 1.0, %v559
    %v561 = vmul.f32 %v558, %v560
    %v562 = vadd.f32 %v558, %v561
    %vm563 = vweird.f32 %v541
    %vm564 = vweird.f32 %v558
    %vm565 = vmor %vm563, %vm564
    %v566 = vsel %vm565, %v558, %v562
    %v567 = vand.u32 2147483647, %v541
    %vm568 = vcmp.eq.f32.partialorder %v567, 8.507059e+37
    %v569 = vand.u32 %v541, 2147483648
    %v570 = vor.u32 1.1754944e-38, %v569
    %v571 = vsel %vm568, %v570, %v566
    %v572 = vmul.f32 %v399, %v571
    %v573 = vmul.f32 %v401, %v571
    %v574 = vld [vmem:[%s7] sm:$0x1]
    %v576 = vperm.slane %v574, 0
    %v578 = vmul.f32 %v556, %v576
    %v579 = vmul.f32 %v557, %v576
    %v580 = vmul.f32 %v572, %v576
    %v581 = vmul.f32 %v573, %v576
    %v582 = vpack.c.bf16 %v578, %v578
    %v583 = vpack.c.bf16 %v579, %v579
    %v584 = vpack.c.bf16 %v580, %v580
    %v585 = vpack.c.bf16 %v581, %v581
    %v586 = vpack.c.bf16 %v480, %v480
    %v587 = vpack.c.bf16 %v481, %v481
    %v588 = vpack.c.bf16 %v496, %v496
    %v589 = vpack.c.bf16 %v497, %v497
    %v590 = vld [vmem:[%s3] sm:$0xff]
    %v591 = vld [vmem:[%s3 + $0x8] sm:$0xff]
    %v592 = vld [vmem:[%s3 + $0x10] sm:$0xff]
    %v593 = vld [vmem:[%s3 + $0x18] sm:$0xff]
    %v594 = vld [vmem:[%s3 + $0x20] sm:$0xff]
    %v595 = vld [vmem:[%s3 + $0x28] sm:$0xff]
    %v596 = vld [vmem:[%s3 + $0x30] sm:$0xff]
    %v597 = vld [vmem:[%s3 + $0x38] sm:$0xff]
    %v598 = vld [vmem:[%s3 + $0x40] sm:$0xff]
    %v599 = vld [vmem:[%s3 + $0x48] sm:$0xff]
    %v600 = vld [vmem:[%s3 + $0x50] sm:$0xff]
    %v601 = vld [vmem:[%s3 + $0x58] sm:$0xff]
    %v602 = vld [vmem:[%s3 + $0x60] sm:$0xff]
    %v603 = vld [vmem:[%s3 + $0x68] sm:$0xff]
    %v604 = vld [vmem:[%s3 + $0x70] sm:$0xff]
    %v605 = vld [vmem:[%s3 + $0x78] sm:$0xff]
    %v608 = vunpack.c.l.b16 %v582
    %v609 = vunpack.c.l.b16 %v583
    %v610 = vpack.c.b16 %v609, %v608
    %612 = vxpose.xlu0.c.b16.start [1/8] %v610, 128
    %613 = vxpose.xlu0.c.b16.cont [2/8] 0, 128
    %614 = vxpose.xlu0.c.b16.cont [3/8] 0, 128
    %615 = vxpose.xlu0.c.b16.cont [4/8] 0, 128
    %616 = vxpose.xlu0.c.b16.cont [5/8] 0, 128
    %617 = vxpose.xlu0.c.b16.cont [6/8] 0, 128
    %618 = vxpose.xlu0.c.b16.cont [7/8] 0, 128
    %619 = vxpose.xlu0.c.b16.end [8/8] 0, 128
    %v620 = vpop.trf.xlu0
    %v621 = vpop.trf.xlu0
    %v622 = vpop.trf.xlu0
    %v623 = vpop.trf.xlu0
    %v624 = vpop.trf.xlu0
    %v625 = vpop.trf.xlu0
    %v626 = vpop.trf.xlu0
    %v627 = vpop.trf.xlu0
    %v630 = vunpack.c.l.b16 %v586
    %v631 = vunpack.c.l.b16 %v587
    %v632 = vpack.c.b16 %v631, %v630
    %vm634 = vcmask 130048
    %v636 = vsel %vm634, %v620, 0
    %v639 = vsel %vm634, %v621, 0
    %v642 = vsel %vm634, %v622, 0
    %v645 = vsel %vm634, %v623, 0
    %v648 = vsel %vm634, %v624, 0
    %v651 = vsel %vm634, %v625, 0
    %v654 = vsel %vm634, %v626, 0
    %v657 = vsel %vm634, %v627, 0
    %659 = vmatpush.bf16.msra.mxu0 0
    %660 = vmatpush.bf16.msra.mxu0 0
    %661 = vmatpush.bf16.msra.mxu0 0
    %662 = vmatpush.bf16.msra.mxu0 0
    %663 = vmatpush.bf16.msra.mxu0 0
    %664 = vmatpush.bf16.msra.mxu0 0
    %665 = vmatpush.bf16.msra.mxu0 0
    %666 = vmatpush.bf16.msra.mxu0 %v632
    %667 = vmatmul.bf16.gmra.mxu0 %v636
    %v668 = vpop.f32.mrf.mxu0
    %v669 = vadd.f32 %v590, %v668
    %v670 = vpop.f32.mrf.mxu0
    %v671 = vadd.f32 %v591, %v670
    %672 = vmatmul.bf16.gmra.mxu0 %v639
    %v673 = vpop.f32.mrf.mxu0
    %v674 = vadd.f32 %v592, %v673
    %v675 = vpop.f32.mrf.mxu0
    %v676 = vadd.f32 %v593, %v675
    %677 = vmatmul.bf16.gmra.mxu0 %v642
    %v678 = vpop.f32.mrf.mxu0
    %v679 = vadd.f32 %v594, %v678
    %v680 = vpop.f32.mrf.mxu0
    %v681 = vadd.f32 %v595, %v680
    %682 = vmatmul.bf16.gmra.mxu0 %v645
    %v683 = vpop.f32.mrf.mxu0
    %v684 = vadd.f32 %v596, %v683
    %v685 = vpop.f32.mrf.mxu0
    %v686 = vadd.f32 %v597, %v685
    %687 = vmatmul.bf16.gmra.mxu0 %v648
    %v688 = vpop.f32.mrf.mxu0
    %v689 = vadd.f32 %v598, %v688
    %v690 = vpop.f32.mrf.mxu0
    %v691 = vadd.f32 %v599, %v690
    %692 = vmatmul.bf16.gmra.mxu0 %v651
    %v693 = vpop.f32.mrf.mxu0
    %v694 = vadd.f32 %v600, %v693
    %v695 = vpop.f32.mrf.mxu0
    %v696 = vadd.f32 %v601, %v695
    %697 = vmatmul.bf16.gmra.mxu0 %v654
    %v698 = vpop.f32.mrf.mxu0
    %v699 = vadd.f32 %v602, %v698
    %v700 = vpop.f32.mrf.mxu0
    %v701 = vadd.f32 %v603, %v700
    %702 = vmatmul.bf16.gmra.mxu0 %v657
    %v703 = vpop.f32.mrf.mxu0
    %v704 = vadd.f32 %v604, %v703
    %v705 = vpop.f32.mrf.mxu0
    %v706 = vadd.f32 %v605, %v705
    %707 = vdwg.mxu0
    %v710 = vunpack.c.l.b16 %v584
    %v711 = vunpack.c.l.b16 %v585
    %v712 = vpack.c.b16 %v711, %v710
    %714 = vxpose.xlu0.c.b16.start [1/8] %v712, 128
    %715 = vxpose.xlu0.c.b16.cont [2/8] 0, 128
    %716 = vxpose.xlu0.c.b16.cont [3/8] 0, 128
    %717 = vxpose.xlu0.c.b16.cont [4/8] 0, 128
    %718 = vxpose.xlu0.c.b16.cont [5/8] 0, 128
    %719 = vxpose.xlu0.c.b16.cont [6/8] 0, 128
    %720 = vxpose.xlu0.c.b16.cont [7/8] 0, 128
    %721 = vxpose.xlu0.c.b16.end [8/8] 0, 128
    %v722 = vpop.trf.xlu0
    %v723 = vpop.trf.xlu0
    %v724 = vpop.trf.xlu0
    %v725 = vpop.trf.xlu0
    %v726 = vpop.trf.xlu0
    %v727 = vpop.trf.xlu0
    %v728 = vpop.trf.xlu0
    %v729 = vpop.trf.xlu0
    %v732 = vunpack.c.l.b16 %v588
    %v733 = vunpack.c.l.b16 %v589
    %v734 = vpack.c.b16 %v733, %v732
    %v737 = vsel %vm634, %v722, 0
    %v740 = vsel %vm634, %v723, 0
    %v743 = vsel %vm634, %v724, 0
    %v746 = vsel %vm634, %v725, 0
    %v749 = vsel %vm634, %v726, 0
    %v752 = vsel %vm634, %v727, 0
    %v755 = vsel %vm634, %v728, 0
    %v758 = vsel %vm634, %v729, 0
    %760 = vmatpush.bf16.msra.mxu0 0
    %761 = vmatpush.bf16.msra.mxu0 0
    %762 = vmatpush.bf16.msra.mxu0 0
    %763 = vmatpush.bf16.msra.mxu0 0
    %764 = vmatpush.bf16.msra.mxu0 0
    %765 = vmatpush.bf16.msra.mxu0 0
    %766 = vmatpush.bf16.msra.mxu0 0
    %767 = vmatpush.bf16.msra.mxu0 %v734
    %768 = vmatmul.bf16.gmra.mxu0 %v737
    %v769 = vpop.f32.mrf.mxu0
    %v770 = vadd.f32 %v590, %v769
    %v771 = vpop.f32.mrf.mxu0
    %v772 = vadd.f32 %v591, %v771
    %773 = vmatmul.bf16.gmra.mxu0 %v740
    %v774 = vpop.f32.mrf.mxu0
    %v775 = vadd.f32 %v592, %v774
    %v776 = vpop.f32.mrf.mxu0
    %v777 = vadd.f32 %v593, %v776
    %778 = vmatmul.bf16.gmra.mxu0 %v743
    %v779 = vpop.f32.mrf.mxu0
    %v780 = vadd.f32 %v594, %v779
    %v781 = vpop.f32.mrf.mxu0
    %v782 = vadd.f32 %v595, %v781
    %783 = vmatmul.bf16.gmra.mxu0 %v746
    %v784 = vpop.f32.mrf.mxu0
    %v785 = vadd.f32 %v596, %v784
    %v786 = vpop.f32.mrf.mxu0
    %v787 = vadd.f32 %v597, %v786
    %788 = vmatmul.bf16.gmra.mxu0 %v749
    %v789 = vpop.f32.mrf.mxu0
    %v790 = vadd.f32 %v598, %v789
    %v791 = vpop.f32.mrf.mxu0
    %v792 = vadd.f32 %v599, %v791
    %793 = vmatmul.bf16.gmra.mxu0 %v752
    %v794 = vpop.f32.mrf.mxu0
    %v795 = vadd.f32 %v600, %v794
    %v796 = vpop.f32.mrf.mxu0
    %v797 = vadd.f32 %v601, %v796
    %798 = vmatmul.bf16.gmra.mxu0 %v755
    %v799 = vpop.f32.mrf.mxu0
    %v800 = vadd.f32 %v602, %v799
    %v801 = vpop.f32.mrf.mxu0
    %v802 = vadd.f32 %v603, %v801
    %803 = vmatmul.bf16.gmra.mxu0 %v758
    %v804 = vpop.f32.mrf.mxu0
    %v805 = vadd.f32 %v604, %v804
    %v806 = vpop.f32.mrf.mxu0
    %v807 = vadd.f32 %v605, %v806
    %808 = vdwg.mxu0
    %809 = vmax.xlane.f32.xlu0 %v669
    %v810 = vpop.xlane.xlu0 %809
    %811 = vmax.xlane.f32.xlu0 %v671
    %v812 = vpop.xlane.xlu0 %811
    %813 = vmax.xlane.f32.xlu0 %v674
    %v814 = vpop.xlane.xlu0 %813
    %815 = vmax.xlane.f32.xlu0 %v676
    %v816 = vpop.xlane.xlu0 %815
    %817 = vmax.xlane.f32.xlu0 %v679
    %v818 = vpop.xlane.xlu0 %817
    %819 = vmax.xlane.f32.xlu0 %v681
    %v820 = vpop.xlane.xlu0 %819
    %821 = vmax.xlane.f32.xlu0 %v684
    %v822 = vpop.xlane.xlu0 %821
    %823 = vmax.xlane.f32.xlu0 %v686
    %v824 = vpop.xlane.xlu0 %823
    %825 = vmax.xlane.f32.xlu0 %v689
    %v826 = vpop.xlane.xlu0 %825
    %827 = vmax.xlane.f32.xlu0 %v691
    %v828 = vpop.xlane.xlu0 %827
    %829 = vmax.xlane.f32.xlu0 %v694
    %v830 = vpop.xlane.xlu0 %829
    %831 = vmax.xlane.f32.xlu0 %v696
    %v832 = vpop.xlane.xlu0 %831
    %833 = vmax.xlane.f32.xlu0 %v699
    %v834 = vpop.xlane.xlu0 %833
    %835 = vmax.xlane.f32.xlu0 %v701
    %v836 = vpop.xlane.xlu0 %835
    %837 = vmax.xlane.f32.xlu0 %v704
    %v838 = vpop.xlane.xlu0 %837
    %839 = vmax.xlane.f32.xlu0 %v706
    %v840 = vpop.xlane.xlu0 %839
    %841 = vmax.xlane.f32.xlu0 %v770
    %v842 = vpop.xlane.xlu0 %841
    %843 = vmax.xlane.f32.xlu0 %v772
    %v844 = vpop.xlane.xlu0 %843
    %845 = vmax.xlane.f32.xlu0 %v775
    %v846 = vpop.xlane.xlu0 %845
    %847 = vmax.xlane.f32.xlu0 %v777
    %v848 = vpop.xlane.xlu0 %847
    %849 = vmax.xlane.f32.xlu0 %v780
    %v850 = vpop.xlane.xlu0 %849
    %851 = vmax.xlane.f32.xlu0 %v782
    %v852 = vpop.xlane.xlu0 %851
    %853 = vmax.xlane.f32.xlu0 %v785
    %v854 = vpop.xlane.xlu0 %853
    %855 = vmax.xlane.f32.xlu0 %v787
    %v856 = vpop.xlane.xlu0 %855
    %857 = vmax.xlane.f32.xlu0 %v790
    %v858 = vpop.xlane.xlu0 %857
    %859 = vmax.xlane.f32.xlu0 %v792
    %v860 = vpop.xlane.xlu0 %859
    %861 = vmax.xlane.f32.xlu0 %v795
    %v862 = vpop.xlane.xlu0 %861
    %863 = vmax.xlane.f32.xlu0 %v797
    %v864 = vpop.xlane.xlu0 %863
    %865 = vmax.xlane.f32.xlu0 %v800
    %v866 = vpop.xlane.xlu0 %865
    %867 = vmax.xlane.f32.xlu0 %v802
    %v868 = vpop.xlane.xlu0 %867
    %869 = vmax.xlane.f32.xlu0 %v805
    %v870 = vpop.xlane.xlu0 %869
    %871 = vmax.xlane.f32.xlu0 %v807
    %v872 = vpop.xlane.xlu0 %871
    %v873 = vsub.f32 %v669, %v810
    %v874 = vsub.f32 %v671, %v812
    %v875 = vsub.f32 %v674, %v814
    %v876 = vsub.f32 %v676, %v816
    %v877 = vsub.f32 %v679, %v818
    %v878 = vsub.f32 %v681, %v820
    %v879 = vsub.f32 %v684, %v822
    %v880 = vsub.f32 %v686, %v824
    %v881 = vsub.f32 %v689, %v826
    %v882 = vsub.f32 %v691, %v828
    %v883 = vsub.f32 %v694, %v830
    %v884 = vsub.f32 %v696, %v832
    %v885 = vsub.f32 %v699, %v834
    %v886 = vsub.f32 %v701, %v836
    %v887 = vsub.f32 %v704, %v838
    %v888 = vsub.f32 %v706, %v840
    %v889 = vsub.f32 %v770, %v842
    %v890 = vsub.f32 %v772, %v844
    %v891 = vsub.f32 %v775, %v846
    %v892 = vsub.f32 %v777, %v848
    %v893 = vsub.f32 %v780, %v850
    %v894 = vsub.f32 %v782, %v852
    %v895 = vsub.f32 %v785, %v854
    %v896 = vsub.f32 %v787, %v856
    %v897 = vsub.f32 %v790, %v858
    %v898 = vsub.f32 %v792, %v860
    %v899 = vsub.f32 %v795, %v862
    %v900 = vsub.f32 %v797, %v864
    %v901 = vsub.f32 %v800, %v866
    %v902 = vsub.f32 %v802, %v868
    %v903 = vsub.f32 %v805, %v870
    %v904 = vsub.f32 %v807, %v872
    %v905 = vmul.f32 %v873, 1.442695
    %v906 = vpow.pop %v905
    %v907 = vmul.f32 %v874, 1.442695
    %v908 = vpow.pop %v907
    %v909 = vmul.f32 %v875, 1.442695
    %v910 = vpow.pop %v909
    %v911 = vmul.f32 %v876, 1.442695
    %v912 = vpow.pop %v911
    %v913 = vmul.f32 %v877, 1.442695
    %v914 = vpow.pop %v913
    %v915 = vmul.f32 %v878, 1.442695
    %v916 = vpow.pop %v915
    %v917 = vmul.f32 %v879, 1.442695
    %v918 = vpow.pop %v917
    %v919 = vmul.f32 %v880, 1.442695
    %v920 = vpow.pop %v919
    %v921 = vmul.f32 %v881, 1.442695
    %v922 = vpow.pop %v921
    %v923 = vmul.f32 %v882, 1.442695
    %v924 = vpow.pop %v923
    %v925 = vmul.f32 %v883, 1.442695
    %v926 = vpow.pop %v925
    %v927 = vmul.f32 %v884, 1.442695
    %v928 = vpow.pop %v927
    %v929 = vmul.f32 %v885, 1.442695
    %v930 = vpow.pop %v929
    %v931 = vmul.f32 %v886, 1.442695
    %v932 = vpow.pop %v931
    %v933 = vmul.f32 %v887, 1.442695
    %v934 = vpow.pop %v933
    %v935 = vmul.f32 %v888, 1.442695
    %v936 = vpow.pop %v935
    %v937 = vmul.f32 %v889, 1.442695
    %v938 = vpow.pop %v937
    %v939 = vmul.f32 %v890, 1.442695
    %v940 = vpow.pop %v939
    %v941 = vmul.f32 %v891, 1.442695
    %v942 = vpow.pop %v941
    %v943 = vmul.f32 %v892, 1.442695
    %v944 = vpow.pop %v943
    %v945 = vmul.f32 %v893, 1.442695
    %v946 = vpow.pop %v945
    %v947 = vmul.f32 %v894, 1.442695
    %v948 = vpow.pop %v947
    %v949 = vmul.f32 %v895, 1.442695
    %v950 = vpow.pop %v949
    %v951 = vmul.f32 %v896, 1.442695
    %v952 = vpow.pop %v951
    %v953 = vmul.f32 %v897, 1.442695
    %v954 = vpow.pop %v953
    %v955 = vmul.f32 %v898, 1.442695
    %v956 = vpow.pop %v955
    %v957 = vmul.f32 %v899, 1.442695
    %v958 = vpow.pop %v957
    %v959 = vmul.f32 %v900, 1.442695
    %v960 = vpow.pop %v959
    %v961 = vmul.f32 %v901, 1.442695
    %v962 = vpow.pop %v961
    %v963 = vmul.f32 %v902, 1.442695
    %v964 = vpow.pop %v963
    %v965 = vmul.f32 %v903, 1.442695
    %v966 = vpow.pop %v965
    %v967 = vmul.f32 %v904, 1.442695
    %v968 = vpow.pop %v967
    %969 = vadd.xlane.f32.xlu0 %v906
    %v970 = vpop.xlane.xlu0 %969
    %971 = vadd.xlane.f32.xlu0 %v908
    %v972 = vpop.xlane.xlu0 %971
    %973 = vadd.xlane.f32.xlu0 %v910
    %v974 = vpop.xlane.xlu0 %973
    %975 = vadd.xlane.f32.xlu0 %v912
    %v976 = vpop.xlane.xlu0 %975
    %977 = vadd.xlane.f32.xlu0 %v914
    %v978 = vpop.xlane.xlu0 %977
    %979 = vadd.xlane.f32.xlu0 %v916
    %v980 = vpop.xlane.xlu0 %979
    %981 = vadd.xlane.f32.xlu0 %v918
    %v982 = vpop.xlane.xlu0 %981
    %983 = vadd.xlane.f32.xlu0 %v920
    %v984 = vpop.xlane.xlu0 %983
    %985 = vadd.xlane.f32.xlu0 %v922
    %v986 = vpop.xlane.xlu0 %985
    %987 = vadd.xlane.f32.xlu0 %v924
    %v988 = vpop.xlane.xlu0 %987
    %989 = vadd.xlane.f32.xlu0 %v926
    %v990 = vpop.xlane.xlu0 %989
    %991 = vadd.xlane.f32.xlu0 %v928
    %v992 = vpop.xlane.xlu0 %991
    %993 = vadd.xlane.f32.xlu0 %v930
    %v994 = vpop.xlane.xlu0 %993
    %995 = vadd.xlane.f32.xlu0 %v932
    %v996 = vpop.xlane.xlu0 %995
    %997 = vadd.xlane.f32.xlu0 %v934
    %v998 = vpop.xlane.xlu0 %997
    %999 = vadd.xlane.f32.xlu0 %v936
    %v1000 = vpop.xlane.xlu0 %999
    %1001 = vadd.xlane.f32.xlu0 %v938
    %v1002 = vpop.xlane.xlu0 %1001
    %1003 = vadd.xlane.f32.xlu0 %v940
    %v1004 = vpop.xlane.xlu0 %1003
    %1005 = vadd.xlane.f32.xlu0 %v942
    %v1006 = vpop.xlane.xlu0 %1005
    %1007 = vadd.xlane.f32.xlu0 %v944
    %v1008 = vpop.xlane.xlu0 %1007
    %1009 = vadd.xlane.f32.xlu0 %v946
    %v1010 = vpop.xlane.xlu0 %1009
    %1011 = vadd.xlane.f32.xlu0 %v948
    %v1012 = vpop.xlane.xlu0 %1011
    %1013 = vadd.xlane.f32.xlu0 %v950
    %v1014 = vpop.xlane.xlu0 %1013
    %1015 = vadd.xlane.f32.xlu0 %v952
    %v1016 = vpop.xlane.xlu0 %1015
    %1017 = vadd.xlane.f32.xlu0 %v954
    %v1018 = vpop.xlane.xlu0 %1017
    %1019 = vadd.xlane.f32.xlu0 %v956
    %v1020 = vpop.xlane.xlu0 %1019
    %1021 = vadd.xlane.f32.xlu0 %v958
    %v1022 = vpop.xlane.xlu0 %1021
    %1023 = vadd.xlane.f32.xlu0 %v960
    %v1024 = vpop.xlane.xlu0 %1023
    %1025 = vadd.xlane.f32.xlu0 %v962
    %v1026 = vpop.xlane.xlu0 %1025
    %1027 = vadd.xlane.f32.xlu0 %v964
    %v1028 = vpop.xlane.xlu0 %1027
    %1029 = vadd.xlane.f32.xlu0 %v966
    %v1030 = vpop.xlane.xlu0 %1029
    %1031 = vadd.xlane.f32.xlu0 %v968
    %v1032 = vpop.xlane.xlu0 %1031
    %v1033 = vrcp.pop %v970
    %v1034 = vrcp.pop %v972
    %v1035 = vrcp.pop %v974
    %v1036 = vrcp.pop %v976
    %v1037 = vrcp.pop %v978
    %v1038 = vrcp.pop %v980
    %v1039 = vrcp.pop %v982
    %v1040 = vrcp.pop %v984
    %v1041 = vrcp.pop %v986
    %v1042 = vrcp.pop %v988
    %v1043 = vrcp.pop %v990
    %v1044 = vrcp.pop %v992
    %v1045 = vrcp.pop %v994
    %v1046 = vrcp.pop %v996
    %v1047 = vrcp.pop %v998
    %v1048 = vrcp.pop %v1000
    %v1049 = vrcp.pop %v1002
    %v1050 = vrcp.pop %v1004
    %v1051 = vrcp.pop %v1006
    %v1052 = vrcp.pop %v1008
    %v1053 = vrcp.pop %v1010
    %v1054 = vrcp.pop %v1012
    %v1055 = vrcp.pop %v1014
    %v1056 = vrcp.pop %v1016
    %v1057 = vrcp.pop %v1018
    %v1058 = vrcp.pop %v1020
    %v1059 = vrcp.pop %v1022
    %v1060 = vrcp.pop %v1024
    %v1061 = vrcp.pop %v1026
    %v1062 = vrcp.pop %v1028
    %v1063 = vrcp.pop %v1030
    %v1064 = vrcp.pop %v1032
    %v1065 = vmul.f32 %v906, %v1033
    %v1066 = vmul.f32 %v908, %v1034
    %v1067 = vmul.f32 %v910, %v1035
    %v1068 = vmul.f32 %v912, %v1036
    %v1069 = vmul.f32 %v914, %v1037
    %v1070 = vmul.f32 %v916, %v1038
    %v1071 = vmul.f32 %v918, %v1039
    %v1072 = vmul.f32 %v920, %v1040
    %v1073 = vmul.f32 %v922, %v1041
    %v1074 = vmul.f32 %v924, %v1042
    %v1075 = vmul.f32 %v926, %v1043
    %v1076 = vmul.f32 %v928, %v1044
    %v1077 = vmul.f32 %v930, %v1045
    %v1078 = vmul.f32 %v932, %v1046
    %v1079 = vmul.f32 %v934, %v1047
    %v1080 = vmul.f32 %v936, %v1048
    %v1081 = vmul.f32 %v938, %v1049
    %v1082 = vmul.f32 %v940, %v1050
    %v1083 = vmul.f32 %v942, %v1051
    %v1084 = vmul.f32 %v944, %v1052
    %v1085 = vmul.f32 %v946, %v1053
    %v1086 = vmul.f32 %v948, %v1054
    %v1087 = vmul.f32 %v950, %v1055
    %v1088 = vmul.f32 %v952, %v1056
    %v1089 = vmul.f32 %v954, %v1057
    %v1090 = vmul.f32 %v956, %v1058
    %v1091 = vmul.f32 %v958, %v1059
    %v1092 = vmul.f32 %v960, %v1060
    %v1093 = vmul.f32 %v962, %v1061
    %v1094 = vmul.f32 %v964, %v1062
    %v1095 = vmul.f32 %v966, %v1063
    %v1096 = vmul.f32 %v968, %v1064
    %v1097 = vpack.c.bf16 %v413, %v413
    %v1098 = vpack.c.bf16 %v415, %v415
    %v1099 = vpack.c.bf16 %v418, %v418
    %v1100 = vpack.c.bf16 %v420, %v420
    %v1101 = vpack.c.bf16 %v1065, %v1065
    %v1102 = vpack.c.bf16 %v1066, %v1066
    %v1103 = vpack.c.bf16 %v1067, %v1067
    %v1104 = vpack.c.bf16 %v1068, %v1068
    %v1105 = vpack.c.bf16 %v1069, %v1069
    %v1106 = vpack.c.bf16 %v1070, %v1070
    %v1107 = vpack.c.bf16 %v1071, %v1071
    %v1108 = vpack.c.bf16 %v1072, %v1072
    %v1109 = vpack.c.bf16 %v1073, %v1073
    %v1110 = vpack.c.bf16 %v1074, %v1074
    %v1111 = vpack.c.bf16 %v1075, %v1075
    %v1112 = vpack.c.bf16 %v1076, %v1076
    %v1113 = vpack.c.bf16 %v1077, %v1077
    %v1114 = vpack.c.bf16 %v1078, %v1078
    %v1115 = vpack.c.bf16 %v1079, %v1079
    %v1116 = vpack.c.bf16 %v1080, %v1080
    %v1117 = vpack.c.bf16 %v1081, %v1081
    %v1118 = vpack.c.bf16 %v1082, %v1082
    %v1119 = vpack.c.bf16 %v1083, %v1083
    %v1120 = vpack.c.bf16 %v1084, %v1084
    %v1121 = vpack.c.bf16 %v1085, %v1085
    %v1122 = vpack.c.bf16 %v1086, %v1086
    %v1123 = vpack.c.bf16 %v1087, %v1087
    %v1124 = vpack.c.bf16 %v1088, %v1088
    %v1125 = vpack.c.bf16 %v1089, %v1089
    %v1126 = vpack.c.bf16 %v1090, %v1090
    %v1127 = vpack.c.bf16 %v1091, %v1091
    %v1128 = vpack.c.bf16 %v1092, %v1092
    %v1129 = vpack.c.bf16 %v1093, %v1093
    %v1130 = vpack.c.bf16 %v1094, %v1094
    %v1131 = vpack.c.bf16 %v1095, %v1095
    %v1132 = vpack.c.bf16 %v1096, %v1096
    %v1135 = vunpack.c.l.b16 %v1097
    %v1136 = vunpack.c.l.b16 %v1098
    %v1137 = vpack.c.b16 %v1136, %v1135
    %v1155 = vunpack.c.l.b16 %v1101
    %v1156 = vunpack.c.l.b16 %v1102
    %v1157 = vunpack.c.l.b16 %v1103
    %v1158 = vunpack.c.l.b16 %v1104
    %v1159 = vunpack.c.l.b16 %v1105
    %v1160 = vunpack.c.l.b16 %v1106
    %v1161 = vunpack.c.l.b16 %v1107
    %v1162 = vunpack.c.l.b16 %v1108
    %v1163 = vunpack.c.l.b16 %v1109
    %v1164 = vunpack.c.l.b16 %v1110
    %v1165 = vunpack.c.l.b16 %v1111
    %v1166 = vunpack.c.l.b16 %v1112
    %v1167 = vunpack.c.l.b16 %v1113
    %v1168 = vunpack.c.l.b16 %v1114
    %v1169 = vunpack.c.l.b16 %v1115
    %v1170 = vunpack.c.l.b16 %v1116
    %v1171 = vpack.c.b16 %v1156, %v1155
    %v1172 = vpack.c.b16 %v1158, %v1157
    %v1173 = vpack.c.b16 %v1160, %v1159
    %v1174 = vpack.c.b16 %v1162, %v1161
    %v1175 = vpack.c.b16 %v1164, %v1163
    %v1176 = vpack.c.b16 %v1166, %v1165
    %v1177 = vpack.c.b16 %v1168, %v1167
    %v1178 = vpack.c.b16 %v1170, %v1169
    %1187 = vmatpush.bf16.msra.mxu0 %v1178
    %1188 = vmatpush.bf16.msra.mxu0 %v1177
    %1189 = vmatpush.bf16.msra.mxu0 %v1176
    %1190 = vmatpush.bf16.msra.mxu0 %v1175
    %1191 = vmatpush.bf16.msra.mxu0 %v1174
    %1192 = vmatpush.bf16.msra.mxu0 %v1173
    %1193 = vmatpush.bf16.msra.mxu0 %v1172
    %1194 = vmatpush.bf16.msra.mxu0 %v1171
    %1195 = vmatmul.bf16.gmra.mxu0 %v1137
    %v1196 = vpop.f32.mrf.mxu0
    %v1197 = vadd.f32 0.0, %v1196
    %v1198 = vpop.f32.mrf.mxu0
    %v1199 = vadd.f32 0.0, %v1198
    %1200 = vdwg.mxu0
    %v1203 = vunpack.c.l.b16 %v1099
    %v1204 = vunpack.c.l.b16 %v1100
    %v1205 = vpack.c.b16 %v1204, %v1203
    %v1223 = vunpack.c.l.b16 %v1117
    %v1224 = vunpack.c.l.b16 %v1118
    %v1225 = vunpack.c.l.b16 %v1119
    %v1226 = vunpack.c.l.b16 %v1120
    %v1227 = vunpack.c.l.b16 %v1121
    %v1228 = vunpack.c.l.b16 %v1122
    %v1229 = vunpack.c.l.b16 %v1123
    %v1230 = vunpack.c.l.b16 %v1124
    %v1231 = vunpack.c.l.b16 %v1125
    %v1232 = vunpack.c.l.b16 %v1126
    %v1233 = vunpack.c.l.b16 %v1127
    %v1234 = vunpack.c.l.b16 %v1128
    %v1235 = vunpack.c.l.b16 %v1129
    %v1236 = vunpack.c.l.b16 %v1130
    %v1237 = vunpack.c.l.b16 %v1131
    %v1238 = vunpack.c.l.b16 %v1132
    %v1239 = vpack.c.b16 %v1224, %v1223
    %v1240 = vpack.c.b16 %v1226, %v1225
    %v1241 = vpack.c.b16 %v1228, %v1227
    %v1242 = vpack.c.b16 %v1230, %v1229
    %v1243 = vpack.c.b16 %v1232, %v1231
    %v1244 = vpack.c.b16 %v1234, %v1233
    %v1245 = vpack.c.b16 %v1236, %v1235
    %v1246 = vpack.c.b16 %v1238, %v1237
    %1255 = vmatpush.bf16.msra.mxu0 %v1246
    %1256 = vmatpush.bf16.msra.mxu0 %v1245
    %1257 = vmatpush.bf16.msra.mxu0 %v1244
    %1258 = vmatpush.bf16.msra.mxu0 %v1243
    %1259 = vmatpush.bf16.msra.mxu0 %v1242
    %1260 = vmatpush.bf16.msra.mxu0 %v1241
    %1261 = vmatpush.bf16.msra.mxu0 %v1240
    %1262 = vmatpush.bf16.msra.mxu0 %v1239
    %1263 = vmatmul.bf16.gmra.mxu0 %v1205
    %v1264 = vpop.f32.mrf.mxu0
    %v1265 = vadd.f32 0.0, %v1264
    %v1266 = vpop.f32.mrf.mxu0
    %v1267 = vadd.f32 0.0, %v1266
    %1268 = vdwg.mxu0
    %v1269 = vpack.c.bf16 %v1199, %v1197
    %v1270 = vpack.c.bf16 %v1267, %v1265
    %v1271 = vld [vmem:[#allocation5] sm:$0xf]
    %v1272 = vld [vmem:[#allocation5 + $0x4] sm:$0xf]
    %v1273 = vld [vmem:[#allocation5 + $0x8] sm:$0xf]
    %v1274 = vld [vmem:[#allocation5 + $0xc] sm:$0xf]
    %v1275 = vld [vmem:[#allocation5 + $0x10] sm:$0xf]
    %v1276 = vld [vmem:[#allocation5 + $0x14] sm:$0xf]
    %v1277 = vld [vmem:[#allocation5 + $0x18] sm:$0xf]
    %v1278 = vld [vmem:[#allocation5 + $0x1c] sm:$0xf]
    %v1279 = vld [vmem:[#allocation5 + $0x20] sm:$0xf]
    %v1280 = vld [vmem:[#allocation5 + $0x24] sm:$0xf]
    %v1281 = vld [vmem:[#allocation5 + $0x28] sm:$0xf]
    %v1282 = vld [vmem:[#allocation5 + $0x2c] sm:$0xf]
    %v1283 = vld [vmem:[#allocation5 + $0x30] sm:$0xf]
    %v1284 = vld [vmem:[#allocation5 + $0x34] sm:$0xf]
    %v1285 = vld [vmem:[#allocation5 + $0x38] sm:$0xf]
    %v1286 = vld [vmem:[#allocation5 + $0x3c] sm:$0xf]
    %v1287 = vld [vmem:[%s9] sm:$0x1]
    %v1289 = vperm.slane %v1287, 0
    %v1307 = vunpack.c.l.b16 %v1271
    %v1308 = vunpack.c.l.b16 %v1272
    %v1309 = vunpack.c.l.b16 %v1273
    %v1310 = vunpack.c.l.b16 %v1274
    %v1311 = vunpack.c.l.b16 %v1275
    %v1312 = vunpack.c.l.b16 %v1276
    %v1313 = vunpack.c.l.b16 %v1277
    %v1314 = vunpack.c.l.b16 %v1278
    %v1315 = vunpack.c.l.b16 %v1279
    %v1316 = vunpack.c.l.b16 %v1280
    %v1317 = vunpack.c.l.b16 %v1281
    %v1318 = vunpack.c.l.b16 %v1282
    %v1319 = vunpack.c.l.b16 %v1283
    %v1320 = vunpack.c.l.b16 %v1284
    %v1321 = vunpack.c.l.b16 %v1285
    %v1322 = vunpack.c.l.b16 %v1286
    %v1323 = vpack.c.b16 %v1308, %v1307
    %v1324 = vpack.c.b16 %v1310, %v1309
    %v1325 = vpack.c.b16 %v1312, %v1311
    %v1326 = vpack.c.b16 %v1314, %v1313
    %v1327 = vpack.c.b16 %v1316, %v1315
    %v1328 = vpack.c.b16 %v1318, %v1317
    %v1329 = vpack.c.b16 %v1320, %v1319
    %v1330 = vpack.c.b16 %v1322, %v1321
    %1339 = vmatpush.bf16.msra.mxu0 %v1330
    %1340 = vmatpush.bf16.msra.mxu0 %v1329
    %1341 = vmatpush.bf16.msra.mxu0 %v1328
    %1342 = vmatpush.bf16.msra.mxu0 %v1327
    %1343 = vmatpush.bf16.msra.mxu0 %v1326
    %1344 = vmatpush.bf16.msra.mxu0 %v1325
    %1345 = vmatpush.bf16.msra.mxu0 %v1324
    %1346 = vmatpush.bf16.msra.mxu0 %v1323
    %1347 = vmatmul.bf16.gmra.mxu0 %v1269
    %v1348 = vpop.f32.mrf.mxu0
    %v1349 = vadd.f32 %v1289, %v1348
    %v1350 = vpop.f32.mrf.mxu0
    %v1351 = vadd.f32 %v1289, %v1350
    %1352 = vmatmul.bf16.gmra.mxu0 %v1270
    %v1353 = vpop.f32.mrf.mxu0
    %v1354 = vadd.f32 %v1289, %v1353
    %v1355 = vpop.f32.mrf.mxu0
    %v1356 = vadd.f32 %v1289, %v1355
    %1357 = vdwg.mxu0
    %v1358 = vld [vmem:[%s10] sm:$0x1]
    %v1360 = vperm.slane %v1358, 0
    %v1362 = vmul.f32 %v1360, %v1349
    %v1363 = vmul.f32 %v1360, %v1351
    %v1364 = vmul.f32 %v1360, %v1354
    %v1365 = vmul.f32 %v1360, %v1356
    %v1366 = vadd.f32 %v127, %v1362
    %v1367 = vadd.f32 %v128, %v1363
    %v1368 = vadd.f32 %v129, %v1364
    %v1369 = vadd.f32 %v130, %v1365
    %1370 = vst [vmem:[#allocation10] sm:$0xff] %v1366
    %1371 = vst [vmem:[#allocation10 + $0x8] sm:$0xff] %v1367
    %1372 = vst [vmem:[#allocation10 + $0x10] sm:$0xff] %v1368
    %1373 = vst [vmem:[#allocation10 + $0x18] sm:$0xff] %v1369
    %v1374 = vld [vmem:[%s11] sm:$0x1]
    %v1376 = vperm.slane %v1374, 0
    %v1378 = vmul.f32 %v183, %v1376
    %v1379 = vmul.f32 %v184, %v1376
    %v1380 = vmul.f32 %v185, %v1376
    %v1381 = vmul.f32 %v186, %v1376
    %v1382 = vld [vmem:[%s12] sm:$0x1]
    %v1384 = vperm.slane %v1382, 0
    %v1386 = vadd.f32 %v1378, %v1384
    %v1387 = vadd.f32 %v1379, %v1384
    %v1388 = vadd.f32 %v1380, %v1384
    %v1389 = vadd.f32 %v1381, %v1384
    %v1390 = vpack.c.bf16 %v1387, %v1386
    %v1391 = vpack.c.bf16 %v1389, %v1388
    %v1392 = vld [vmem:[#allocation7] sm:$0xff]
    %v1393 = vld [vmem:[#allocation7 + $0x8] sm:$0xff]
    %v1394 = vld [vmem:[#allocation7 + $0x10] sm:$0xff]
    %v1395 = vld [vmem:[#allocation7 + $0x18] sm:$0xff]
    %v1396 = vld [vmem:[#allocation7 + $0x20] sm:$0xff]
    %v1397 = vld [vmem:[#allocation7 + $0x28] sm:$0xff]
    %v1398 = vld [vmem:[#allocation7 + $0x30] sm:$0xff]
    %v1399 = vld [vmem:[#allocation7 + $0x38] sm:$0xff]
    %v1400 = vld [vmem:[#allocation7 + $0x40] sm:$0xff]
    %v1401 = vld [vmem:[#allocation7 + $0x48] sm:$0xff]
    %v1402 = vld [vmem:[#allocation7 + $0x50] sm:$0xff]
    %v1403 = vld [vmem:[#allocation7 + $0x58] sm:$0xff]
    %v1404 = vld [vmem:[#allocation7 + $0x60] sm:$0xff]
    %v1405 = vld [vmem:[#allocation7 + $0x68] sm:$0xff]
    %v1406 = vld [vmem:[#allocation7 + $0x70] sm:$0xff]
    %v1407 = vld [vmem:[#allocation7 + $0x78] sm:$0xff]
    %v1408 = vld [vmem:[#allocation7 + $0x80] sm:$0xff]
    %v1409 = vld [vmem:[#allocation7 + $0x88] sm:$0xff]
    %v1410 = vld [vmem:[#allocation7 + $0x90] sm:$0xff]
    %v1411 = vld [vmem:[#allocation7 + $0x98] sm:$0xff]
    %v1412 = vld [vmem:[#allocation7 + $0xa0] sm:$0xff]
    %v1413 = vld [vmem:[#allocation7 + $0xa8] sm:$0xff]
    %v1414 = vld [vmem:[#allocation7 + $0xb0] sm:$0xff]
    %v1415 = vld [vmem:[#allocation7 + $0xb8] sm:$0xff]
    %v1416 = vld [vmem:[#allocation7 + $0xc0] sm:$0xff]
    %v1417 = vld [vmem:[#allocation7 + $0xc8] sm:$0xff]
    %v1418 = vld [vmem:[#allocation7 + $0xd0] sm:$0xff]
    %v1419 = vld [vmem:[#allocation7 + $0xd8] sm:$0xff]
    %v1420 = vld [vmem:[#allocation7 + $0xe0] sm:$0xff]
    %v1421 = vld [vmem:[#allocation7 + $0xe8] sm:$0xff]
    %v1422 = vld [vmem:[#allocation7 + $0xf0] sm:$0xff]
    %v1423 = vld [vmem:[#allocation7 + $0xf8] sm:$0xff]
    %v1424 = vld [vmem:[%s14] sm:$0xf]
    %v1426 = vperm.slane %v1424, 0
    %v1427 = vperm.slane %v1424, 1
    %v1428 = vperm.slane %v1424, 2
    %v1429 = vperm.slane %v1424, 3
    %v1466 = vunpack.c.l.b16 %v1392
    %v1467 = vunpack.c.h.b16 %v1392
    %v1468 = vunpack.c.l.b16 %v1393
    %v1469 = vunpack.c.h.b16 %v1393
    %v1470 = vunpack.c.l.b16 %v1394
    %v1471 = vunpack.c.h.b16 %v1394
    %v1472 = vunpack.c.l.b16 %v1395
    %v1473 = vunpack.c.h.b16 %v1395
    %v1474 = vunpack.c.l.b16 %v1396
    %v1475 = vunpack.c.h.b16 %v1396
    %v1476 = vunpack.c.l.b16 %v1397
    %v1477 = vunpack.c.h.b16 %v1397
    %v1478 = vunpack.c.l.b16 %v1398
    %v1479 = vunpack.c.h.b16 %v1398
    %v1480 = vunpack.c.l.b16 %v1399
    %v1481 = vunpack.c.h.b16 %v1399
    %v1482 = vunpack.c.l.b16 %v1400
    %v1483 = vunpack.c.h.b16 %v1400
    %v1484 = vunpack.c.l.b16 %v1401
    %v1485 = vunpack.c.h.b16 %v1401
    %v1486 = vunpack.c.l.b16 %v1402
    %v1487 = vunpack.c.h.b16 %v1402
    %v1488 = vunpack.c.l.b16 %v1403
    %v1489 = vunpack.c.h.b16 %v1403
    %v1490 = vunpack.c.l.b16 %v1404
    %v1491 = vunpack.c.h.b16 %v1404
    %v1492 = vunpack.c.l.b16 %v1405
    %v1493 = vunpack.c.h.b16 %v1405
    %v1494 = vunpack.c.l.b16 %v1406
    %v1495 = vunpack.c.h.b16 %v1406
    %v1496 = vunpack.c.l.b16 %v1407
    %v1497 = vunpack.c.h.b16 %v1407
    %v1498 = vunpack.c.l.b16 %v1408
    %v1499 = vunpack.c.h.b16 %v1408
    %v1500 = vunpack.c.l.b16 %v1409
    %v1501 = vunpack.c.h.b16 %v1409
    %v1502 = vunpack.c.l.b16 %v1410
    %v1503 = vunpack.c.h.b16 %v1410
    %v1504 = vunpack.c.l.b16 %v1411
    %v1505 = vunpack.c.h.b16 %v1411
    %v1506 = vunpack.c.l.b16 %v1412
    %v1507 = vunpack.c.h.b16 %v1412
    %v1508 = vunpack.c.l.b16 %v1413
    %v1509 = vunpack.c.h.b16 %v1413
    %v1510 = vunpack.c.l.b16 %v1414
    %v1511 = vunpack.c.h.b16 %v1414
    %v1512 = vunpack.c.l.b16 %v1415
    %v1513 = vunpack.c.h.b16 %v1415
    %v1514 = vunpack.c.l.b16 %v1416
    %v1515 = vunpack.c.h.b16 %v1416
    %v1516 = vunpack.c.l.b16 %v1417
    %v1517 = vunpack.c.h.b16 %v1417
    %v1518 = vunpack.c.l.b16 %v1418
    %v1519 = vunpack.c.h.b16 %v1418
    %v1520 = vunpack.c.l.b16 %v1419
    %v1521 = vunpack.c.h.b16 %v1419
    %v1522 = vunpack.c.l.b16 %v1420
    %v1523 = vunpack.c.h.b16 %v1420
    %v1524 = vunpack.c.l.b16 %v1421
    %v1525 = vunpack.c.h.b16 %v1421
    %v1526 = vunpack.c.l.b16 %v1422
    %v1527 = vunpack.c.h.b16 %v1422
    %v1528 = vunpack.c.l.b16 %v1423
    %v1529 = vunpack.c.h.b16 %v1423
    %v1530 = vpack.c.b16 %v1470, %v1466
    %v1531 = vpack.c.b16 %v1471, %v1467
    %v1532 = vpack.c.b16 %v1472, %v1468
    %v1533 = vpack.c.b16 %v1473, %v1469
    %v1534 = vpack.c.b16 %v1478, %v1474
    %v1535 = vpack.c.b16 %v1479, %v1475
    %v1536 = vpack.c.b16 %v1480, %v1476
    %v1537 = vpack.c.b16 %v1481, %v1477
    %v1538 = vpack.c.b16 %v1486, %v1482
    %v1539 = vpack.c.b16 %v1487, %v1483
    %v1540 = vpack.c.b16 %v1488, %v1484
    %v1541 = vpack.c.b16 %v1489, %v1485
    %v1542 = vpack.c.b16 %v1494, %v1490
    %v1543 = vpack.c.b16 %v1495, %v1491
    %v1544 = vpack.c.b16 %v1496, %v1492
    %v1545 = vpack.c.b16 %v1497, %v1493
    %v1546 = vpack.c.b16 %v1502, %v1498
    %v1547 = vpack.c.b16 %v1503, %v1499
    %v1548 = vpack.c.b16 %v1504, %v1500
    %v1549 = vpack.c.b16 %v1505, %v1501
    %v1550 = vpack.c.b16 %v1510, %v1506
    %v1551 = vpack.c.b16 %v1511, %v1507
    %v1552 = vpack.c.b16 %v1512, %v1508
    %v1553 = vpack.c.b16 %v1513, %v1509
    %v1554 = vpack.c.b16 %v1518, %v1514
    %v1555 = vpack.c.b16 %v1519, %v1515
    %v1556 = vpack.c.b16 %v1520, %v1516
    %v1557 = vpack.c.b16 %v1521, %v1517
    %v1558 = vpack.c.b16 %v1526, %v1522
    %v1559 = vpack.c.b16 %v1527, %v1523
    %v1560 = vpack.c.b16 %v1528, %v1524
    %v1561 = vpack.c.b16 %v1529, %v1525
    %1594 = vmatpush.bf16.msra.mxu0 %v1558
    %1595 = vmatpush.bf16.msra.mxu0 %v1554
    %1596 = vmatpush.bf16.msra.mxu0 %v1550
    %1597 = vmatpush.bf16.msra.mxu0 %v1546
    %1598 = vmatpush.bf16.msra.mxu0 %v1542
    %1599 = vmatpush.bf16.msra.mxu0 %v1538
    %1600 = vmatpush.bf16.msra.mxu0 %v1534
    %1601 = vmatpush.bf16.msra.mxu0 %v1530
    %1602 = vmatmul.bf16.gmra.mxu0 %v1390
    %v1603 = vpop.f32.mrf.mxu0
    %v1604 = vadd.f32 %v1426, %v1603
    %v1605 = vpop.f32.mrf.mxu0
    %v1606 = vadd.f32 %v1426, %v1605
    %1607 = vmatmul.bf16.gmra.mxu0 %v1391
    %v1608 = vpop.f32.mrf.mxu0
    %v1609 = vadd.f32 %v1426, %v1608
    %v1610 = vpop.f32.mrf.mxu0
    %v1611 = vadd.f32 %v1426, %v1610
    %1612 = vdwg.mxu0
    %1613 = vmatpush.bf16.msra.mxu0 %v1559
    %1614 = vmatpush.bf16.msra.mxu0 %v1555
    %1615 = vmatpush.bf16.msra.mxu0 %v1551
    %1616 = vmatpush.bf16.msra.mxu0 %v1547
    %1617 = vmatpush.bf16.msra.mxu0 %v1543
    %1618 = vmatpush.bf16.msra.mxu0 %v1539
    %1619 = vmatpush.bf16.msra.mxu0 %v1535
    %1620 = vmatpush.bf16.msra.mxu0 %v1531
    %1621 = vmatmul.bf16.gmra.mxu0 %v1390
    %v1622 = vpop.f32.mrf.mxu0
    %v1623 = vadd.f32 %v1427, %v1622
    %v1624 = vpop.f32.mrf.mxu0
    %v1625 = vadd.f32 %v1427, %v1624
    %1626 = vmatmul.bf16.gmra.mxu0 %v1391
    %v1627 = vpop.f32.mrf.mxu0
    %v1628 = vadd.f32 %v1427, %v1627
    %v1629 = vpop.f32.mrf.mxu0
    %v1630 = vadd.f32 %v1427, %v1629
    %1631 = vdwg.mxu0
    %1632 = vmatpush.bf16.msra.mxu0 %v1560
    %1633 = vmatpush.bf16.msra.mxu0 %v1556
    %1634 = vmatpush.bf16.msra.mxu0 %v1552
    %1635 = vmatpush.bf16.msra.mxu0 %v1548
    %1636 = vmatpush.bf16.msra.mxu0 %v1544
    %1637 = vmatpush.bf16.msra.mxu0 %v1540
    %1638 = vmatpush.bf16.msra.mxu0 %v1536
    %1639 = vmatpush.bf16.msra.mxu0 %v1532
    %1640 = vmatmul.bf16.gmra.mxu0 %v1390
    %v1641 = vpop.f32.mrf.mxu0
    %v1642 = vadd.f32 %v1428, %v1641
    %v1643 = vpop.f32.mrf.mxu0
    %v1644 = vadd.f32 %v1428, %v1643
    %1645 = vmatmul.bf16.gmra.mxu0 %v1391
    %v1646 = vpop.f32.mrf.mxu0
    %v1647 = vadd.f32 %v1428, %v1646
    %v1648 = vpop.f32.mrf.mxu0
    %v1649 = vadd.f32 %v1428, %v1648
    %1650 = vdwg.mxu0
    %1651 = vmatpush.bf16.msra.mxu0 %v1561
    %1652 = vmatpush.bf16.msra.mxu0 %v1557
    %1653 = vmatpush.bf16.msra.mxu0 %v1553
    %1654 = vmatpush.bf16.msra.mxu0 %v1549
    %1655 = vmatpush.bf16.msra.mxu0 %v1545
    %1656 = vmatpush.bf16.msra.mxu0 %v1541
    %1657 = vmatpush.bf16.msra.mxu0 %v1537
    %1658 = vmatpush.bf16.msra.mxu0 %v1533
    %1659 = vmatmul.bf16.gmra.mxu0 %v1390
    %v1660 = vpop.f32.mrf.mxu0
    %v1661 = vadd.f32 %v1429, %v1660
    %v1662 = vpop.f32.mrf.mxu0
    %v1663 = vadd.f32 %v1429, %v1662
    %1664 = vmatmul.bf16.gmra.mxu0 %v1391
    %v1665 = vpop.f32.mrf.mxu0
    %v1666 = vadd.f32 %v1429, %v1665
    %v1667 = vpop.f32.mrf.mxu0
    %v1668 = vadd.f32 %v1429, %v1667
    %1669 = vdwg.mxu0
    %v1670 = vmul.f32 %v1604, 0.5
    %v1671 = vmul.f32 %v1623, 0.5
    %v1672 = vmul.f32 %v1642, 0.5
    %v1673 = vmul.f32 %v1661, 0.5
    %v1674 = vmul.f32 %v1606, 0.5
    %v1675 = vmul.f32 %v1625, 0.5
    %v1676 = vmul.f32 %v1644, 0.5
    %v1677 = vmul.f32 %v1663, 0.5
    %v1678 = vmul.f32 %v1609, 0.5
    %v1679 = vmul.f32 %v1628, 0.5
    %v1680 = vmul.f32 %v1647, 0.5
    %v1681 = vmul.f32 %v1666, 0.5
    %v1682 = vmul.f32 %v1611, 0.5
    %v1683 = vmul.f32 %v1630, 0.5
    %v1684 = vmul.f32 %v1649, 0.5
    %v1685 = vmul.f32 %v1668, 0.5
    %v1686 = vmul.f32 %v1604, 0.044715
    %v1687 = vmul.f32 %v1623, 0.044715
    %v1688 = vmul.f32 %v1642, 0.044715
    %v1689 = vmul.f32 %v1661, 0.044715
    %v1690 = vmul.f32 %v1606, 0.044715
    %v1691 = vmul.f32 %v1625, 0.044715
    %v1692 = vmul.f32 %v1644, 0.044715
    %v1693 = vmul.f32 %v1663, 0.044715
    %v1694 = vmul.f32 %v1609, 0.044715
    %v1695 = vmul.f32 %v1628, 0.044715
    %v1696 = vmul.f32 %v1647, 0.044715
    %v1697 = vmul.f32 %v1666, 0.044715
    %v1698 = vmul.f32 %v1611, 0.044715
    %v1699 = vmul.f32 %v1630, 0.044715
    %v1700 = vmul.f32 %v1649, 0.044715
    %v1701 = vmul.f32 %v1668, 0.044715
    %v1702 = vmul.f32 %v1686, %v1604
    %v1703 = vmul.f32 %v1687, %v1623
    %v1704 = vmul.f32 %v1688, %v1642
    %v1705 = vmul.f32 %v1689, %v1661
    %v1706 = vmul.f32 %v1690, %v1606
    %v1707 = vmul.f32 %v1691, %v1625
    %v1708 = vmul.f32 %v1692, %v1644
    %v1709 = vmul.f32 %v1693, %v1663
    %v1710 = vmul.f32 %v1694, %v1609
    %v1711 = vmul.f32 %v1695, %v1628
    %v1712 = vmul.f32 %v1696, %v1647
    %v1713 = vmul.f32 %v1697, %v1666
    %v1714 = vmul.f32 %v1698, %v1611
    %v1715 = vmul.f32 %v1699, %v1630
    %v1716 = vmul.f32 %v1700, %v1649
    %v1717 = vmul.f32 %v1701, %v1668
    %v1718 = vmul.f32 %v1702, %v1604
    %v1719 = vmul.f32 %v1703, %v1623
    %v1720 = vmul.f32 %v1704, %v1642
    %v1721 = vmul.f32 %v1705, %v1661
    %v1722 = vmul.f32 %v1706, %v1606
    %v1723 = vmul.f32 %v1707, %v1625
    %v1724 = vmul.f32 %v1708, %v1644
    %v1725 = vmul.f32 %v1709, %v1663
    %v1726 = vmul.f32 %v1710, %v1609
    %v1727 = vmul.f32 %v1711, %v1628
    %v1728 = vmul.f32 %v1712, %v1647
    %v1729 = vmul.f32 %v1713, %v1666
    %v1730 = vmul.f32 %v1714, %v1611
    %v1731 = vmul.f32 %v1715, %v1630
    %v1732 = vmul.f32 %v1716, %v1649
    %v1733 = vmul.f32 %v1717, %v1668
    %v1734 = vadd.f32 %v1604, %v1718
    %v1735 = vadd.f32 %v1623, %v1719
    %v1736 = vadd.f32 %v1642, %v1720
    %v1737 = vadd.f32 %v1661, %v1721
    %v1738 = vadd.f32 %v1606, %v1722
    %v1739 = vadd.f32 %v1625, %v1723
    %v1740 = vadd.f32 %v1644, %v1724
    %v1741 = vadd.f32 %v1663, %v1725
    %v1742 = vadd.f32 %v1609, %v1726
    %v1743 = vadd.f32 %v1628, %v1727
    %v1744 = vadd.f32 %v1647, %v1728
    %v1745 = vadd.f32 %v1666, %v1729
    %v1746 = vadd.f32 %v1611, %v1730
    %v1747 = vadd.f32 %v1630, %v1731
    %v1748 = vadd.f32 %v1649, %v1732
    %v1749 = vadd.f32 %v1668, %v1733
    %v1750 = vmul.f32 %v1734, 0.7978846
    %v1751 = vmul.f32 %v1735, 0.7978846
    %v1752 = vmul.f32 %v1736, 0.7978846
    %v1753 = vmul.f32 %v1737, 0.7978846
    %v1754 = vmul.f32 %v1738, 0.7978846
    %v1755 = vmul.f32 %v1739, 0.7978846
    %v1756 = vmul.f32 %v1740, 0.7978846
    %v1757 = vmul.f32 %v1741, 0.7978846
    %v1758 = vmul.f32 %v1742, 0.7978846
    %v1759 = vmul.f32 %v1743, 0.7978846
    %v1760 = vmul.f32 %v1744, 0.7978846
    %v1761 = vmul.f32 %v1745, 0.7978846
    %v1762 = vmul.f32 %v1746, 0.7978846
    %v1763 = vmul.f32 %v1747, 0.7978846
    %v1764 = vmul.f32 %v1748, 0.7978846
    %v1765 = vmul.f32 %v1749, 0.7978846
    %v1766 = vtanh.pop %v1750
    %v1767 = vtanh.pop %v1751
    %v1768 = vtanh.pop %v1752
    %v1769 = vtanh.pop %v1753
    %v1770 = vtanh.pop %v1754
    %v1771 = vtanh.pop %v1755
    %v1772 = vtanh.pop %v1756
    %v1773 = vtanh.pop %v1757
    %v1774 = vtanh.pop %v1758
    %v1775 = vtanh.pop %v1759
    %v1776 = vtanh.pop %v1760
    %v1777 = vtanh.pop %v1761
    %v1778 = vtanh.pop %v1762
    %v1779 = vtanh.pop %v1763
    %v1780 = vtanh.pop %v1764
    %v1781 = vtanh.pop %v1765
    %v1782 = vadd.f32 %v1766, 1.0
    %v1783 = vadd.f32 %v1767, 1.0
    %v1784 = vadd.f32 %v1768, 1.0
    %v1785 = vadd.f32 %v1769, 1.0
    %v1786 = vadd.f32 %v1770, 1.0
    %v1787 = vadd.f32 %v1771, 1.0
    %v1788 = vadd.f32 %v1772, 1.0
    %v1789 = vadd.f32 %v1773, 1.0
    %v1790 = vadd.f32 %v1774, 1.0
    %v1791 = vadd.f32 %v1775, 1.0
    %v1792 = vadd.f32 %v1776, 1.0
    %v1793 = vadd.f32 %v1777, 1.0
    %v1794 = vadd.f32 %v1778, 1.0
    %v1795 = vadd.f32 %v1779, 1.0
    %v1796 = vadd.f32 %v1780, 1.0
    %v1797 = vadd.f32 %v1781, 1.0
    %v1798 = vmul.f32 %v1670, %v1782
    %v1799 = vmul.f32 %v1671, %v1783
    %v1800 = vmul.f32 %v1672, %v1784
    %v1801 = vmul.f32 %v1673, %v1785
    %v1802 = vmul.f32 %v1674, %v1786
    %v1803 = vmul.f32 %v1675, %v1787
    %v1804 = vmul.f32 %v1676, %v1788
    %v1805 = vmul.f32 %v1677, %v1789
    %v1806 = vmul.f32 %v1678, %v1790
    %v1807 = vmul.f32 %v1679, %v1791
    %v1808 = vmul.f32 %v1680, %v1792
    %v1809 = vmul.f32 %v1681, %v1793
    %v1810 = vmul.f32 %v1682, %v1794
    %v1811 = vmul.f32 %v1683, %v1795
    %v1812 = vmul.f32 %v1684, %v1796
    %v1813 = vmul.f32 %v1685, %v1797
    %v1814 = vpack.c.bf16 %v1802, %v1798
    %v1815 = vpack.c.bf16 %v1803, %v1799
    %v1816 = vpack.c.bf16 %v1804, %v1800
    %v1817 = vpack.c.bf16 %v1805, %v1801
    %v1818 = vpack.c.bf16 %v1810, %v1806
    %v1819 = vpack.c.bf16 %v1811, %v1807
    %v1820 = vpack.c.bf16 %v1812, %v1808
    %v1821 = vpack.c.bf16 %v1813, %v1809
    %v1822 = vld [vmem:[#allocation8] sm:$0xf]
    %v1823 = vld [vmem:[#allocation8 + $0x4] sm:$0xf]
    %v1824 = vld [vmem:[#allocation8 + $0x8] sm:$0xf]
    %v1825 = vld [vmem:[#allocation8 + $0xc] sm:$0xf]
    %v1826 = vld [vmem:[#allocation8 + $0x10] sm:$0xf]
    %v1827 = vld [vmem:[#allocation8 + $0x14] sm:$0xf]
    %v1828 = vld [vmem:[#allocation8 + $0x18] sm:$0xf]
    %v1829 = vld [vmem:[#allocation8 + $0x1c] sm:$0xf]
    %v1830 = vld [vmem:[#allocation8 + $0x20] sm:$0xf]
    %v1831 = vld [vmem:[#allocation8 + $0x24] sm:$0xf]
    %v1832 = vld [vmem:[#allocation8 + $0x28] sm:$0xf]
    %v1833 = vld [vmem:[#allocation8 + $0x2c] sm:$0xf]
    %v1834 = vld [vmem:[#allocation8 + $0x30] sm:$0xf]
    %v1835 = vld [vmem:[#allocation8 + $0x34] sm:$0xf]
    %v1836 = vld [vmem:[#allocation8 + $0x38] sm:$0xf]
    %v1837 = vld [vmem:[#allocation8 + $0x3c] sm:$0xf]
    %v1838 = vld [vmem:[#allocation8 + $0x40] sm:$0xf]
    %v1839 = vld [vmem:[#allocation8 + $0x44] sm:$0xf]
    %v1840 = vld [vmem:[#allocation8 + $0x48] sm:$0xf]
    %v1841 = vld [vmem:[#allocation8 + $0x4c] sm:$0xf]
    %v1842 = vld [vmem:[#allocation8 + $0x50] sm:$0xf]
    %v1843 = vld [vmem:[#allocation8 + $0x54] sm:$0xf]
    %v1844 = vld [vmem:[#allocation8 + $0x58] sm:$0xf]
    %v1845 = vld [vmem:[#allocation8 + $0x5c] sm:$0xf]
    %v1846 = vld [vmem:[#allocation8 + $0x60] sm:$0xf]
    %v1847 = vld [vmem:[#allocation8 + $0x64] sm:$0xf]
    %v1848 = vld [vmem:[#allocation8 + $0x68] sm:$0xf]
    %v1849 = vld [vmem:[#allocation8 + $0x6c] sm:$0xf]
    %v1850 = vld [vmem:[#allocation8 + $0x70] sm:$0xf]
    %v1851 = vld [vmem:[#allocation8 + $0x74] sm:$0xf]
    %v1852 = vld [vmem:[#allocation8 + $0x78] sm:$0xf]
    %v1853 = vld [vmem:[#allocation8 + $0x7c] sm:$0xf]
    %v1854 = vld [vmem:[#allocation8 + $0x80] sm:$0xf]
    %v1855 = vld [vmem:[#allocation8 + $0x84] sm:$0xf]
    %v1856 = vld [vmem:[#allocation8 + $0x88] sm:$0xf]
    %v1857 = vld [vmem:[#allocation8 + $0x8c] sm:$0xf]
    %v1858 = vld [vmem:[#allocation8 + $0x90] sm:$0xf]
    %v1859 = vld [vmem:[#allocation8 + $0x94] sm:$0xf]
    %v1860 = vld [vmem:[#allocation8 + $0x98] sm:$0xf]
    %v1861 = vld [vmem:[#allocation8 + $0x9c] sm:$0xf]
    %v1862 = vld [vmem:[#allocation8 + $0xa0] sm:$0xf]
    %v1863 = vld [vmem:[#allocation8 + $0xa4] sm:$0xf]
    %v1864 = vld [vmem:[#allocation8 + $0xa8] sm:$0xf]
    %v1865 = vld [vmem:[#allocation8 + $0xac] sm:$0xf]
    %v1866 = vld [vmem:[#allocation8 + $0xb0] sm:$0xf]
    %v1867 = vld [vmem:[#allocation8 + $0xb4] sm:$0xf]
    %v1868 = vld [vmem:[#allocation8 + $0xb8] sm:$0xf]
    %v1869 = vld [vmem:[#allocation8 + $0xbc] sm:$0xf]
    %v1870 = vld [vmem:[#allocation8 + $0xc0] sm:$0xf]
    %v1871 = vld [vmem:[#allocation8 + $0xc4] sm:$0xf]
    %v1872 = vld [vmem:[#allocation8 + $0xc8] sm:$0xf]
    %v1873 = vld [vmem:[#allocation8 + $0xcc] sm:$0xf]
    %v1874 = vld [vmem:[#allocation8 + $0xd0] sm:$0xf]
    %v1875 = vld [vmem:[#allocation8 + $0xd4] sm:$0xf]
    %v1876 = vld [vmem:[#allocation8 + $0xd8] sm:$0xf]
    %v1877 = vld [vmem:[#allocation8 + $0xdc] sm:$0xf]
    %v1878 = vld [vmem:[#allocation8 + $0xe0] sm:$0xf]
    %v1879 = vld [vmem:[#allocation8 + $0xe4] sm:$0xf]
    %v1880 = vld [vmem:[#allocation8 + $0xe8] sm:$0xf]
    %v1881 = vld [vmem:[#allocation8 + $0xec] sm:$0xf]
    %v1882 = vld [vmem:[#allocation8 + $0xf0] sm:$0xf]
    %v1883 = vld [vmem:[#allocation8 + $0xf4] sm:$0xf]
    %v1884 = vld [vmem:[#allocation8 + $0xf8] sm:$0xf]
    %v1885 = vld [vmem:[#allocation8 + $0xfc] sm:$0xf]
    %v1886 = vld [vmem:[%s16] sm:$0x1]
    %v1888 = vperm.slane %v1886, 0
    %v1954 = vunpack.c.l.b16 %v1822
    %v1955 = vunpack.c.l.b16 %v1823
    %v1956 = vunpack.c.l.b16 %v1824
    %v1957 = vunpack.c.l.b16 %v1825
    %v1958 = vunpack.c.l.b16 %v1826
    %v1959 = vunpack.c.l.b16 %v1827
    %v1960 = vunpack.c.l.b16 %v1828
    %v1961 = vunpack.c.l.b16 %v1829
    %v1962 = vunpack.c.l.b16 %v1830
    %v1963 = vunpack.c.l.b16 %v1831
    %v1964 = vunpack.c.l.b16 %v1832
    %v1965 = vunpack.c.l.b16 %v1833
    %v1966 = vunpack.c.l.b16 %v1834
    %v1967 = vunpack.c.l.b16 %v1835
    %v1968 = vunpack.c.l.b16 %v1836
    %v1969 = vunpack.c.l.b16 %v1837
    %v1970 = vunpack.c.l.b16 %v1838
    %v1971 = vunpack.c.l.b16 %v1839
    %v1972 = vunpack.c.l.b16 %v1840
    %v1973 = vunpack.c.l.b16 %v1841
    %v1974 = vunpack.c.l.b16 %v1842
    %v1975 = vunpack.c.l.b16 %v1843
    %v1976 = vunpack.c.l.b16 %v1844
    %v1977 = vunpack.c.l.b16 %v1845
    %v1978 = vunpack.c.l.b16 %v1846
    %v1979 = vunpack.c.l.b16 %v1847
    %v1980 = vunpack.c.l.b16 %v1848
    %v1981 = vunpack.c.l.b16 %v1849
    %v1982 = vunpack.c.l.b16 %v1850
    %v1983 = vunpack.c.l.b16 %v1851
    %v1984 = vunpack.c.l.b16 %v1852
    %v1985 = vunpack.c.l.b16 %v1853
    %v1986 = vunpack.c.l.b16 %v1854
    %v1987 = vunpack.c.l.b16 %v1855
    %v1988 = vunpack.c.l.b16 %v1856
    %v1989 = vunpack.c.l.b16 %v1857
    %v1990 = vunpack.c.l.b16 %v1858
    %v1991 = vunpack.c.l.b16 %v1859
    %v1992 = vunpack.c.l.b16 %v1860
    %v1993 = vunpack.c.l.b16 %v1861
    %v1994 = vunpack.c.l.b16 %v1862
    %v1995 = vunpack.c.l.b16 %v1863
    %v1996 = vunpack.c.l.b16 %v1864
    %v1997 = vunpack.c.l.b16 %v1865
    %v1998 = vunpack.c.l.b16 %v1866
    %v1999 = vunpack.c.l.b16 %v1867
    %v2000 = vunpack.c.l.b16 %v1868
    %v2001 = vunpack.c.l.b16 %v1869
    %v2002 = vunpack.c.l.b16 %v1870
    %v2003 = vunpack.c.l.b16 %v1871
    %v2004 = vunpack.c.l.b16 %v1872
    %v2005 = vunpack.c.l.b16 %v1873
    %v2006 = vunpack.c.l.b16 %v1874
    %v2007 = vunpack.c.l.b16 %v1875
    %v2008 = vunpack.c.l.b16 %v1876
    %v2009 = vunpack.c.l.b16 %v1877
    %v2010 = vunpack.c.l.b16 %v1878
    %v2011 = vunpack.c.l.b16 %v1879
    %v2012 = vunpack.c.l.b16 %v1880
    %v2013 = vunpack.c.l.b16 %v1881
    %v2014 = vunpack.c.l.b16 %v1882
    %v2015 = vunpack.c.l.b16 %v1883
    %v2016 = vunpack.c.l.b16 %v1884
    %v2017 = vunpack.c.l.b16 %v1885
    %v2018 = vpack.c.b16 %v1955, %v1954
    %v2019 = vpack.c.b16 %v1957, %v1956
    %v2020 = vpack.c.b16 %v1959, %v1958
    %v2021 = vpack.c.b16 %v1961, %v1960
    %v2022 = vpack.c.b16 %v1963, %v1962
    %v2023 = vpack.c.b16 %v1965, %v1964
    %v2024 = vpack.c.b16 %v1967, %v1966
    %v2025 = vpack.c.b16 %v1969, %v1968
    %v2026 = vpack.c.b16 %v1971, %v1970
    %v2027 = vpack.c.b16 %v1973, %v1972
    %v2028 = vpack.c.b16 %v1975, %v1974
    %v2029 = vpack.c.b16 %v1977, %v1976
    %v2030 = vpack.c.b16 %v1979, %v1978
    %v2031 = vpack.c.b16 %v1981, %v1980
    %v2032 = vpack.c.b16 %v1983, %v1982
    %v2033 = vpack.c.b16 %v1985, %v1984
    %v2034 = vpack.c.b16 %v1987, %v1986
    %v2035 = vpack.c.b16 %v1989, %v1988
    %v2036 = vpack.c.b16 %v1991, %v1990
    %v2037 = vpack.c.b16 %v1993, %v1992
    %v2038 = vpack.c.b16 %v1995, %v1994
    %v2039 = vpack.c.b16 %v1997, %v1996
    %v2040 = vpack.c.b16 %v1999, %v1998
    %v2041 = vpack.c.b16 %v2001, %v2000
    %v2042 = vpack.c.b16 %v2003, %v2002
    %v2043 = vpack.c.b16 %v2005, %v2004
    %v2044 = vpack.c.b16 %v2007, %v2006
    %v2045 = vpack.c.b16 %v2009, %v2008
    %v2046 = vpack.c.b16 %v2011, %v2010
    %v2047 = vpack.c.b16 %v2013, %v2012
    %v2048 = vpack.c.b16 %v2015, %v2014
    %v2049 = vpack.c.b16 %v2017, %v2016
    %2082 = vmatpush.bf16.msra.mxu0 %v2025
    %2083 = vmatpush.bf16.msra.mxu0 %v2024
    %2084 = vmatpush.bf16.msra.mxu0 %v2023
    %2085 = vmatpush.bf16.msra.mxu0 %v2022
    %2086 = vmatpush.bf16.msra.mxu0 %v2021
    %2087 = vmatpush.bf16.msra.mxu0 %v2020
    %2088 = vmatpush.bf16.msra.mxu0 %v2019
    %2089 = vmatpush.bf16.msra.mxu0 %v2018
    %2090 = vmatmul.bf16.gmra.mxu0 %v1814
    %v2091 = vpop.f32.mrf.mxu0
    %v2092 = vadd.f32 %v1888, %v2091
    %v2093 = vpop.f32.mrf.mxu0
    %v2094 = vadd.f32 %v1888, %v2093
    %2095 = vmatmul.bf16.gmra.mxu0 %v1818
    %v2096 = vpop.f32.mrf.mxu0
    %v2097 = vadd.f32 %v1888, %v2096
    %v2098 = vpop.f32.mrf.mxu0
    %v2099 = vadd.f32 %v1888, %v2098
    %2100 = vdwg.mxu0
    %2101 = vmatpush.bf16.msra.mxu0 %v2033
    %2102 = vmatpush.bf16.msra.mxu0 %v2032
    %2103 = vmatpush.bf16.msra.mxu0 %v2031
    %2104 = vmatpush.bf16.msra.mxu0 %v2030
    %2105 = vmatpush.bf16.msra.mxu0 %v2029
    %2106 = vmatpush.bf16.msra.mxu0 %v2028
    %2107 = vmatpush.bf16.msra.mxu0 %v2027
    %2108 = vmatpush.bf16.msra.mxu0 %v2026
    %2109 = vmatmul.bf16.gmra.mxu0 %v1815
    %v2110 = vpop.f32.mrf.mxu0
    %v2111 = vadd.f32 %v2092, %v2110
    %v2112 = vpop.f32.mrf.mxu0
    %v2113 = vadd.f32 %v2094, %v2112
    %2114 = vmatmul.bf16.gmra.mxu0 %v1819
    %v2115 = vpop.f32.mrf.mxu0
    %v2116 = vadd.f32 %v2097, %v2115
    %v2117 = vpop.f32.mrf.mxu0
    %v2118 = vadd.f32 %v2099, %v2117
    %2119 = vdwg.mxu0
    %2120 = vmatpush.bf16.msra.mxu0 %v2041
    %2121 = vmatpush.bf16.msra.mxu0 %v2040
    %2122 = vmatpush.bf16.msra.mxu0 %v2039
    %2123 = vmatpush.bf16.msra.mxu0 %v2038
    %2124 = vmatpush.bf16.msra.mxu0 %v2037
    %2125 = vmatpush.bf16.msra.mxu0 %v2036
    %2126 = vmatpush.bf16.msra.mxu0 %v2035
    %2127 = vmatpush.bf16.msra.mxu0 %v2034
    %2128 = vmatmul.bf16.gmra.mxu0 %v1816
    %v2129 = vpop.f32.mrf.mxu0
    %v2130 = vadd.f32 %v2111, %v2129
    %v2131 = vpop.f32.mrf.mxu0
    %v2132 = vadd.f32 %v2113, %v2131
    %2133 = vmatmul.bf16.gmra.mxu0 %v1820
    %v2134 = vpop.f32.mrf.mxu0
    %v2135 = vadd.f32 %v2116, %v2134
    %v2136 = vpop.f32.mrf.mxu0
    %v2137 = vadd.f32 %v2118, %v2136
    %2138 = vdwg.mxu0
    %2139 = vmatpush.bf16.msra.mxu0 %v2049
    %2140 = vmatpush.bf16.msra.mxu0 %v2048
    %2141 = vmatpush.bf16.msra.mxu0 %v2047
    %2142 = vmatpush.bf16.msra.mxu0 %v2046
    %2143 = vmatpush.bf16.msra.mxu0 %v2045
    %2144 = vmatpush.bf16.msra.mxu0 %v2044
    %2145 = vmatpush.bf16.msra.mxu0 %v2043
    %2146 = vmatpush.bf16.msra.mxu0 %v2042
    %2147 = vmatmul.bf16.gmra.mxu0 %v1817
    %v2148 = vpop.f32.mrf.mxu0
    %v2149 = vadd.f32 %v2130, %v2148
    %v2150 = vpop.f32.mrf.mxu0
    %v2151 = vadd.f32 %v2132, %v2150
    %2152 = vmatmul.bf16.gmra.mxu0 %v1821
    %v2153 = vpop.f32.mrf.mxu0
    %v2154 = vadd.f32 %v2135, %v2153
    %v2155 = vpop.f32.mrf.mxu0
    %v2156 = vadd.f32 %v2137, %v2155
    %2157 = vdwg.mxu0
    %v2158 = vld [vmem:[%s17] sm:$0x1]
    %v2160 = vperm.slane %v2158, 0
    %v2162 = vmul.f32 %v2160, %v2149
    %v2163 = vmul.f32 %v2160, %v2151
    %v2164 = vmul.f32 %v2160, %v2154
    %v2165 = vmul.f32 %v2160, %v2156
    %v2166 = vadd.f32 %v127, %v2162
    %v2167 = vadd.f32 %v128, %v2163
    %v2168 = vadd.f32 %v129, %v2164
    %v2169 = vadd.f32 %v130, %v2165
    %2170 = vst [vmem:[#allocation11] sm:$0xff] %v2166
    %2171 = vst [vmem:[#allocation11 + $0x8] sm:$0xff] %v2167
    %2172 = vst [vmem:[#allocation11 + $0x10] sm:$0xff] %v2168
    %2173 = vst [vmem:[#allocation11 + $0x18] sm:$0xff] %v2169
    // Predicated region
    $region90: #{xcit_layer_forward.2} parent=1 // pred_check
      _
    $region91: #{xcit_layer_forward.2} parent=1 // pred_check_branch
      %2175 = sbr.rel (0) target = $region93
    $region92: #{xcit_layer_forward.2} parent=1 // pred_region
      %2177 = vsyncadd [#allocation4], 0
      %s2178 = sshll.u32 [#allocation10], 4
      %s2179 = int_to_ptr.vmem [resolvable:$true] %s2178
      %s2180 = sshll.u32 %s18, 4
      %s2181 = int_to_ptr.hbm [resolvable:$true] %s2180
      %2186 = dma.vmem_to_hbm [thread:$0]  %s2179, 512, %s2181, [#allocation4], 128, 128, 8
    $region93: #{xcit_layer_forward.2} parent=1 // pred_fallthru
      _
    // Predicated region
    $region94: #{xcit_layer_forward.2} parent=1 // pred_check
      _
    $region95: #{xcit_layer_forward.2} parent=1 // pred_check_branch
      %2188 = sbr.rel (0) target = $region97
    $region96: #{xcit_layer_forward.2} parent=1 // pred_region
      %2190 = vsyncadd [#allocation12], 0
      %s2191 = sshll.u32 [#allocation11], 4
      %s2192 = int_to_ptr.vmem [resolvable:$true] %s2191
      %s2193 = sshll.u32 %s19, 4
      %s2194 = int_to_ptr.hbm [resolvable:$true] %s2193
      %2199 = dma.vmem_to_hbm [thread:$0]  %s2192, 512, %s2194, [#allocation12], 128, 128, 8
    $region97: #{xcit_layer_forward.2} parent=1 // pred_fallthru
      _
    // Predicated region
    $region98: #{xcit_layer_forward.2} parent=1 // pred_check
      _
    $region99: #{xcit_layer_forward.2} parent=1 // pred_check_branch
      %2201 = sbr.rel (0) target = $region101
    $region100: #{xcit_layer_forward.2} parent=1 // pred_region
      %2203 = dma.done [#allocation4], 512
    $region101: #{xcit_layer_forward.2} parent=1 // pred_fallthru
      _
    // Predicated region
    $region102: #{xcit_layer_forward.2} parent=1 // pred_check
      _
    $region103: #{xcit_layer_forward.2} parent=1 // pred_check_branch
      %2205 = sbr.rel (0) target = $region105
    $region104: #{xcit_layer_forward.2} parent=1 // pred_region
      %2207 = dma.done [#allocation12], 512
    $region105: #{xcit_layer_forward.2} parent=1 // pred_fallthru
      _
    %2208 = vsyncpa [#allocation3], 1
    %2209 = vsyncpa [#allocation6], 1
    %2210 = vsyncpa [#allocation9], 1
    %2211 = vsyncpa [#allocation4], 1
    %2212 = vsyncpa [#allocation12], 1

</llo_original>
